<compile_context>
chip_gen: v7x
topology: tpu7x:2x2x1
jax: 0.10.0
libtpu: 0.0.40
codegen_flags: <defaults>
</compile_context>

<pallas_src>
import jax
import jax.numpy as jnp
from jax.experimental import pallas as pl
from jax.experimental.pallas import tpu as pltpu

N_CTX = 3
CTX_DIM = 1280
IMG_DIM = 1024
OUT_DIM = 1408
TOK_LEN = 77  # CLIP-style context length


# ----------------------------- Pallas kernel ------------------------------ #
def _text_proj_kernel(x_ref, w_ref, b_ref, o_ref):
    # Single full-width tile: point_prompt[0] = ctx @ W_text + b_text.
    # bf16 operands, f32 MXU accumulation, f32 bias add, f32 output.
    y = jnp.dot(x_ref[...], w_ref[...], preferred_element_type=jnp.float32)
    o_ref[0] = (y + b_ref[...]).astype(o_ref.dtype)


def pallas_text_proj(ctx_bf16, w_bf16, b_f32):
    """point_prompt = (ctx @ W + b)[None]  -> (1, M, N) f32.

    ctx:(M,K) bf16, w:(K,N) bf16, b:(1,N) f32.  Tiny-M, weight-DMA-bound
    workload: one grid step with the full bf16 (K, N) weight block resident in
    VMEM (~3.5 MiB), no per-step pipeline overhead, lane-dense N=1408 store.
    """
    M, K = ctx_bf16.shape
    Kw, N = w_bf16.shape
    assert K == Kw and K % 128 == 0 and N % 128 == 0
    return pl.pallas_call(
        _text_proj_kernel,
        out_shape=jax.ShapeDtypeStruct((1, M, N), jnp.float32),
        grid_spec=pltpu.PrefetchScalarGridSpec(
            num_scalar_prefetch=0,
            grid=(1,),
            in_specs=[
                pl.BlockSpec((M, K), lambda j: (0, 0)),     # full activations (3,1280)
                pl.BlockSpec((K, N), lambda j: (0, 0)),     # full weight block (1280,1408)
                pl.BlockSpec((1, N), lambda j: (0, 0)),     # full bias (1,1408)
            ],
            out_specs=pl.BlockSpec((1, M, N), lambda j: (0, 0, 0)),
        ),
        # grid=(1,): nothing to shard / pipeline; total VMEM need < 8 MiB even
        # double-buffered, well under every generation's default scoped limit.
        compiler_params=pltpu.CompilerParams(
            dimension_semantics=("arbitrary",),
        ),
    )(ctx_bf16, w_bf16, b_f32)


# ----------------------------- Parameter setup ----------------------------- #
def init_params(key):
    k_ctx, k_wt, k_bt, k_wi, k_bi = jax.random.split(key, 5)
    params = {
        # nn.init.normal_(ctx_vectors, std=0.02)
        "ctx": 0.02 * jax.random.normal(k_ctx, (N_CTX, CTX_DIM), jnp.float32),
        # text_pc_proj: Linear(1280, 1408) -- stored transposed as (in, out)
        "w_text": 0.02 * jax.random.normal(k_wt, (CTX_DIM, OUT_DIM), jnp.float32),
        "b_text": 0.02 * jax.random.normal(k_bt, (1, OUT_DIM), jnp.float32),
        # img_pc_proj: Linear(1024, 1408) -- kept as module state for fidelity,
        # but its forward-time use is dead (result overwritten in the reference).
        "w_img": 0.02 * jax.random.normal(k_wi, (IMG_DIM, OUT_DIM), jnp.float32),
        "b_img": 0.02 * jax.random.normal(k_bi, (1, OUT_DIM), jnp.float32),
    }
    # One-time weight preprocessing: bf16 copy of the text-projection weight so
    # the per-call forward never re-casts the 7 MiB f32 weight.
    params["w_text_bf16"] = params["w_text"].astype(jnp.bfloat16)
    return params


def make_tokenized_prompts(classnames):
    # TODO(synk): real SimpleTokenizer (BPE) has no Pallas/JAX equivalent;
    # emit deterministic synthetic token ids with the same (n_cls, 77) shape.
    toks = []
    for name in classnames:
        prompt = "X X X " + name.replace("_", " ") + "."
        ids = [49406] + [ord(c) % 256 + 1 for c in prompt] + [49407]
        ids = ids[:TOK_LEN] + [0] * max(0, TOK_LEN - len(ids))
        toks.append(ids)
    return jnp.asarray(toks, dtype=jnp.int32)


# --------------------------------- Forward --------------------------------- #
@jax.jit
def forward(params, image_embeddings, tokenized_prompts):
    del image_embeddings  # only used in the reference's overwritten/dead branch
    ctx = params["ctx"]                                   # (3, 1280) f32

    # NOTE: the reference also computes img_pc_proj(image_embeddings) and a
    # (B, 4, 1408) concat, then immediately overwrites point_prompt with
    # text_pc_proj(ctx).repeat(1,1,1). That branch has no observable effect on
    # the returned values, so it is elided here (equivalently DCE'd under jit).

    # text_pc_proj(ctx)[None] -> (1, 3, 1408); bf16 operands, f32 accumulate.
    point_prompt = pallas_text_proj(
        ctx.astype(jnp.bfloat16),       # 15 KiB cast, negligible
        params["w_text_bf16"],          # pre-cast at init
        params["b_text"],
    )
    return ctx, tokenized_prompts, point_prompt


# ----------------------------------- Main ----------------------------------- #
if __name__ == "__main__":
    key = jax.random.PRNGKey(0)
    k_params, k_img = jax.random.split(key)

    params = init_params(k_params)
    classnames = ["airplane", "bathtub", "bed", "bench"]
    tokenized_prompts = make_tokenized_prompts(classnames)   # (4, 77) int32

    B = 2
    image_embeddings = jax.random.normal(k_img, (B, IMG_DIM), jnp.float32)

    ctx_out, toks_out, point_prompt = forward(params, image_embeddings, tokenized_prompts)
    jax.block_until_ready((ctx_out, toks_out, point_prompt))

    # Sanity checks against the reference semantics.
    assert ctx_out.shape == (N_CTX, CTX_DIM)
    assert toks_out.shape == (len(classnames), TOK_LEN)
    assert point_prompt.shape == (1, N_CTX, OUT_DIM)

    # Reference at matching (bf16-operand, f32-accumulate) precision.
    expected = (
        jnp.dot(
            params["ctx"].astype(jnp.bfloat16),
            params["w_text_bf16"],
            preferred_element_type=jnp.float32,
        )
        + params["b_text"]
    )
    assert jnp.allclose(point_prompt[0], expected, atol=1e-2, rtol=1e-2)

    # Loose check against the full-f32 reference (bf16 operand rounding only).
    expected_f32 = params["ctx"] @ params["w_text"] + params["b_text"]
    assert jnp.allclose(point_prompt[0], expected_f32, atol=5e-2, rtol=5e-2)

    print("KERNEL_OK")
</pallas_src>

<mosaic_0001>
module attributes {stable_mosaic.version = 11 : i64} {
  func.func @_text_proj_kernel(%arg0: i32, %arg1: memref<3x1280xbf16, #tpu.memory_space<vmem>>, %arg2: memref<1280x1408xbf16, #tpu.memory_space<vmem>>, %arg3: memref<1x1408xf32, #tpu.memory_space<vmem>>, %arg4: memref<1x3x1408xf32, #tpu.memory_space<vmem>>) attributes {dimension_semantics = [#tpu.dimension_semantics<arbitrary>], iteration_bounds = array<i64: 1>, scalar_prefetch = 0 : i64, scratch_operands = 0 : i64, tpu.core_type = #tpu.core_type<tc>, window_params = [{pipeline_mode = #tpu.pipeline_mode<synchronous>, transform_indices = @transform_0, window_bounds = array<i64: 3, 1280>}, {pipeline_mode = #tpu.pipeline_mode<synchronous>, transform_indices = @transform_1, window_bounds = array<i64: 1280, 1408>}, {pipeline_mode = #tpu.pipeline_mode<synchronous>, transform_indices = @transform_2, window_bounds = array<i64: 1, 1408>}, {pipeline_mode = #tpu.pipeline_mode<synchronous>, transform_indices = @transform_3, window_bounds = array<i64: 1, 3, 1408>}]} {
    %c0 = arith.constant 0 : index
    %c0_0 = arith.constant 0 : index
    %0 = vector.load %arg1[%c0, %c0_0] : memref<3x1280xbf16, #tpu.memory_space<vmem>>, vector<3x1280xbf16>
    %c0_1 = arith.constant 0 : index
    %c0_2 = arith.constant 0 : index
    %1 = vector.load %arg2[%c0_1, %c0_2] : memref<1280x1408xbf16, #tpu.memory_space<vmem>>, vector<1280x1408xbf16>
    %cst = arith.constant dense<0.000000e+00> : vector<3x1408xf32>
    %2 = tpu.matmul %0, %1, %cst {dimension_numbers = #tpu.dot_dimension_numbers<[1], [0], [0], [1], [0, 0, 1, 1], [], []>} : vector<3x1280xbf16>, vector<1280x1408xbf16>, vector<3x1408xf32> -> vector<3x1408xf32>
    %c0_3 = arith.constant 0 : index
    %c0_4 = arith.constant 0 : index
    %3 = vector.load %arg3[%c0_3, %c0_4] : memref<1x1408xf32, #tpu.memory_space<vmem>>, vector<1x1408xf32>
    %4 = vector.broadcast %3 : vector<1x1408xf32> to vector<3x1408xf32>
    %5 = arith.addf %2, %4 : vector<3x1408xf32>
    %c0_5 = arith.constant 0 : index
    %c0_6 = arith.constant 0 : index
    %c0_7 = arith.constant 0 : index
    %6 = vector.load %arg4[%c0_5, %c0_6, %c0_7] : memref<1x3x1408xf32, #tpu.memory_space<vmem>>, vector<1x3x1408xf32>
    %7 = vector.shape_cast %6 : vector<1x3x1408xf32> to vector<3x1408xf32>
    %8 = vector.shape_cast %5 : vector<3x1408xf32> to vector<1x3x1408xf32>
    tpu.vector_store %arg4[%c0_5, %c0_6, %c0_7], %8 {strides = array<i32>} : memref<1x3x1408xf32, #tpu.memory_space<vmem>>, vector<1x3x1408xf32>,
    return
  }
  func.func @transform_0(%arg0: i32) -> (i32, i32) {
    %c0_i32 = arith.constant 0 : i32
    %c0_i32_0 = arith.constant 0 : i32
    %c0_i32_1 = arith.constant 0 : i32
    return %c0_i32, %c0_i32_0 : i32, i32
  }
  func.func @transform_1(%arg0: i32) -> (i32, i32) {
    %c0_i32 = arith.constant 0 : i32
    %c0_i32_0 = arith.constant 0 : i32
    %c0_i32_1 = arith.constant 0 : i32
    return %c0_i32, %c0_i32_0 : i32, i32
  }
  func.func @transform_2(%arg0: i32) -> (i32, i32) {
    %c0_i32 = arith.constant 0 : i32
    %c0_i32_0 = arith.constant 0 : i32
    %c0_i32_1 = arith.constant 0 : i32
    return %c0_i32, %c0_i32_0 : i32, i32
  }
  func.func @transform_3(%arg0: i32) -> (i32, i32, i32) {
    %c0_i32 = arith.constant 0 : i32
    %c0_i32_0 = arith.constant 0 : i32
    %c0_i32_1 = arith.constant 0 : i32
    %c0_i32_2 = arith.constant 0 : i32
    return %c0_i32, %c0_i32_0, %c0_i32_1 : i32, i32, i32
  }
}

</mosaic_0001>

<llo_original>
// kernel: forward.1
$region0: #{forward.1}
  #allocation0 [shape = 'u32[]', space=smem, size = 0x4, offset = 0x4, fixed_abs, tag = 'smem constant byte address 0x4 - core index']
  #allocation1 [shape = 'u32[144,128]{1,0:T(1,128)}', space=vmem, size = 0x12000, scoped, tag = 'internal scratch']
  %s0 = inlined_call_operand.vmem [shape: bf16[3,1280], index: 0, kind: input, shape index: {}]
  %s1 = inlined_call_operand.hbm [shape: bf16[1280,1408], index: 1, kind: input, shape index: {}]
  %s2 = inlined_call_operand.hbm [shape: f32[1,1408], index: 2, kind: input, shape index: {}]
  %s3 = inlined_call_operand.vmem [shape: f32[1,3,1408], index: 3, kind: output, shape index: {}]
  %s4 = sld [smem:[#allocation0]]
  $region30: #{forward.1} parent=0
    _
  %s6 = ssub.s32 1, %s4
  %s7 = scalar_select 0, %s6, %s4
  $region1: #{forward.1} parent=0
    #allocation2 [shape = 'u8[3604480]{0}', space=vmem, size = 0x370000, scoped, tag = 'input window, operand 1, single buffered']
    #allocation3 [shape = 's32[1]{0}', space=sflag, size = 0x4, scoped, tag = 'scoped memory for forward.1']
    #allocation4 [shape = 'u8[5632]{0}', space=vmem, size = 0x1800, scoped, tag = 'input window, operand 2, single buffered']
    #allocation5 [shape = 's32[1]{0}', space=sflag, size = 0x4, scoped, tag = 'scoped memory for forward.1']
    %8 = vsyncpa [#allocation3], 0
    %9 = vsyncpa [#allocation5], 0
    // Predicated region
    $region2: #{forward.1} parent=1 // pred_check
      _
    $region3: #{forward.1} parent=1 // pred_check_branch
      %11 = sbr.rel (0) target = $region5
    $region4: #{forward.1} parent=1 // pred_region
      _
    $region5: #{forward.1} parent=1 // pred_fallthru
      _
    // Predicated region
    $region6: #{forward.1} parent=1 // pred_check
      _
    $region7: #{forward.1} parent=1 // pred_check_branch
      %13 = sbr.rel (0) target = $region9
    $region8: #{forward.1} parent=1 // pred_region
      %s15 = ssub.s32 112640, 112640
      %16 = vsyncadd [#allocation3], %s15
      %s17 = sshll.u32 [#allocation2], 4
      %s18 = int_to_ptr.vmem [resolvable:$true] %s17
      %23 = dma.hbm_to_vmem [thread:$0]  %s1, 112640, %s18, [#allocation3], 704, 704, 44
    $region9: #{forward.1} parent=1 // pred_fallthru
      _
    // Predicated region
    $region10: #{forward.1} parent=1 // pred_check
      _
    $region11: #{forward.1} parent=1 // pred_check_branch
      %25 = sbr.rel (0) target = $region13
    $region12: #{forward.1} parent=1 // pred_region
      %s27 = ssub.s32 176, 176
      %28 = vsyncadd [#allocation5], %s27
      %s30 = sshll.u32 [#allocation4], 4
      %s31 = int_to_ptr.vmem [resolvable:$true] %s30
      %33 = dma.hbm_to_vmem [thread:$0]  %s2, 176, %s31, [#allocation5]
    $region13: #{forward.1} parent=1 // pred_fallthru
      _
    // Predicated region
    $region14: #{forward.1} parent=1 // pred_check
      _
    $region15: #{forward.1} parent=1 // pred_check_branch
      %35 = sbr.rel (0) target = $region17
    $region16: #{forward.1} parent=1 // pred_region
      %36 = dma.done [#allocation3], 112640
    $region17: #{forward.1} parent=1 // pred_fallthru
      _
    // Predicated region
    $region18: #{forward.1} parent=1 // pred_check
      _
    $region19: #{forward.1} parent=1 // pred_check_branch
      %38 = sbr.rel (0) target = $region21
    $region20: #{forward.1} parent=1 // pred_region
      %39 = dma.done [#allocation5], 176
    $region21: #{forward.1} parent=1 // pred_fallthru
      _
    %v41 = vld [vmem:[%s0] sm:$0xff]
    %v42 = vld [vmem:[%s0 + $0x8] sm:$0xff]
    %v43 = vld [vmem:[%s0 + $0x10] sm:$0xf]
    %v44 = vld [vmem:[#allocation2] sm:$0xff]
    %v45 = vld [vmem:[#allocation2 + $0x8] sm:$0xff]
    %v46 = vld [vmem:[#allocation2 + $0x10] sm:$0xff]
    %v47 = vld [vmem:[#allocation2 + $0x18] sm:$0xff]
    %v48 = vld [vmem:[#allocation2 + $0x20] sm:$0xff]
    %v49 = vld [vmem:[#allocation2 + $0x28] sm:$0xf]
    %v50 = vld [vmem:[#allocation2 + $0x2c] sm:$0xff]
    %v51 = vld [vmem:[#allocation2 + $0x34] sm:$0xff]
    %v52 = vld [vmem:[#allocation2 + $0x3c] sm:$0xff]
    %v53 = vld [vmem:[#allocation2 + $0x44] sm:$0xff]
    %v54 = vld [vmem:[#allocation2 + $0x4c] sm:$0xff]
    %v55 = vld [vmem:[#allocation2 + $0x54] sm:$0xf]
    %v56 = vld [vmem:[#allocation2 + $0x58] sm:$0xff]
    %v57 = vld [vmem:[#allocation2 + $0x60] sm:$0xff]
    %v58 = vld [vmem:[#allocation2 + $0x68] sm:$0xff]
    %v59 = vld [vmem:[#allocation2 + $0x70] sm:$0xff]
    %v60 = vld [vmem:[#allocation2 + $0x78] sm:$0xff]
    %v61 = vld [vmem:[#allocation2 + $0x80] sm:$0xf]
    %v62 = vld [vmem:[#allocation2 + $0x84] sm:$0xff]
    %v63 = vld [vmem:[#allocation2 + $0x8c] sm:$0xff]
    %v64 = vld [vmem:[#allocation2 + $0x94] sm:$0xff]
    %v65 = vld [vmem:[#allocation2 + $0x9c] sm:$0xff]
    %v66 = vld [vmem:[#allocation2 + $0xa4] sm:$0xff]
    %v67 = vld [vmem:[#allocation2 + $0xac] sm:$0xf]
    %v68 = vld [vmem:[#allocation2 + $0xb0] sm:$0xff]
    %v69 = vld [vmem:[#allocation2 + $0xb8] sm:$0xff]
    %v70 = vld [vmem:[#allocation2 + $0xc0] sm:$0xff]
    %v71 = vld [vmem:[#allocation2 + $0xc8] sm:$0xff]
    %v72 = vld [vmem:[#allocation2 + $0xd0] sm:$0xff]
    %v73 = vld [vmem:[#allocation2 + $0xd8] sm:$0xf]
    %v74 = vld [vmem:[#allocation2 + $0xdc] sm:$0xff]
    %v75 = vld [vmem:[#allocation2 + $0xe4] sm:$0xff]
    %v76 = vld [vmem:[#allocation2 + $0xec] sm:$0xff]
    %v77 = vld [vmem:[#allocation2 + $0xf4] sm:$0xff]
    %v78 = vld [vmem:[#allocation2 + $0xfc] sm:$0xff]
    %v79 = vld [vmem:[#allocation2 + $0x104] sm:$0xf]
    %v80 = vld [vmem:[#allocation2 + $0x108] sm:$0xff]
    %v81 = vld [vmem:[#allocation2 + $0x110] sm:$0xff]
    %v82 = vld [vmem:[#allocation2 + $0x118] sm:$0xff]
    %v83 = vld [vmem:[#allocation2 + $0x120] sm:$0xff]
    %v84 = vld [vmem:[#allocation2 + $0x128] sm:$0xff]
    %v85 = vld [vmem:[#allocation2 + $0x130] sm:$0xf]
    %v86 = vld [vmem:[#allocation2 + $0x134] sm:$0xff]
    %v87 = vld [vmem:[#allocation2 + $0x13c] sm:$0xff]
    %v88 = vld [vmem:[#allocation2 + $0x144] sm:$0xff]
    %v89 = vld [vmem:[#allocation2 + $0x14c] sm:$0xff]
    %v90 = vld [vmem:[#allocation2 + $0x154] sm:$0xff]
    %v91 = vld [vmem:[#allocation2 + $0x15c] sm:$0xf]
    %v92 = vld [vmem:[#allocation2 + $0x160] sm:$0xff]
    %v93 = vld [vmem:[#allocation2 + $0x168] sm:$0xff]
    %v94 = vld [vmem:[#allocation2 + $0x170] sm:$0xff]
    %v95 = vld [vmem:[#allocation2 + $0x178] sm:$0xff]
    %v96 = vld [vmem:[#allocation2 + $0x180] sm:$0xff]
    %v97 = vld [vmem:[#allocation2 + $0x188] sm:$0xf]
    %v98 = vld [vmem:[#allocation2 + $0x18c] sm:$0xff]
    %v99 = vld [vmem:[#allocation2 + $0x194] sm:$0xff]
    %v100 = vld [vmem:[#allocation2 + $0x19c] sm:$0xff]
    %v101 = vld [vmem:[#allocation2 + $0x1a4] sm:$0xff]
    %v102 = vld [vmem:[#allocation2 + $0x1ac] sm:$0xff]
    %v103 = vld [vmem:[#allocation2 + $0x1b4] sm:$0xf]
    %v104 = vld [vmem:[#allocation2 + $0x1b8] sm:$0xff]
    %v105 = vld [vmem:[#allocation2 + $0x1c0] sm:$0xff]
    %v106 = vld [vmem:[#allocation2 + $0x1c8] sm:$0xff]
    %v107 = vld [vmem:[#allocation2 + $0x1d0] sm:$0xff]
    %v108 = vld [vmem:[#allocation2 + $0x1d8] sm:$0xff]
    %v109 = vld [vmem:[#allocation2 + $0x1e0] sm:$0xf]
    %v110 = vld [vmem:[#allocation2 + $0x1e4] sm:$0xff]
    %v111 = vld [vmem:[#allocation2 + $0x1ec] sm:$0xff]
    %v112 = vld [vmem:[#allocation2 + $0x1f4] sm:$0xff]
    %v113 = vld [vmem:[#allocation2 + $0x1fc] sm:$0xff]
    %v114 = vld [vmem:[#allocation2 + $0x204] sm:$0xff]
    %v115 = vld [vmem:[#allocation2 + $0x20c] sm:$0xf]
    %v116 = vld [vmem:[#allocation2 + $0x210] sm:$0xff]
    %v117 = vld [vmem:[#allocation2 + $0x218] sm:$0xff]
    %v118 = vld [vmem:[#allocation2 + $0x220] sm:$0xff]
    %v119 = vld [vmem:[#allocation2 + $0x228] sm:$0xff]
    %v120 = vld [vmem:[#allocation2 + $0x230] sm:$0xff]
    %v121 = vld [vmem:[#allocation2 + $0x238] sm:$0xf]
    %v122 = vld [vmem:[#allocation2 + $0x23c] sm:$0xff]
    %v123 = vld [vmem:[#allocation2 + $0x244] sm:$0xff]
    %v124 = vld [vmem:[#allocation2 + $0x24c] sm:$0xff]
    %v125 = vld [vmem:[#allocation2 + $0x254] sm:$0xff]
    %v126 = vld [vmem:[#allocation2 + $0x25c] sm:$0xff]
    %v127 = vld [vmem:[#allocation2 + $0x264] sm:$0xf]
    %v128 = vld [vmem:[#allocation2 + $0x268] sm:$0xff]
    %v129 = vld [vmem:[#allocation2 + $0x270] sm:$0xff]
    %v130 = vld [vmem:[#allocation2 + $0x278] sm:$0xff]
    %v131 = vld [vmem:[#allocation2 + $0x280] sm:$0xff]
    %v132 = vld [vmem:[#allocation2 + $0x288] sm:$0xff]
    %v133 = vld [vmem:[#allocation2 + $0x290] sm:$0xf]
    %v134 = vld [vmem:[#allocation2 + $0x294] sm:$0xff]
    %v135 = vld [vmem:[#allocation2 + $0x29c] sm:$0xff]
    %v136 = vld [vmem:[#allocation2 + $0x2a4] sm:$0xff]
    %v137 = vld [vmem:[#allocation2 + $0x2ac] sm:$0xff]
    %v138 = vld [vmem:[#allocation2 + $0x2b4] sm:$0xff]
    %v139 = vld [vmem:[#allocation2 + $0x2bc] sm:$0xf]
    %v140 = vld [vmem:[#allocation2 + $0x2c0] sm:$0xff]
    %v141 = vld [vmem:[#allocation2 + $0x2c8] sm:$0xff]
    %v142 = vld [vmem:[#allocation2 + $0x2d0] sm:$0xff]
    %v143 = vld [vmem:[#allocation2 + $0x2d8] sm:$0xff]
    %v144 = vld [vmem:[#allocation2 + $0x2e0] sm:$0xff]
    %v145 = vld [vmem:[#allocation2 + $0x2e8] sm:$0xf]
    %v146 = vld [vmem:[#allocation2 + $0x2ec] sm:$0xff]
    %v147 = vld [vmem:[#allocation2 + $0x2f4] sm:$0xff]
    %v148 = vld [vmem:[#allocation2 + $0x2fc] sm:$0xff]
    %v149 = vld [vmem:[#allocation2 + $0x304] sm:$0xff]
    %v150 = vld [vmem:[#allocation2 + $0x30c] sm:$0xff]
    %v151 = vld [vmem:[#allocation2 + $0x314] sm:$0xf]
    %v152 = vld [vmem:[#allocation2 + $0x318] sm:$0xff]
    %v153 = vld [vmem:[#allocation2 + $0x320] sm:$0xff]
    %v154 = vld [vmem:[#allocation2 + $0x328] sm:$0xff]
    %v155 = vld [vmem:[#allocation2 + $0x330] sm:$0xff]
    %v156 = vld [vmem:[#allocation2 + $0x338] sm:$0xff]
    %v157 = vld [vmem:[#allocation2 + $0x340] sm:$0xf]
    %v158 = vld [vmem:[#allocation2 + $0x344] sm:$0xff]
    %v159 = vld [vmem:[#allocation2 + $0x34c] sm:$0xff]
    %v160 = vld [vmem:[#allocation2 + $0x354] sm:$0xff]
    %v161 = vld [vmem:[#allocation2 + $0x35c] sm:$0xff]
    %v162 = vld [vmem:[#allocation2 + $0x364] sm:$0xff]
    %v163 = vld [vmem:[#allocation2 + $0x36c] sm:$0xf]
    %v164 = vld [vmem:[#allocation2 + $0x370] sm:$0xff]
    %v165 = vld [vmem:[#allocation2 + $0x378] sm:$0xff]
    %v166 = vld [vmem:[#allocation2 + $0x380] sm:$0xff]
    %v167 = vld [vmem:[#allocation2 + $0x388] sm:$0xff]
    %v168 = vld [vmem:[#allocation2 + $0x390] sm:$0xff]
    %v169 = vld [vmem:[#allocation2 + $0x398] sm:$0xf]
    %v170 = vld [vmem:[#allocation2 + $0x39c] sm:$0xff]
    %v171 = vld [vmem:[#allocation2 + $0x3a4] sm:$0xff]
    %v172 = vld [vmem:[#allocation2 + $0x3ac] sm:$0xff]
    %v173 = vld [vmem:[#allocation2 + $0x3b4] sm:$0xff]
    %v174 = vld [vmem:[#allocation2 + $0x3bc] sm:$0xff]
    %v175 = vld [vmem:[#allocation2 + $0x3c4] sm:$0xf]
    %v176 = vld [vmem:[#allocation2 + $0x3c8] sm:$0xff]
    %v177 = vld [vmem:[#allocation2 + $0x3d0] sm:$0xff]
    %v178 = vld [vmem:[#allocation2 + $0x3d8] sm:$0xff]
    %v179 = vld [vmem:[#allocation2 + $0x3e0] sm:$0xff]
    %v180 = vld [vmem:[#allocation2 + $0x3e8] sm:$0xff]
    %v181 = vld [vmem:[#allocation2 + $0x3f0] sm:$0xf]
    %v182 = vld [vmem:[#allocation2 + $0x3f4] sm:$0xff]
    %v183 = vld [vmem:[#allocation2 + $0x3fc] sm:$0xff]
    %v184 = vld [vmem:[#allocation2 + $0x404] sm:$0xff]
    %v185 = vld [vmem:[#allocation2 + $0x40c] sm:$0xff]
    %v186 = vld [vmem:[#allocation2 + $0x414] sm:$0xff]
    %v187 = vld [vmem:[#allocation2 + $0x41c] sm:$0xf]
    %v188 = vld [vmem:[#allocation2 + $0x420] sm:$0xff]
    %v189 = vld [vmem:[#allocation2 + $0x428] sm:$0xff]
    %v190 = vld [vmem:[#allocation2 + $0x430] sm:$0xff]
    %v191 = vld [vmem:[#allocation2 + $0x438] sm:$0xff]
    %v192 = vld [vmem:[#allocation2 + $0x440] sm:$0xff]
    %v193 = vld [vmem:[#allocation2 + $0x448] sm:$0xf]
    %v194 = vld [vmem:[#allocation2 + $0x44c] sm:$0xff]
    %v195 = vld [vmem:[#allocation2 + $0x454] sm:$0xff]
    %v196 = vld [vmem:[#allocation2 + $0x45c] sm:$0xff]
    %v197 = vld [vmem:[#allocation2 + $0x464] sm:$0xff]
    %v198 = vld [vmem:[#allocation2 + $0x46c] sm:$0xff]
    %v199 = vld [vmem:[#allocation2 + $0x474] sm:$0xf]
    %v200 = vld [vmem:[#allocation2 + $0x478] sm:$0xff]
    %v201 = vld [vmem:[#allocation2 + $0x480] sm:$0xff]
    %v202 = vld [vmem:[#allocation2 + $0x488] sm:$0xff]
    %v203 = vld [vmem:[#allocation2 + $0x490] sm:$0xff]
    %v204 = vld [vmem:[#allocation2 + $0x498] sm:$0xff]
    %v205 = vld [vmem:[#allocation2 + $0x4a0] sm:$0xf]
    %v206 = vld [vmem:[#allocation2 + $0x4a4] sm:$0xff]
    %v207 = vld [vmem:[#allocation2 + $0x4ac] sm:$0xff]
    %v208 = vld [vmem:[#allocation2 + $0x4b4] sm:$0xff]
    %v209 = vld [vmem:[#allocation2 + $0x4bc] sm:$0xff]
    %v210 = vld [vmem:[#allocation2 + $0x4c4] sm:$0xff]
    %v211 = vld [vmem:[#allocation2 + $0x4cc] sm:$0xf]
    %v212 = vld [vmem:[#allocation2 + $0x4d0] sm:$0xff]
    %v213 = vld [vmem:[#allocation2 + $0x4d8] sm:$0xff]
    %v214 = vld [vmem:[#allocation2 + $0x4e0] sm:$0xff]
    %v215 = vld [vmem:[#allocation2 + $0x4e8] sm:$0xff]
    %v216 = vld [vmem:[#allocation2 + $0x4f0] sm:$0xff]
    %v217 = vld [vmem:[#allocation2 + $0x4f8] sm:$0xf]
    %v218 = vld [vmem:[#allocation2 + $0x4fc] sm:$0xff]
    %v219 = vld [vmem:[#allocation2 + $0x504] sm:$0xff]
    %v220 = vld [vmem:[#allocation2 + $0x50c] sm:$0xff]
    %v221 = vld [vmem:[#allocation2 + $0x514] sm:$0xff]
    %v222 = vld [vmem:[#allocation2 + $0x51c] sm:$0xff]
    %v223 = vld [vmem:[#allocation2 + $0x524] sm:$0xf]
    %v224 = vld [vmem:[#allocation2 + $0x528] sm:$0xff]
    %v225 = vld [vmem:[#allocation2 + $0x530] sm:$0xff]
    %v226 = vld [vmem:[#allocation2 + $0x538] sm:$0xff]
    %v227 = vld [vmem:[#allocation2 + $0x540] sm:$0xff]
    %v228 = vld [vmem:[#allocation2 + $0x548] sm:$0xff]
    %v229 = vld [vmem:[#allocation2 + $0x550] sm:$0xf]
    %v230 = vld [vmem:[#allocation2 + $0x554] sm:$0xff]
    %v231 = vld [vmem:[#allocation2 + $0x55c] sm:$0xff]
    %v232 = vld [vmem:[#allocation2 + $0x564] sm:$0xff]
    %v233 = vld [vmem:[#allocation2 + $0x56c] sm:$0xff]
    %v234 = vld [vmem:[#allocation2 + $0x574] sm:$0xff]
    %v235 = vld [vmem:[#allocation2 + $0x57c] sm:$0xf]
    %v236 = vld [vmem:[#allocation2 + $0x580] sm:$0xff]
    %v237 = vld [vmem:[#allocation2 + $0x588] sm:$0xff]
    %v238 = vld [vmem:[#allocation2 + $0x590] sm:$0xff]
    %v239 = vld [vmem:[#allocation2 + $0x598] sm:$0xff]
    %v240 = vld [vmem:[#allocation2 + $0x5a0] sm:$0xff]
    %v241 = vld [vmem:[#allocation2 + $0x5a8] sm:$0xf]
    %v242 = vld [vmem:[#allocation2 + $0x5ac] sm:$0xff]
    %v243 = vld [vmem:[#allocation2 + $0x5b4] sm:$0xff]
    %v244 = vld [vmem:[#allocation2 + $0x5bc] sm:$0xff]
    %v245 = vld [vmem:[#allocation2 + $0x5c4] sm:$0xff]
    %v246 = vld [vmem:[#allocation2 + $0x5cc] sm:$0xff]
    %v247 = vld [vmem:[#allocation2 + $0x5d4] sm:$0xf]
    %v248 = vld [vmem:[#allocation2 + $0x5d8] sm:$0xff]
    %v249 = vld [vmem:[#allocation2 + $0x5e0] sm:$0xff]
    %v250 = vld [vmem:[#allocation2 + $0x5e8] sm:$0xff]
    %v251 = vld [vmem:[#allocation2 + $0x5f0] sm:$0xff]
    %v252 = vld [vmem:[#allocation2 + $0x5f8] sm:$0xff]
    %v253 = vld [vmem:[#allocation2 + $0x600] sm:$0xf]
    %v254 = vld [vmem:[#allocation2 + $0x604] sm:$0xff]
    %v255 = vld [vmem:[#allocation2 + $0x60c] sm:$0xff]
    %v256 = vld [vmem:[#allocation2 + $0x614] sm:$0xff]
    %v257 = vld [vmem:[#allocation2 + $0x61c] sm:$0xff]
    %v258 = vld [vmem:[#allocation2 + $0x624] sm:$0xff]
    %v259 = vld [vmem:[#allocation2 + $0x62c] sm:$0xf]
    %v260 = vld [vmem:[#allocation2 + $0x630] sm:$0xff]
    %v261 = vld [vmem:[#allocation2 + $0x638] sm:$0xff]
    %v262 = vld [vmem:[#allocation2 + $0x640] sm:$0xff]
    %v263 = vld [vmem:[#allocation2 + $0x648] sm:$0xff]
    %v264 = vld [vmem:[#allocation2 + $0x650] sm:$0xff]
    %v265 = vld [vmem:[#allocation2 + $0x658] sm:$0xf]
    %v266 = vld [vmem:[#allocation2 + $0x65c] sm:$0xff]
    %v267 = vld [vmem:[#allocation2 + $0x664] sm:$0xff]
    %v268 = vld [vmem:[#allocation2 + $0x66c] sm:$0xff]
    %v269 = vld [vmem:[#allocation2 + $0x674] sm:$0xff]
    %v270 = vld [vmem:[#allocation2 + $0x67c] sm:$0xff]
    %v271 = vld [vmem:[#allocation2 + $0x684] sm:$0xf]
    %v272 = vld [vmem:[#allocation2 + $0x688] sm:$0xff]
    %v273 = vld [vmem:[#allocation2 + $0x690] sm:$0xff]
    %v274 = vld [vmem:[#allocation2 + $0x698] sm:$0xff]
    %v275 = vld [vmem:[#allocation2 + $0x6a0] sm:$0xff]
    %v276 = vld [vmem:[#allocation2 + $0x6a8] sm:$0xff]
    %v277 = vld [vmem:[#allocation2 + $0x6b0] sm:$0xf]
    %v278 = vld [vmem:[#allocation2 + $0x6b4] sm:$0xff]
    %v279 = vld [vmem:[#allocation2 + $0x6bc] sm:$0xff]
    %v280 = vld [vmem:[#allocation2 + $0x6c4] sm:$0xff]
    %v281 = vld [vmem:[#allocation2 + $0x6cc] sm:$0xff]
    %v282 = vld [vmem:[#allocation2 + $0x6d4] sm:$0xff]
    %v283 = vld [vmem:[#allocation2 + $0x6dc] sm:$0xf]
    %v284 = vld [vmem:[#allocation2 + $0x6e0] sm:$0xff]
    %v285 = vld [vmem:[#allocation2 + $0x6e8] sm:$0xff]
    %v286 = vld [vmem:[#allocation2 + $0x6f0] sm:$0xff]
    %v287 = vld [vmem:[#allocation2 + $0x6f8] sm:$0xff]
    %v288 = vld [vmem:[#allocation2 + $0x700] sm:$0xff]
    %v289 = vld [vmem:[#allocation2 + $0x708] sm:$0xf]
    %v290 = vld [vmem:[#allocation2 + $0x70c] sm:$0xff]
    %v291 = vld [vmem:[#allocation2 + $0x714] sm:$0xff]
    %v292 = vld [vmem:[#allocation2 + $0x71c] sm:$0xff]
    %v293 = vld [vmem:[#allocation2 + $0x724] sm:$0xff]
    %v294 = vld [vmem:[#allocation2 + $0x72c] sm:$0xff]
    %v295 = vld [vmem:[#allocation2 + $0x734] sm:$0xf]
    %v296 = vld [vmem:[#allocation2 + $0x738] sm:$0xff]
    %v297 = vld [vmem:[#allocation2 + $0x740] sm:$0xff]
    %v298 = vld [vmem:[#allocation2 + $0x748] sm:$0xff]
    %v299 = vld [vmem:[#allocation2 + $0x750] sm:$0xff]
    %v300 = vld [vmem:[#allocation2 + $0x758] sm:$0xff]
    %v301 = vld [vmem:[#allocation2 + $0x760] sm:$0xf]
    %v302 = vld [vmem:[#allocation2 + $0x764] sm:$0xff]
    %v303 = vld [vmem:[#allocation2 + $0x76c] sm:$0xff]
    %v304 = vld [vmem:[#allocation2 + $0x774] sm:$0xff]
    %v305 = vld [vmem:[#allocation2 + $0x77c] sm:$0xff]
    %v306 = vld [vmem:[#allocation2 + $0x784] sm:$0xff]
    %v307 = vld [vmem:[#allocation2 + $0x78c] sm:$0xf]
    %v308 = vld [vmem:[#allocation2 + $0x790] sm:$0xff]
    %v309 = vld [vmem:[#allocation2 + $0x798] sm:$0xff]
    %v310 = vld [vmem:[#allocation2 + $0x7a0] sm:$0xff]
    %v311 = vld [vmem:[#allocation2 + $0x7a8] sm:$0xff]
    %v312 = vld [vmem:[#allocation2 + $0x7b0] sm:$0xff]
    %v313 = vld [vmem:[#allocation2 + $0x7b8] sm:$0xf]
    %v314 = vld [vmem:[#allocation2 + $0x7bc] sm:$0xff]
    %v315 = vld [vmem:[#allocation2 + $0x7c4] sm:$0xff]
    %v316 = vld [vmem:[#allocation2 + $0x7cc] sm:$0xff]
    %v317 = vld [vmem:[#allocation2 + $0x7d4] sm:$0xff]
    %v318 = vld [vmem:[#allocation2 + $0x7dc] sm:$0xff]
    %v319 = vld [vmem:[#allocation2 + $0x7e4] sm:$0xf]
    %v320 = vld [vmem:[#allocation2 + $0x7e8] sm:$0xff]
    %v321 = vld [vmem:[#allocation2 + $0x7f0] sm:$0xff]
    %v322 = vld [vmem:[#allocation2 + $0x7f8] sm:$0xff]
    %v323 = vld [vmem:[#allocation2 + $0x800] sm:$0xff]
    %v324 = vld [vmem:[#allocation2 + $0x808] sm:$0xff]
    %v325 = vld [vmem:[#allocation2 + $0x810] sm:$0xf]
    %v326 = vld [vmem:[#allocation2 + $0x814] sm:$0xff]
    %v327 = vld [vmem:[#allocation2 + $0x81c] sm:$0xff]
    %v328 = vld [vmem:[#allocation2 + $0x824] sm:$0xff]
    %v329 = vld [vmem:[#allocation2 + $0x82c] sm:$0xff]
    %v330 = vld [vmem:[#allocation2 + $0x834] sm:$0xff]
    %v331 = vld [vmem:[#allocation2 + $0x83c] sm:$0xf]
    %v332 = vld [vmem:[#allocation2 + $0x840] sm:$0xff]
    %v333 = vld [vmem:[#allocation2 + $0x848] sm:$0xff]
    %v334 = vld [vmem:[#allocation2 + $0x850] sm:$0xff]
    %v335 = vld [vmem:[#allocation2 + $0x858] sm:$0xff]
    %v336 = vld [vmem:[#allocation2 + $0x860] sm:$0xff]
    %v337 = vld [vmem:[#allocation2 + $0x868] sm:$0xf]
    %v338 = vld [vmem:[#allocation2 + $0x86c] sm:$0xff]
    %v339 = vld [vmem:[#allocation2 + $0x874] sm:$0xff]
    %v340 = vld [vmem:[#allocation2 + $0x87c] sm:$0xff]
    %v341 = vld [vmem:[#allocation2 + $0x884] sm:$0xff]
    %v342 = vld [vmem:[#allocation2 + $0x88c] sm:$0xff]
    %v343 = vld [vmem:[#allocation2 + $0x894] sm:$0xf]
    %v344 = vld [vmem:[#allocation2 + $0x898] sm:$0xff]
    %v345 = vld [vmem:[#allocation2 + $0x8a0] sm:$0xff]
    %v346 = vld [vmem:[#allocation2 + $0x8a8] sm:$0xff]
    %v347 = vld [vmem:[#allocation2 + $0x8b0] sm:$0xff]
    %v348 = vld [vmem:[#allocation2 + $0x8b8] sm:$0xff]
    %v349 = vld [vmem:[#allocation2 + $0x8c0] sm:$0xf]
    %v350 = vld [vmem:[#allocation2 + $0x8c4] sm:$0xff]
    %v351 = vld [vmem:[#allocation2 + $0x8cc] sm:$0xff]
    %v352 = vld [vmem:[#allocation2 + $0x8d4] sm:$0xff]
    %v353 = vld [vmem:[#allocation2 + $0x8dc] sm:$0xff]
    %v354 = vld [vmem:[#allocation2 + $0x8e4] sm:$0xff]
    %v355 = vld [vmem:[#allocation2 + $0x8ec] sm:$0xf]
    %v356 = vld [vmem:[#allocation2 + $0x8f0] sm:$0xff]
    %v357 = vld [vmem:[#allocation2 + $0x8f8] sm:$0xff]
    %v358 = vld [vmem:[#allocation2 + $0x900] sm:$0xff]
    %v359 = vld [vmem:[#allocation2 + $0x908] sm:$0xff]
    %v360 = vld [vmem:[#allocation2 + $0x910] sm:$0xff]
    %v361 = vld [vmem:[#allocation2 + $0x918] sm:$0xf]
    %v362 = vld [vmem:[#allocation2 + $0x91c] sm:$0xff]
    %v363 = vld [vmem:[#allocation2 + $0x924] sm:$0xff]
    %v364 = vld [vmem:[#allocation2 + $0x92c] sm:$0xff]
    %v365 = vld [vmem:[#allocation2 + $0x934] sm:$0xff]
    %v366 = vld [vmem:[#allocation2 + $0x93c] sm:$0xff]
    %v367 = vld [vmem:[#allocation2 + $0x944] sm:$0xf]
    %v368 = vld [vmem:[#allocation2 + $0x948] sm:$0xff]
    %v369 = vld [vmem:[#allocation2 + $0x950] sm:$0xff]
    %v370 = vld [vmem:[#allocation2 + $0x958] sm:$0xff]
    %v371 = vld [vmem:[#allocation2 + $0x960] sm:$0xff]
    %v372 = vld [vmem:[#allocation2 + $0x968] sm:$0xff]
    %v373 = vld [vmem:[#allocation2 + $0x970] sm:$0xf]
    %v374 = vld [vmem:[#allocation2 + $0x974] sm:$0xff]
    %v375 = vld [vmem:[#allocation2 + $0x97c] sm:$0xff]
    %v376 = vld [vmem:[#allocation2 + $0x984] sm:$0xff]
    %v377 = vld [vmem:[#allocation2 + $0x98c] sm:$0xff]
    %v378 = vld [vmem:[#allocation2 + $0x994] sm:$0xff]
    %v379 = vld [vmem:[#allocation2 + $0x99c] sm:$0xf]
    %v380 = vld [vmem:[#allocation2 + $0x9a0] sm:$0xff]
    %v381 = vld [vmem:[#allocation2 + $0x9a8] sm:$0xff]
    %v382 = vld [vmem:[#allocation2 + $0x9b0] sm:$0xff]
    %v383 = vld [vmem:[#allocation2 + $0x9b8] sm:$0xff]
    %v384 = vld [vmem:[#allocation2 + $0x9c0] sm:$0xff]
    %v385 = vld [vmem:[#allocation2 + $0x9c8] sm:$0xf]
    %v386 = vld [vmem:[#allocation2 + $0x9cc] sm:$0xff]
    %v387 = vld [vmem:[#allocation2 + $0x9d4] sm:$0xff]
    %v388 = vld [vmem:[#allocation2 + $0x9dc] sm:$0xff]
    %v389 = vld [vmem:[#allocation2 + $0x9e4] sm:$0xff]
    %v390 = vld [vmem:[#allocation2 + $0x9ec] sm:$0xff]
    %v391 = vld [vmem:[#allocation2 + $0x9f4] sm:$0xf]
    %v392 = vld [vmem:[#allocation2 + $0x9f8] sm:$0xff]
    %v393 = vld [vmem:[#allocation2 + $0xa00] sm:$0xff]
    %v394 = vld [vmem:[#allocation2 + $0xa08] sm:$0xff]
    %v395 = vld [vmem:[#allocation2 + $0xa10] sm:$0xff]
    %v396 = vld [vmem:[#allocation2 + $0xa18] sm:$0xff]
    %v397 = vld [vmem:[#allocation2 + $0xa20] sm:$0xf]
    %v398 = vld [vmem:[#allocation2 + $0xa24] sm:$0xff]
    %v399 = vld [vmem:[#allocation2 + $0xa2c] sm:$0xff]
    %v400 = vld [vmem:[#allocation2 + $0xa34] sm:$0xff]
    %v401 = vld [vmem:[#allocation2 + $0xa3c] sm:$0xff]
    %v402 = vld [vmem:[#allocation2 + $0xa44] sm:$0xff]
    %v403 = vld [vmem:[#allocation2 + $0xa4c] sm:$0xf]
    %v404 = vld [vmem:[#allocation2 + $0xa50] sm:$0xff]
    %v405 = vld [vmem:[#allocation2 + $0xa58] sm:$0xff]
    %v406 = vld [vmem:[#allocation2 + $0xa60] sm:$0xff]
    %v407 = vld [vmem:[#allocation2 + $0xa68] sm:$0xff]
    %v408 = vld [vmem:[#allocation2 + $0xa70] sm:$0xff]
    %v409 = vld [vmem:[#allocation2 + $0xa78] sm:$0xf]
    %v410 = vld [vmem:[#allocation2 + $0xa7c] sm:$0xff]
    %v411 = vld [vmem:[#allocation2 + $0xa84] sm:$0xff]
    %v412 = vld [vmem:[#allocation2 + $0xa8c] sm:$0xff]
    %v413 = vld [vmem:[#allocation2 + $0xa94] sm:$0xff]
    %v414 = vld [vmem:[#allocation2 + $0xa9c] sm:$0xff]
    %v415 = vld [vmem:[#allocation2 + $0xaa4] sm:$0xf]
    %v416 = vld [vmem:[#allocation2 + $0xaa8] sm:$0xff]
    %v417 = vld [vmem:[#allocation2 + $0xab0] sm:$0xff]
    %v418 = vld [vmem:[#allocation2 + $0xab8] sm:$0xff]
    %v419 = vld [vmem:[#allocation2 + $0xac0] sm:$0xff]
    %v420 = vld [vmem:[#allocation2 + $0xac8] sm:$0xff]
    %v421 = vld [vmem:[#allocation2 + $0xad0] sm:$0xf]
    %v422 = vld [vmem:[#allocation2 + $0xad4] sm:$0xff]
    %v423 = vld [vmem:[#allocation2 + $0xadc] sm:$0xff]
    %v424 = vld [vmem:[#allocation2 + $0xae4] sm:$0xff]
    %v425 = vld [vmem:[#allocation2 + $0xaec] sm:$0xff]
    %v426 = vld [vmem:[#allocation2 + $0xaf4] sm:$0xff]
    %v427 = vld [vmem:[#allocation2 + $0xafc] sm:$0xf]
    %v428 = vld [vmem:[#allocation2 + $0xb00] sm:$0xff]
    %v429 = vld [vmem:[#allocation2 + $0xb08] sm:$0xff]
    %v430 = vld [vmem:[#allocation2 + $0xb10] sm:$0xff]
    %v431 = vld [vmem:[#allocation2 + $0xb18] sm:$0xff]
    %v432 = vld [vmem:[#allocation2 + $0xb20] sm:$0xff]
    %v433 = vld [vmem:[#allocation2 + $0xb28] sm:$0xf]
    %v434 = vld [vmem:[#allocation2 + $0xb2c] sm:$0xff]
    %v435 = vld [vmem:[#allocation2 + $0xb34] sm:$0xff]
    %v436 = vld [vmem:[#allocation2 + $0xb3c] sm:$0xff]
    %v437 = vld [vmem:[#allocation2 + $0xb44] sm:$0xff]
    %v438 = vld [vmem:[#allocation2 + $0xb4c] sm:$0xff]
    %v439 = vld [vmem:[#allocation2 + $0xb54] sm:$0xf]
    %v440 = vld [vmem:[#allocation2 + $0xb58] sm:$0xff]
    %v441 = vld [vmem:[#allocation2 + $0xb60] sm:$0xff]
    %v442 = vld [vmem:[#allocation2 + $0xb68] sm:$0xff]
    %v443 = vld [vmem:[#allocation2 + $0xb70] sm:$0xff]
    %v444 = vld [vmem:[#allocation2 + $0xb78] sm:$0xff]
    %v445 = vld [vmem:[#allocation2 + $0xb80] sm:$0xf]
    %v446 = vld [vmem:[#allocation2 + $0xb84] sm:$0xff]
    %v447 = vld [vmem:[#allocation2 + $0xb8c] sm:$0xff]
    %v448 = vld [vmem:[#allocation2 + $0xb94] sm:$0xff]
    %v449 = vld [vmem:[#allocation2 + $0xb9c] sm:$0xff]
    %v450 = vld [vmem:[#allocation2 + $0xba4] sm:$0xff]
    %v451 = vld [vmem:[#allocation2 + $0xbac] sm:$0xf]
    %v452 = vld [vmem:[#allocation2 + $0xbb0] sm:$0xff]
    %v453 = vld [vmem:[#allocation2 + $0xbb8] sm:$0xff]
    %v454 = vld [vmem:[#allocation2 + $0xbc0] sm:$0xff]
    %v455 = vld [vmem:[#allocation2 + $0xbc8] sm:$0xff]
    %v456 = vld [vmem:[#allocation2 + $0xbd0] sm:$0xff]
    %v457 = vld [vmem:[#allocation2 + $0xbd8] sm:$0xf]
    %v458 = vld [vmem:[#allocation2 + $0xbdc] sm:$0xff]
    %v459 = vld [vmem:[#allocation2 + $0xbe4] sm:$0xff]
    %v460 = vld [vmem:[#allocation2 + $0xbec] sm:$0xff]
    %v461 = vld [vmem:[#allocation2 + $0xbf4] sm:$0xff]
    %v462 = vld [vmem:[#allocation2 + $0xbfc] sm:$0xff]
    %v463 = vld [vmem:[#allocation2 + $0xc04] sm:$0xf]
    %v464 = vld [vmem:[#allocation2 + $0xc08] sm:$0xff]
    %v465 = vld [vmem:[#allocation2 + $0xc10] sm:$0xff]
    %v466 = vld [vmem:[#allocation2 + $0xc18] sm:$0xff]
    %v467 = vld [vmem:[#allocation2 + $0xc20] sm:$0xff]
    %v468 = vld [vmem:[#allocation2 + $0xc28] sm:$0xff]
    %v469 = vld [vmem:[#allocation2 + $0xc30] sm:$0xf]
    %v470 = vld [vmem:[#allocation2 + $0xc34] sm:$0xff]
    %v471 = vld [vmem:[#allocation2 + $0xc3c] sm:$0xff]
    %v472 = vld [vmem:[#allocation2 + $0xc44] sm:$0xff]
    %v473 = vld [vmem:[#allocation2 + $0xc4c] sm:$0xff]
    %v474 = vld [vmem:[#allocation2 + $0xc54] sm:$0xff]
    %v475 = vld [vmem:[#allocation2 + $0xc5c] sm:$0xf]
    %v476 = vld [vmem:[#allocation2 + $0xc60] sm:$0xff]
    %v477 = vld [vmem:[#allocation2 + $0xc68] sm:$0xff]
    %v478 = vld [vmem:[#allocation2 + $0xc70] sm:$0xff]
    %v479 = vld [vmem:[#allocation2 + $0xc78] sm:$0xff]
    %v480 = vld [vmem:[#allocation2 + $0xc80] sm:$0xff]
    %v481 = vld [vmem:[#allocation2 + $0xc88] sm:$0xf]
    %v482 = vld [vmem:[#allocation2 + $0xc8c] sm:$0xff]
    %v483 = vld [vmem:[#allocation2 + $0xc94] sm:$0xff]
    %v484 = vld [vmem:[#allocation2 + $0xc9c] sm:$0xff]
    %v485 = vld [vmem:[#allocation2 + $0xca4] sm:$0xff]
    %v486 = vld [vmem:[#allocation2 + $0xcac] sm:$0xff]
    %v487 = vld [vmem:[#allocation2 + $0xcb4] sm:$0xf]
    %v488 = vld [vmem:[#allocation2 + $0xcb8] sm:$0xff]
    %v489 = vld [vmem:[#allocation2 + $0xcc0] sm:$0xff]
    %v490 = vld [vmem:[#allocation2 + $0xcc8] sm:$0xff]
    %v491 = vld [vmem:[#allocation2 + $0xcd0] sm:$0xff]
    %v492 = vld [vmem:[#allocation2 + $0xcd8] sm:$0xff]
    %v493 = vld [vmem:[#allocation2 + $0xce0] sm:$0xf]
    %v494 = vld [vmem:[#allocation2 + $0xce4] sm:$0xff]
    %v495 = vld [vmem:[#allocation2 + $0xcec] sm:$0xff]
    %v496 = vld [vmem:[#allocation2 + $0xcf4] sm:$0xff]
    %v497 = vld [vmem:[#allocation2 + $0xcfc] sm:$0xff]
    %v498 = vld [vmem:[#allocation2 + $0xd04] sm:$0xff]
    %v499 = vld [vmem:[#allocation2 + $0xd0c] sm:$0xf]
    %v500 = vld [vmem:[#allocation2 + $0xd10] sm:$0xff]
    %v501 = vld [vmem:[#allocation2 + $0xd18] sm:$0xff]
    %v502 = vld [vmem:[#allocation2 + $0xd20] sm:$0xff]
    %v503 = vld [vmem:[#allocation2 + $0xd28] sm:$0xff]
    %v504 = vld [vmem:[#allocation2 + $0xd30] sm:$0xff]
    %v505 = vld [vmem:[#allocation2 + $0xd38] sm:$0xf]
    %v506 = vld [vmem:[#allocation2 + $0xd3c] sm:$0xff]
    %v507 = vld [vmem:[#allocation2 + $0xd44] sm:$0xff]
    %v508 = vld [vmem:[#allocation2 + $0xd4c] sm:$0xff]
    %v509 = vld [vmem:[#allocation2 + $0xd54] sm:$0xff]
    %v510 = vld [vmem:[#allocation2 + $0xd5c] sm:$0xff]
    %v511 = vld [vmem:[#allocation2 + $0xd64] sm:$0xf]
    %v512 = vld [vmem:[#allocation2 + $0xd68] sm:$0xff]
    %v513 = vld [vmem:[#allocation2 + $0xd70] sm:$0xff]
    %v514 = vld [vmem:[#allocation2 + $0xd78] sm:$0xff]
    %v515 = vld [vmem:[#allocation2 + $0xd80] sm:$0xff]
    %v516 = vld [vmem:[#allocation2 + $0xd88] sm:$0xff]
    %v517 = vld [vmem:[#allocation2 + $0xd90] sm:$0xf]
    %v518 = vld [vmem:[#allocation2 + $0xd94] sm:$0xff]
    %v519 = vld [vmem:[#allocation2 + $0xd9c] sm:$0xff]
    %v520 = vld [vmem:[#allocation2 + $0xda4] sm:$0xff]
    %v521 = vld [vmem:[#allocation2 + $0xdac] sm:$0xff]
    %v522 = vld [vmem:[#allocation2 + $0xdb4] sm:$0xff]
    %v523 = vld [vmem:[#allocation2 + $0xdbc] sm:$0xf]
    %v524 = vld [vmem:[#allocation2 + $0xdc0] sm:$0xff]
    %v525 = vld [vmem:[#allocation2 + $0xdc8] sm:$0xff]
    %v526 = vld [vmem:[#allocation2 + $0xdd0] sm:$0xff]
    %v527 = vld [vmem:[#allocation2 + $0xdd8] sm:$0xff]
    %v528 = vld [vmem:[#allocation2 + $0xde0] sm:$0xff]
    %v529 = vld [vmem:[#allocation2 + $0xde8] sm:$0xf]
    %v530 = vld [vmem:[#allocation2 + $0xdec] sm:$0xff]
    %v531 = vld [vmem:[#allocation2 + $0xdf4] sm:$0xff]
    %v532 = vld [vmem:[#allocation2 + $0xdfc] sm:$0xff]
    %v533 = vld [vmem:[#allocation2 + $0xe04] sm:$0xff]
    %v534 = vld [vmem:[#allocation2 + $0xe0c] sm:$0xff]
    %v535 = vld [vmem:[#allocation2 + $0xe14] sm:$0xf]
    %v536 = vld [vmem:[#allocation2 + $0xe18] sm:$0xff]
    %v537 = vld [vmem:[#allocation2 + $0xe20] sm:$0xff]
    %v538 = vld [vmem:[#allocation2 + $0xe28] sm:$0xff]
    %v539 = vld [vmem:[#allocation2 + $0xe30] sm:$0xff]
    %v540 = vld [vmem:[#allocation2 + $0xe38] sm:$0xff]
    %v541 = vld [vmem:[#allocation2 + $0xe40] sm:$0xf]
    %v542 = vld [vmem:[#allocation2 + $0xe44] sm:$0xff]
    %v543 = vld [vmem:[#allocation2 + $0xe4c] sm:$0xff]
    %v544 = vld [vmem:[#allocation2 + $0xe54] sm:$0xff]
    %v545 = vld [vmem:[#allocation2 + $0xe5c] sm:$0xff]
    %v546 = vld [vmem:[#allocation2 + $0xe64] sm:$0xff]
    %v547 = vld [vmem:[#allocation2 + $0xe6c] sm:$0xf]
    %v548 = vld [vmem:[#allocation2 + $0xe70] sm:$0xff]
    %v549 = vld [vmem:[#allocation2 + $0xe78] sm:$0xff]
    %v550 = vld [vmem:[#allocation2 + $0xe80] sm:$0xff]
    %v551 = vld [vmem:[#allocation2 + $0xe88] sm:$0xff]
    %v552 = vld [vmem:[#allocation2 + $0xe90] sm:$0xff]
    %v553 = vld [vmem:[#allocation2 + $0xe98] sm:$0xf]
    %v554 = vld [vmem:[#allocation2 + $0xe9c] sm:$0xff]
    %v555 = vld [vmem:[#allocation2 + $0xea4] sm:$0xff]
    %v556 = vld [vmem:[#allocation2 + $0xeac] sm:$0xff]
    %v557 = vld [vmem:[#allocation2 + $0xeb4] sm:$0xff]
    %v558 = vld [vmem:[#allocation2 + $0xebc] sm:$0xff]
    %v559 = vld [vmem:[#allocation2 + $0xec4] sm:$0xf]
    %v560 = vld [vmem:[#allocation2 + $0xec8] sm:$0xff]
    %v561 = vld [vmem:[#allocation2 + $0xed0] sm:$0xff]
    %v562 = vld [vmem:[#allocation2 + $0xed8] sm:$0xff]
    %v563 = vld [vmem:[#allocation2 + $0xee0] sm:$0xff]
    %v564 = vld [vmem:[#allocation2 + $0xee8] sm:$0xff]
    %v565 = vld [vmem:[#allocation2 + $0xef0] sm:$0xf]
    %v566 = vld [vmem:[#allocation2 + $0xef4] sm:$0xff]
    %v567 = vld [vmem:[#allocation2 + $0xefc] sm:$0xff]
    %v568 = vld [vmem:[#allocation2 + $0xf04] sm:$0xff]
    %v569 = vld [vmem:[#allocation2 + $0xf0c] sm:$0xff]
    %v570 = vld [vmem:[#allocation2 + $0xf14] sm:$0xff]
    %v571 = vld [vmem:[#allocation2 + $0xf1c] sm:$0xf]
    %v572 = vld [vmem:[#allocation2 + $0xf20] sm:$0xff]
    %v573 = vld [vmem:[#allocation2 + $0xf28] sm:$0xff]
    %v574 = vld [vmem:[#allocation2 + $0xf30] sm:$0xff]
    %v575 = vld [vmem:[#allocation2 + $0xf38] sm:$0xff]
    %v576 = vld [vmem:[#allocation2 + $0xf40] sm:$0xff]
    %v577 = vld [vmem:[#allocation2 + $0xf48] sm:$0xf]
    %v578 = vld [vmem:[#allocation2 + $0xf4c] sm:$0xff]
    %v579 = vld [vmem:[#allocation2 + $0xf54] sm:$0xff]
    %v580 = vld [vmem:[#allocation2 + $0xf5c] sm:$0xff]
    %v581 = vld [vmem:[#allocation2 + $0xf64] sm:$0xff]
    %v582 = vld [vmem:[#allocation2 + $0xf6c] sm:$0xff]
    %v583 = vld [vmem:[#allocation2 + $0xf74] sm:$0xf]
    %v584 = vld [vmem:[#allocation2 + $0xf78] sm:$0xff]
    %v585 = vld [vmem:[#allocation2 + $0xf80] sm:$0xff]
    %v586 = vld [vmem:[#allocation2 + $0xf88] sm:$0xff]
    %v587 = vld [vmem:[#allocation2 + $0xf90] sm:$0xff]
    %v588 = vld [vmem:[#allocation2 + $0xf98] sm:$0xff]
    %v589 = vld [vmem:[#allocation2 + $0xfa0] sm:$0xf]
    %v590 = vld [vmem:[#allocation2 + $0xfa4] sm:$0xff]
    %v591 = vld [vmem:[#allocation2 + $0xfac] sm:$0xff]
    %v592 = vld [vmem:[#allocation2 + $0xfb4] sm:$0xff]
    %v593 = vld [vmem:[#allocation2 + $0xfbc] sm:$0xff]
    %v594 = vld [vmem:[#allocation2 + $0xfc4] sm:$0xff]
    %v595 = vld [vmem:[#allocation2 + $0xfcc] sm:$0xf]
    %v596 = vld [vmem:[#allocation2 + $0xfd0] sm:$0xff]
    %v597 = vld [vmem:[#allocation2 + $0xfd8] sm:$0xff]
    %v598 = vld [vmem:[#allocation2 + $0xfe0] sm:$0xff]
    %v599 = vld [vmem:[#allocation2 + $0xfe8] sm:$0xff]
    %v600 = vld [vmem:[#allocation2 + $0xff0] sm:$0xff]
    %v601 = vld [vmem:[#allocation2 + $0xff8] sm:$0xf]
    %v602 = vld [vmem:[#allocation2 + $0xffc] sm:$0xff]
    %v603 = vld [vmem:[#allocation2 + $0x1004] sm:$0xff]
    %v604 = vld [vmem:[#allocation2 + $0x100c] sm:$0xff]
    %v605 = vld [vmem:[#allocation2 + $0x1014] sm:$0xff]
    %v606 = vld [vmem:[#allocation2 + $0x101c] sm:$0xff]
    %v607 = vld [vmem:[#allocation2 + $0x1024] sm:$0xf]
    %v608 = vld [vmem:[#allocation2 + $0x1028] sm:$0xff]
    %v609 = vld [vmem:[#allocation2 + $0x1030] sm:$0xff]
    %v610 = vld [vmem:[#allocation2 + $0x1038] sm:$0xff]
    %v611 = vld [vmem:[#allocation2 + $0x1040] sm:$0xff]
    %v612 = vld [vmem:[#allocation2 + $0x1048] sm:$0xff]
    %v613 = vld [vmem:[#allocation2 + $0x1050] sm:$0xf]
    %v614 = vld [vmem:[#allocation2 + $0x1054] sm:$0xff]
    %v615 = vld [vmem:[#allocation2 + $0x105c] sm:$0xff]
    %v616 = vld [vmem:[#allocation2 + $0x1064] sm:$0xff]
    %v617 = vld [vmem:[#allocation2 + $0x106c] sm:$0xff]
    %v618 = vld [vmem:[#allocation2 + $0x1074] sm:$0xff]
    %v619 = vld [vmem:[#allocation2 + $0x107c] sm:$0xf]
    %v620 = vld [vmem:[#allocation2 + $0x1080] sm:$0xff]
    %v621 = vld [vmem:[#allocation2 + $0x1088] sm:$0xff]
    %v622 = vld [vmem:[#allocation2 + $0x1090] sm:$0xff]
    %v623 = vld [vmem:[#allocation2 + $0x1098] sm:$0xff]
    %v624 = vld [vmem:[#allocation2 + $0x10a0] sm:$0xff]
    %v625 = vld [vmem:[#allocation2 + $0x10a8] sm:$0xf]
    %v626 = vld [vmem:[#allocation2 + $0x10ac] sm:$0xff]
    %v627 = vld [vmem:[#allocation2 + $0x10b4] sm:$0xff]
    %v628 = vld [vmem:[#allocation2 + $0x10bc] sm:$0xff]
    %v629 = vld [vmem:[#allocation2 + $0x10c4] sm:$0xff]
    %v630 = vld [vmem:[#allocation2 + $0x10cc] sm:$0xff]
    %v631 = vld [vmem:[#allocation2 + $0x10d4] sm:$0xf]
    %v632 = vld [vmem:[#allocation2 + $0x10d8] sm:$0xff]
    %v633 = vld [vmem:[#allocation2 + $0x10e0] sm:$0xff]
    %v634 = vld [vmem:[#allocation2 + $0x10e8] sm:$0xff]
    %v635 = vld [vmem:[#allocation2 + $0x10f0] sm:$0xff]
    %v636 = vld [vmem:[#allocation2 + $0x10f8] sm:$0xff]
    %v637 = vld [vmem:[#allocation2 + $0x1100] sm:$0xf]
    %v638 = vld [vmem:[#allocation2 + $0x1104] sm:$0xff]
    %v639 = vld [vmem:[#allocation2 + $0x110c] sm:$0xff]
    %v640 = vld [vmem:[#allocation2 + $0x1114] sm:$0xff]
    %v641 = vld [vmem:[#allocation2 + $0x111c] sm:$0xff]
    %v642 = vld [vmem:[#allocation2 + $0x1124] sm:$0xff]
    %v643 = vld [vmem:[#allocation2 + $0x112c] sm:$0xf]
    %v644 = vld [vmem:[#allocation2 + $0x1130] sm:$0xff]
    %v645 = vld [vmem:[#allocation2 + $0x1138] sm:$0xff]
    %v646 = vld [vmem:[#allocation2 + $0x1140] sm:$0xff]
    %v647 = vld [vmem:[#allocation2 + $0x1148] sm:$0xff]
    %v648 = vld [vmem:[#allocation2 + $0x1150] sm:$0xff]
    %v649 = vld [vmem:[#allocation2 + $0x1158] sm:$0xf]
    %v650 = vld [vmem:[#allocation2 + $0x115c] sm:$0xff]
    %v651 = vld [vmem:[#allocation2 + $0x1164] sm:$0xff]
    %v652 = vld [vmem:[#allocation2 + $0x116c] sm:$0xff]
    %v653 = vld [vmem:[#allocation2 + $0x1174] sm:$0xff]
    %v654 = vld [vmem:[#allocation2 + $0x117c] sm:$0xff]
    %v655 = vld [vmem:[#allocation2 + $0x1184] sm:$0xf]
    %v656 = vld [vmem:[#allocation2 + $0x1188] sm:$0xff]
    %v657 = vld [vmem:[#allocation2 + $0x1190] sm:$0xff]
    %v658 = vld [vmem:[#allocation2 + $0x1198] sm:$0xff]
    %v659 = vld [vmem:[#allocation2 + $0x11a0] sm:$0xff]
    %v660 = vld [vmem:[#allocation2 + $0x11a8] sm:$0xff]
    %v661 = vld [vmem:[#allocation2 + $0x11b0] sm:$0xf]
    %v662 = vld [vmem:[#allocation2 + $0x11b4] sm:$0xff]
    %v663 = vld [vmem:[#allocation2 + $0x11bc] sm:$0xff]
    %v664 = vld [vmem:[#allocation2 + $0x11c4] sm:$0xff]
    %v665 = vld [vmem:[#allocation2 + $0x11cc] sm:$0xff]
    %v666 = vld [vmem:[#allocation2 + $0x11d4] sm:$0xff]
    %v667 = vld [vmem:[#allocation2 + $0x11dc] sm:$0xf]
    %v668 = vld [vmem:[#allocation2 + $0x11e0] sm:$0xff]
    %v669 = vld [vmem:[#allocation2 + $0x11e8] sm:$0xff]
    %v670 = vld [vmem:[#allocation2 + $0x11f0] sm:$0xff]
    %v671 = vld [vmem:[#allocation2 + $0x11f8] sm:$0xff]
    %v672 = vld [vmem:[#allocation2 + $0x1200] sm:$0xff]
    %v673 = vld [vmem:[#allocation2 + $0x1208] sm:$0xf]
    %v674 = vld [vmem:[#allocation2 + $0x120c] sm:$0xff]
    %v675 = vld [vmem:[#allocation2 + $0x1214] sm:$0xff]
    %v676 = vld [vmem:[#allocation2 + $0x121c] sm:$0xff]
    %v677 = vld [vmem:[#allocation2 + $0x1224] sm:$0xff]
    %v678 = vld [vmem:[#allocation2 + $0x122c] sm:$0xff]
    %v679 = vld [vmem:[#allocation2 + $0x1234] sm:$0xf]
    %v680 = vld [vmem:[#allocation2 + $0x1238] sm:$0xff]
    %v681 = vld [vmem:[#allocation2 + $0x1240] sm:$0xff]
    %v682 = vld [vmem:[#allocation2 + $0x1248] sm:$0xff]
    %v683 = vld [vmem:[#allocation2 + $0x1250] sm:$0xff]
    %v684 = vld [vmem:[#allocation2 + $0x1258] sm:$0xff]
    %v685 = vld [vmem:[#allocation2 + $0x1260] sm:$0xf]
    %v686 = vld [vmem:[#allocation2 + $0x1264] sm:$0xff]
    %v687 = vld [vmem:[#allocation2 + $0x126c] sm:$0xff]
    %v688 = vld [vmem:[#allocation2 + $0x1274] sm:$0xff]
    %v689 = vld [vmem:[#allocation2 + $0x127c] sm:$0xff]
    %v690 = vld [vmem:[#allocation2 + $0x1284] sm:$0xff]
    %v691 = vld [vmem:[#allocation2 + $0x128c] sm:$0xf]
    %v692 = vld [vmem:[#allocation2 + $0x1290] sm:$0xff]
    %v693 = vld [vmem:[#allocation2 + $0x1298] sm:$0xff]
    %v694 = vld [vmem:[#allocation2 + $0x12a0] sm:$0xff]
    %v695 = vld [vmem:[#allocation2 + $0x12a8] sm:$0xff]
    %v696 = vld [vmem:[#allocation2 + $0x12b0] sm:$0xff]
    %v697 = vld [vmem:[#allocation2 + $0x12b8] sm:$0xf]
    %v698 = vld [vmem:[#allocation2 + $0x12bc] sm:$0xff]
    %v699 = vld [vmem:[#allocation2 + $0x12c4] sm:$0xff]
    %v700 = vld [vmem:[#allocation2 + $0x12cc] sm:$0xff]
    %v701 = vld [vmem:[#allocation2 + $0x12d4] sm:$0xff]
    %v702 = vld [vmem:[#allocation2 + $0x12dc] sm:$0xff]
    %v703 = vld [vmem:[#allocation2 + $0x12e4] sm:$0xf]
    %v704 = vld [vmem:[#allocation2 + $0x12e8] sm:$0xff]
    %v705 = vld [vmem:[#allocation2 + $0x12f0] sm:$0xff]
    %v706 = vld [vmem:[#allocation2 + $0x12f8] sm:$0xff]
    %v707 = vld [vmem:[#allocation2 + $0x1300] sm:$0xff]
    %v708 = vld [vmem:[#allocation2 + $0x1308] sm:$0xff]
    %v709 = vld [vmem:[#allocation2 + $0x1310] sm:$0xf]
    %v710 = vld [vmem:[#allocation2 + $0x1314] sm:$0xff]
    %v711 = vld [vmem:[#allocation2 + $0x131c] sm:$0xff]
    %v712 = vld [vmem:[#allocation2 + $0x1324] sm:$0xff]
    %v713 = vld [vmem:[#allocation2 + $0x132c] sm:$0xff]
    %v714 = vld [vmem:[#allocation2 + $0x1334] sm:$0xff]
    %v715 = vld [vmem:[#allocation2 + $0x133c] sm:$0xf]
    %v716 = vld [vmem:[#allocation2 + $0x1340] sm:$0xff]
    %v717 = vld [vmem:[#allocation2 + $0x1348] sm:$0xff]
    %v718 = vld [vmem:[#allocation2 + $0x1350] sm:$0xff]
    %v719 = vld [vmem:[#allocation2 + $0x1358] sm:$0xff]
    %v720 = vld [vmem:[#allocation2 + $0x1360] sm:$0xff]
    %v721 = vld [vmem:[#allocation2 + $0x1368] sm:$0xf]
    %v722 = vld [vmem:[#allocation2 + $0x136c] sm:$0xff]
    %v723 = vld [vmem:[#allocation2 + $0x1374] sm:$0xff]
    %v724 = vld [vmem:[#allocation2 + $0x137c] sm:$0xff]
    %v725 = vld [vmem:[#allocation2 + $0x1384] sm:$0xff]
    %v726 = vld [vmem:[#allocation2 + $0x138c] sm:$0xff]
    %v727 = vld [vmem:[#allocation2 + $0x1394] sm:$0xf]
    %v728 = vld [vmem:[#allocation2 + $0x1398] sm:$0xff]
    %v729 = vld [vmem:[#allocation2 + $0x13a0] sm:$0xff]
    %v730 = vld [vmem:[#allocation2 + $0x13a8] sm:$0xff]
    %v731 = vld [vmem:[#allocation2 + $0x13b0] sm:$0xff]
    %v732 = vld [vmem:[#allocation2 + $0x13b8] sm:$0xff]
    %v733 = vld [vmem:[#allocation2 + $0x13c0] sm:$0xf]
    %v734 = vld [vmem:[#allocation2 + $0x13c4] sm:$0xff]
    %v735 = vld [vmem:[#allocation2 + $0x13cc] sm:$0xff]
    %v736 = vld [vmem:[#allocation2 + $0x13d4] sm:$0xff]
    %v737 = vld [vmem:[#allocation2 + $0x13dc] sm:$0xff]
    %v738 = vld [vmem:[#allocation2 + $0x13e4] sm:$0xff]
    %v739 = vld [vmem:[#allocation2 + $0x13ec] sm:$0xf]
    %v740 = vld [vmem:[#allocation2 + $0x13f0] sm:$0xff]
    %v741 = vld [vmem:[#allocation2 + $0x13f8] sm:$0xff]
    %v742 = vld [vmem:[#allocation2 + $0x1400] sm:$0xff]
    %v743 = vld [vmem:[#allocation2 + $0x1408] sm:$0xff]
    %v744 = vld [vmem:[#allocation2 + $0x1410] sm:$0xff]
    %v745 = vld [vmem:[#allocation2 + $0x1418] sm:$0xf]
    %v746 = vld [vmem:[#allocation2 + $0x141c] sm:$0xff]
    %v747 = vld [vmem:[#allocation2 + $0x1424] sm:$0xff]
    %v748 = vld [vmem:[#allocation2 + $0x142c] sm:$0xff]
    %v749 = vld [vmem:[#allocation2 + $0x1434] sm:$0xff]
    %v750 = vld [vmem:[#allocation2 + $0x143c] sm:$0xff]
    %v751 = vld [vmem:[#allocation2 + $0x1444] sm:$0xf]
    %v752 = vld [vmem:[#allocation2 + $0x1448] sm:$0xff]
    %v753 = vld [vmem:[#allocation2 + $0x1450] sm:$0xff]
    %v754 = vld [vmem:[#allocation2 + $0x1458] sm:$0xff]
    %v755 = vld [vmem:[#allocation2 + $0x1460] sm:$0xff]
    %v756 = vld [vmem:[#allocation2 + $0x1468] sm:$0xff]
    %v757 = vld [vmem:[#allocation2 + $0x1470] sm:$0xf]
    %v758 = vld [vmem:[#allocation2 + $0x1474] sm:$0xff]
    %v759 = vld [vmem:[#allocation2 + $0x147c] sm:$0xff]
    %v760 = vld [vmem:[#allocation2 + $0x1484] sm:$0xff]
    %v761 = vld [vmem:[#allocation2 + $0x148c] sm:$0xff]
    %v762 = vld [vmem:[#allocation2 + $0x1494] sm:$0xff]
    %v763 = vld [vmem:[#allocation2 + $0x149c] sm:$0xf]
    %v764 = vld [vmem:[#allocation2 + $0x14a0] sm:$0xff]
    %v765 = vld [vmem:[#allocation2 + $0x14a8] sm:$0xff]
    %v766 = vld [vmem:[#allocation2 + $0x14b0] sm:$0xff]
    %v767 = vld [vmem:[#allocation2 + $0x14b8] sm:$0xff]
    %v768 = vld [vmem:[#allocation2 + $0x14c0] sm:$0xff]
    %v769 = vld [vmem:[#allocation2 + $0x14c8] sm:$0xf]
    %v770 = vld [vmem:[#allocation2 + $0x14cc] sm:$0xff]
    %v771 = vld [vmem:[#allocation2 + $0x14d4] sm:$0xff]
    %v772 = vld [vmem:[#allocation2 + $0x14dc] sm:$0xff]
    %v773 = vld [vmem:[#allocation2 + $0x14e4] sm:$0xff]
    %v774 = vld [vmem:[#allocation2 + $0x14ec] sm:$0xff]
    %v775 = vld [vmem:[#allocation2 + $0x14f4] sm:$0xf]
    %v776 = vld [vmem:[#allocation2 + $0x14f8] sm:$0xff]
    %v777 = vld [vmem:[#allocation2 + $0x1500] sm:$0xff]
    %v778 = vld [vmem:[#allocation2 + $0x1508] sm:$0xff]
    %v779 = vld [vmem:[#allocation2 + $0x1510] sm:$0xff]
    %v780 = vld [vmem:[#allocation2 + $0x1518] sm:$0xff]
    %v781 = vld [vmem:[#allocation2 + $0x1520] sm:$0xf]
    %v782 = vld [vmem:[#allocation2 + $0x1524] sm:$0xff]
    %v783 = vld [vmem:[#allocation2 + $0x152c] sm:$0xff]
    %v784 = vld [vmem:[#allocation2 + $0x1534] sm:$0xff]
    %v785 = vld [vmem:[#allocation2 + $0x153c] sm:$0xff]
    %v786 = vld [vmem:[#allocation2 + $0x1544] sm:$0xff]
    %v787 = vld [vmem:[#allocation2 + $0x154c] sm:$0xf]
    %v788 = vld [vmem:[#allocation2 + $0x1550] sm:$0xff]
    %v789 = vld [vmem:[#allocation2 + $0x1558] sm:$0xff]
    %v790 = vld [vmem:[#allocation2 + $0x1560] sm:$0xff]
    %v791 = vld [vmem:[#allocation2 + $0x1568] sm:$0xff]
    %v792 = vld [vmem:[#allocation2 + $0x1570] sm:$0xff]
    %v793 = vld [vmem:[#allocation2 + $0x1578] sm:$0xf]
    %v794 = vld [vmem:[#allocation2 + $0x157c] sm:$0xff]
    %v795 = vld [vmem:[#allocation2 + $0x1584] sm:$0xff]
    %v796 = vld [vmem:[#allocation2 + $0x158c] sm:$0xff]
    %v797 = vld [vmem:[#allocation2 + $0x1594] sm:$0xff]
    %v798 = vld [vmem:[#allocation2 + $0x159c] sm:$0xff]
    %v799 = vld [vmem:[#allocation2 + $0x15a4] sm:$0xf]
    %v800 = vld [vmem:[#allocation2 + $0x15a8] sm:$0xff]
    %v801 = vld [vmem:[#allocation2 + $0x15b0] sm:$0xff]
    %v802 = vld [vmem:[#allocation2 + $0x15b8] sm:$0xff]
    %v803 = vld [vmem:[#allocation2 + $0x15c0] sm:$0xff]
    %v804 = vld [vmem:[#allocation2 + $0x15c8] sm:$0xff]
    %v805 = vld [vmem:[#allocation2 + $0x15d0] sm:$0xf]
    %v806 = vld [vmem:[#allocation2 + $0x15d4] sm:$0xff]
    %v807 = vld [vmem:[#allocation2 + $0x15dc] sm:$0xff]
    %v808 = vld [vmem:[#allocation2 + $0x15e4] sm:$0xff]
    %v809 = vld [vmem:[#allocation2 + $0x15ec] sm:$0xff]
    %v810 = vld [vmem:[#allocation2 + $0x15f4] sm:$0xff]
    %v811 = vld [vmem:[#allocation2 + $0x15fc] sm:$0xf]
    %v812 = vld [vmem:[#allocation2 + $0x1600] sm:$0xff]
    %v813 = vld [vmem:[#allocation2 + $0x1608] sm:$0xff]
    %v814 = vld [vmem:[#allocation2 + $0x1610] sm:$0xff]
    %v815 = vld [vmem:[#allocation2 + $0x1618] sm:$0xff]
    %v816 = vld [vmem:[#allocation2 + $0x1620] sm:$0xff]
    %v817 = vld [vmem:[#allocation2 + $0x1628] sm:$0xf]
    %v818 = vld [vmem:[#allocation2 + $0x162c] sm:$0xff]
    %v819 = vld [vmem:[#allocation2 + $0x1634] sm:$0xff]
    %v820 = vld [vmem:[#allocation2 + $0x163c] sm:$0xff]
    %v821 = vld [vmem:[#allocation2 + $0x1644] sm:$0xff]
    %v822 = vld [vmem:[#allocation2 + $0x164c] sm:$0xff]
    %v823 = vld [vmem:[#allocation2 + $0x1654] sm:$0xf]
    %v824 = vld [vmem:[#allocation2 + $0x1658] sm:$0xff]
    %v825 = vld [vmem:[#allocation2 + $0x1660] sm:$0xff]
    %v826 = vld [vmem:[#allocation2 + $0x1668] sm:$0xff]
    %v827 = vld [vmem:[#allocation2 + $0x1670] sm:$0xff]
    %v828 = vld [vmem:[#allocation2 + $0x1678] sm:$0xff]
    %v829 = vld [vmem:[#allocation2 + $0x1680] sm:$0xf]
    %v830 = vld [vmem:[#allocation2 + $0x1684] sm:$0xff]
    %v831 = vld [vmem:[#allocation2 + $0x168c] sm:$0xff]
    %v832 = vld [vmem:[#allocation2 + $0x1694] sm:$0xff]
    %v833 = vld [vmem:[#allocation2 + $0x169c] sm:$0xff]
    %v834 = vld [vmem:[#allocation2 + $0x16a4] sm:$0xff]
    %v835 = vld [vmem:[#allocation2 + $0x16ac] sm:$0xf]
    %v836 = vld [vmem:[#allocation2 + $0x16b0] sm:$0xff]
    %v837 = vld [vmem:[#allocation2 + $0x16b8] sm:$0xff]
    %v838 = vld [vmem:[#allocation2 + $0x16c0] sm:$0xff]
    %v839 = vld [vmem:[#allocation2 + $0x16c8] sm:$0xff]
    %v840 = vld [vmem:[#allocation2 + $0x16d0] sm:$0xff]
    %v841 = vld [vmem:[#allocation2 + $0x16d8] sm:$0xf]
    %v842 = vld [vmem:[#allocation2 + $0x16dc] sm:$0xff]
    %v843 = vld [vmem:[#allocation2 + $0x16e4] sm:$0xff]
    %v844 = vld [vmem:[#allocation2 + $0x16ec] sm:$0xff]
    %v845 = vld [vmem:[#allocation2 + $0x16f4] sm:$0xff]
    %v846 = vld [vmem:[#allocation2 + $0x16fc] sm:$0xff]
    %v847 = vld [vmem:[#allocation2 + $0x1704] sm:$0xf]
    %v848 = vld [vmem:[#allocation2 + $0x1708] sm:$0xff]
    %v849 = vld [vmem:[#allocation2 + $0x1710] sm:$0xff]
    %v850 = vld [vmem:[#allocation2 + $0x1718] sm:$0xff]
    %v851 = vld [vmem:[#allocation2 + $0x1720] sm:$0xff]
    %v852 = vld [vmem:[#allocation2 + $0x1728] sm:$0xff]
    %v853 = vld [vmem:[#allocation2 + $0x1730] sm:$0xf]
    %v854 = vld [vmem:[#allocation2 + $0x1734] sm:$0xff]
    %v855 = vld [vmem:[#allocation2 + $0x173c] sm:$0xff]
    %v856 = vld [vmem:[#allocation2 + $0x1744] sm:$0xff]
    %v857 = vld [vmem:[#allocation2 + $0x174c] sm:$0xff]
    %v858 = vld [vmem:[#allocation2 + $0x1754] sm:$0xff]
    %v859 = vld [vmem:[#allocation2 + $0x175c] sm:$0xf]
    %v860 = vld [vmem:[#allocation2 + $0x1760] sm:$0xff]
    %v861 = vld [vmem:[#allocation2 + $0x1768] sm:$0xff]
    %v862 = vld [vmem:[#allocation2 + $0x1770] sm:$0xff]
    %v863 = vld [vmem:[#allocation2 + $0x1778] sm:$0xff]
    %v864 = vld [vmem:[#allocation2 + $0x1780] sm:$0xff]
    %v865 = vld [vmem:[#allocation2 + $0x1788] sm:$0xf]
    %v866 = vld [vmem:[#allocation2 + $0x178c] sm:$0xff]
    %v867 = vld [vmem:[#allocation2 + $0x1794] sm:$0xff]
    %v868 = vld [vmem:[#allocation2 + $0x179c] sm:$0xff]
    %v869 = vld [vmem:[#allocation2 + $0x17a4] sm:$0xff]
    %v870 = vld [vmem:[#allocation2 + $0x17ac] sm:$0xff]
    %v871 = vld [vmem:[#allocation2 + $0x17b4] sm:$0xf]
    %v872 = vld [vmem:[#allocation2 + $0x17b8] sm:$0xff]
    %v873 = vld [vmem:[#allocation2 + $0x17c0] sm:$0xff]
    %v874 = vld [vmem:[#allocation2 + $0x17c8] sm:$0xff]
    %v875 = vld [vmem:[#allocation2 + $0x17d0] sm:$0xff]
    %v876 = vld [vmem:[#allocation2 + $0x17d8] sm:$0xff]
    %v877 = vld [vmem:[#allocation2 + $0x17e0] sm:$0xf]
    %v878 = vld [vmem:[#allocation2 + $0x17e4] sm:$0xff]
    %v879 = vld [vmem:[#allocation2 + $0x17ec] sm:$0xff]
    %v880 = vld [vmem:[#allocation2 + $0x17f4] sm:$0xff]
    %v881 = vld [vmem:[#allocation2 + $0x17fc] sm:$0xff]
    %v882 = vld [vmem:[#allocation2 + $0x1804] sm:$0xff]
    %v883 = vld [vmem:[#allocation2 + $0x180c] sm:$0xf]
    %v884 = vld [vmem:[#allocation2 + $0x1810] sm:$0xff]
    %v885 = vld [vmem:[#allocation2 + $0x1818] sm:$0xff]
    %v886 = vld [vmem:[#allocation2 + $0x1820] sm:$0xff]
    %v887 = vld [vmem:[#allocation2 + $0x1828] sm:$0xff]
    %v888 = vld [vmem:[#allocation2 + $0x1830] sm:$0xff]
    %v889 = vld [vmem:[#allocation2 + $0x1838] sm:$0xf]
    %v890 = vld [vmem:[#allocation2 + $0x183c] sm:$0xff]
    %v891 = vld [vmem:[#allocation2 + $0x1844] sm:$0xff]
    %v892 = vld [vmem:[#allocation2 + $0x184c] sm:$0xff]
    %v893 = vld [vmem:[#allocation2 + $0x1854] sm:$0xff]
    %v894 = vld [vmem:[#allocation2 + $0x185c] sm:$0xff]
    %v895 = vld [vmem:[#allocation2 + $0x1864] sm:$0xf]
    %v896 = vld [vmem:[#allocation2 + $0x1868] sm:$0xff]
    %v897 = vld [vmem:[#allocation2 + $0x1870] sm:$0xff]
    %v898 = vld [vmem:[#allocation2 + $0x1878] sm:$0xff]
    %v899 = vld [vmem:[#allocation2 + $0x1880] sm:$0xff]
    %v900 = vld [vmem:[#allocation2 + $0x1888] sm:$0xff]
    %v901 = vld [vmem:[#allocation2 + $0x1890] sm:$0xf]
    %v902 = vld [vmem:[#allocation2 + $0x1894] sm:$0xff]
    %v903 = vld [vmem:[#allocation2 + $0x189c] sm:$0xff]
    %v904 = vld [vmem:[#allocation2 + $0x18a4] sm:$0xff]
    %v905 = vld [vmem:[#allocation2 + $0x18ac] sm:$0xff]
    %v906 = vld [vmem:[#allocation2 + $0x18b4] sm:$0xff]
    %v907 = vld [vmem:[#allocation2 + $0x18bc] sm:$0xf]
    %v908 = vld [vmem:[#allocation2 + $0x18c0] sm:$0xff]
    %v909 = vld [vmem:[#allocation2 + $0x18c8] sm:$0xff]
    %v910 = vld [vmem:[#allocation2 + $0x18d0] sm:$0xff]
    %v911 = vld [vmem:[#allocation2 + $0x18d8] sm:$0xff]
    %v912 = vld [vmem:[#allocation2 + $0x18e0] sm:$0xff]
    %v913 = vld [vmem:[#allocation2 + $0x18e8] sm:$0xf]
    %v914 = vld [vmem:[#allocation2 + $0x18ec] sm:$0xff]
    %v915 = vld [vmem:[#allocation2 + $0x18f4] sm:$0xff]
    %v916 = vld [vmem:[#allocation2 + $0x18fc] sm:$0xff]
    %v917 = vld [vmem:[#allocation2 + $0x1904] sm:$0xff]
    %v918 = vld [vmem:[#allocation2 + $0x190c] sm:$0xff]
    %v919 = vld [vmem:[#allocation2 + $0x1914] sm:$0xf]
    %v920 = vld [vmem:[#allocation2 + $0x1918] sm:$0xff]
    %v921 = vld [vmem:[#allocation2 + $0x1920] sm:$0xff]
    %v922 = vld [vmem:[#allocation2 + $0x1928] sm:$0xff]
    %v923 = vld [vmem:[#allocation2 + $0x1930] sm:$0xff]
    %v924 = vld [vmem:[#allocation2 + $0x1938] sm:$0xff]
    %v925 = vld [vmem:[#allocation2 + $0x1940] sm:$0xf]
    %v926 = vld [vmem:[#allocation2 + $0x1944] sm:$0xff]
    %v927 = vld [vmem:[#allocation2 + $0x194c] sm:$0xff]
    %v928 = vld [vmem:[#allocation2 + $0x1954] sm:$0xff]
    %v929 = vld [vmem:[#allocation2 + $0x195c] sm:$0xff]
    %v930 = vld [vmem:[#allocation2 + $0x1964] sm:$0xff]
    %v931 = vld [vmem:[#allocation2 + $0x196c] sm:$0xf]
    %v932 = vld [vmem:[#allocation2 + $0x1970] sm:$0xff]
    %v933 = vld [vmem:[#allocation2 + $0x1978] sm:$0xff]
    %v934 = vld [vmem:[#allocation2 + $0x1980] sm:$0xff]
    %v935 = vld [vmem:[#allocation2 + $0x1988] sm:$0xff]
    %v936 = vld [vmem:[#allocation2 + $0x1990] sm:$0xff]
    %v937 = vld [vmem:[#allocation2 + $0x1998] sm:$0xf]
    %v938 = vld [vmem:[#allocation2 + $0x199c] sm:$0xff]
    %v939 = vld [vmem:[#allocation2 + $0x19a4] sm:$0xff]
    %v940 = vld [vmem:[#allocation2 + $0x19ac] sm:$0xff]
    %v941 = vld [vmem:[#allocation2 + $0x19b4] sm:$0xff]
    %v942 = vld [vmem:[#allocation2 + $0x19bc] sm:$0xff]
    %v943 = vld [vmem:[#allocation2 + $0x19c4] sm:$0xf]
    %v944 = vld [vmem:[#allocation2 + $0x19c8] sm:$0xff]
    %v945 = vld [vmem:[#allocation2 + $0x19d0] sm:$0xff]
    %v946 = vld [vmem:[#allocation2 + $0x19d8] sm:$0xff]
    %v947 = vld [vmem:[#allocation2 + $0x19e0] sm:$0xff]
    %v948 = vld [vmem:[#allocation2 + $0x19e8] sm:$0xff]
    %v949 = vld [vmem:[#allocation2 + $0x19f0] sm:$0xf]
    %v950 = vld [vmem:[#allocation2 + $0x19f4] sm:$0xff]
    %v951 = vld [vmem:[#allocation2 + $0x19fc] sm:$0xff]
    %v952 = vld [vmem:[#allocation2 + $0x1a04] sm:$0xff]
    %v953 = vld [vmem:[#allocation2 + $0x1a0c] sm:$0xff]
    %v954 = vld [vmem:[#allocation2 + $0x1a14] sm:$0xff]
    %v955 = vld [vmem:[#allocation2 + $0x1a1c] sm:$0xf]
    %v956 = vld [vmem:[#allocation2 + $0x1a20] sm:$0xff]
    %v957 = vld [vmem:[#allocation2 + $0x1a28] sm:$0xff]
    %v958 = vld [vmem:[#allocation2 + $0x1a30] sm:$0xff]
    %v959 = vld [vmem:[#allocation2 + $0x1a38] sm:$0xff]
    %v960 = vld [vmem:[#allocation2 + $0x1a40] sm:$0xff]
    %v961 = vld [vmem:[#allocation2 + $0x1a48] sm:$0xf]
    %v962 = vld [vmem:[#allocation2 + $0x1a4c] sm:$0xff]
    %v963 = vld [vmem:[#allocation2 + $0x1a54] sm:$0xff]
    %v964 = vld [vmem:[#allocation2 + $0x1a5c] sm:$0xff]
    %v965 = vld [vmem:[#allocation2 + $0x1a64] sm:$0xff]
    %v966 = vld [vmem:[#allocation2 + $0x1a6c] sm:$0xff]
    %v967 = vld [vmem:[#allocation2 + $0x1a74] sm:$0xf]
    %v968 = vld [vmem:[#allocation2 + $0x1a78] sm:$0xff]
    %v969 = vld [vmem:[#allocation2 + $0x1a80] sm:$0xff]
    %v970 = vld [vmem:[#allocation2 + $0x1a88] sm:$0xff]
    %v971 = vld [vmem:[#allocation2 + $0x1a90] sm:$0xff]
    %v972 = vld [vmem:[#allocation2 + $0x1a98] sm:$0xff]
    %v973 = vld [vmem:[#allocation2 + $0x1aa0] sm:$0xf]
    %v974 = vld [vmem:[#allocation2 + $0x1aa4] sm:$0xff]
    %v975 = vld [vmem:[#allocation2 + $0x1aac] sm:$0xff]
    %v976 = vld [vmem:[#allocation2 + $0x1ab4] sm:$0xff]
    %v977 = vld [vmem:[#allocation2 + $0x1abc] sm:$0xff]
    %v978 = vld [vmem:[#allocation2 + $0x1ac4] sm:$0xff]
    %v979 = vld [vmem:[#allocation2 + $0x1acc] sm:$0xf]
    %v980 = vld [vmem:[#allocation2 + $0x1ad0] sm:$0xff]
    %v981 = vld [vmem:[#allocation2 + $0x1ad8] sm:$0xff]
    %v982 = vld [vmem:[#allocation2 + $0x1ae0] sm:$0xff]
    %v983 = vld [vmem:[#allocation2 + $0x1ae8] sm:$0xff]
    %v984 = vld [vmem:[#allocation2 + $0x1af0] sm:$0xff]
    %v985 = vld [vmem:[#allocation2 + $0x1af8] sm:$0xf]
    %v986 = vld [vmem:[#allocation2 + $0x1afc] sm:$0xff]
    %v987 = vld [vmem:[#allocation2 + $0x1b04] sm:$0xff]
    %v988 = vld [vmem:[#allocation2 + $0x1b0c] sm:$0xff]
    %v989 = vld [vmem:[#allocation2 + $0x1b14] sm:$0xff]
    %v990 = vld [vmem:[#allocation2 + $0x1b1c] sm:$0xff]
    %v991 = vld [vmem:[#allocation2 + $0x1b24] sm:$0xf]
    %v992 = vld [vmem:[#allocation2 + $0x1b28] sm:$0xff]
    %v993 = vld [vmem:[#allocation2 + $0x1b30] sm:$0xff]
    %v994 = vld [vmem:[#allocation2 + $0x1b38] sm:$0xff]
    %v995 = vld [vmem:[#allocation2 + $0x1b40] sm:$0xff]
    %v996 = vld [vmem:[#allocation2 + $0x1b48] sm:$0xff]
    %v997 = vld [vmem:[#allocation2 + $0x1b50] sm:$0xf]
    %v998 = vld [vmem:[#allocation2 + $0x1b54] sm:$0xff]
    %v999 = vld [vmem:[#allocation2 + $0x1b5c] sm:$0xff]
    %v1000 = vld [vmem:[#allocation2 + $0x1b64] sm:$0xff]
    %v1001 = vld [vmem:[#allocation2 + $0x1b6c] sm:$0xff]
    %v1002 = vld [vmem:[#allocation2 + $0x1b74] sm:$0xff]
    %v1003 = vld [vmem:[#allocation2 + $0x1b7c] sm:$0xf]
    %v1004 = vld [vmem:[#allocation4] sm:$0xff]
    %v1005 = vld [vmem:[#allocation4 + $0x8] sm:$0x7]
    %v1008 = vlaneseq
    %v1009 = vshrl.u32 %v1008, 7
    %v1010 = vsub.s32 0, %v1009
    %v1011 = vrot.slane %v1004, %v1010
    %v1012 = vlaneseq
    %v1013 = vshrl.u32 %v1012, 7
    %v1014 = vsub.s32 1, %v1013
    %v1015 = vrot.slane %v1004, %v1014
    %v1016 = vlaneseq
    %v1017 = vshrl.u32 %v1016, 7
    %v1018 = vsub.s32 2, %v1017
    %v1019 = vrot.slane %v1004, %v1018
    %v1020 = vlaneseq
    %v1021 = vshrl.u32 %v1020, 7
    %v1022 = vsub.s32 3, %v1021
    %v1023 = vrot.slane %v1004, %v1022
    %v1024 = vlaneseq
    %v1025 = vshrl.u32 %v1024, 7
    %v1026 = vsub.s32 4, %v1025
    %v1027 = vrot.slane %v1004, %v1026
    %v1028 = vlaneseq
    %v1029 = vshrl.u32 %v1028, 7
    %v1030 = vsub.s32 5, %v1029
    %v1031 = vrot.slane %v1004, %v1030
    %v1032 = vlaneseq
    %v1033 = vshrl.u32 %v1032, 7
    %v1034 = vsub.s32 6, %v1033
    %v1035 = vrot.slane %v1004, %v1034
    %v1036 = vlaneseq
    %v1037 = vshrl.u32 %v1036, 7
    %v1038 = vsub.s32 7, %v1037
    %v1039 = vrot.slane %v1004, %v1038
    %v1040 = vlaneseq
    %v1041 = vshrl.u32 %v1040, 7
    %v1042 = vsub.s32 0, %v1041
    %v1043 = vrot.slane %v1005, %v1042
    %v1044 = vlaneseq
    %v1045 = vshrl.u32 %v1044, 7
    %v1046 = vsub.s32 1, %v1045
    %v1047 = vrot.slane %v1005, %v1046
    %v1048 = vlaneseq
    %v1049 = vshrl.u32 %v1048, 7
    %v1050 = vsub.s32 2, %v1049
    %v1051 = vrot.slane %v1005, %v1050
    %v1066 = vcombine.high %v41, %v41
    %v1068 = vunpack.c.l.s4 1983009808
    %v1069 = vunpack.c.0.s8 %v1068
    %v1070 = vlaneseq
    %v1071 = vshrl.u32 %v1070, 7
    %v1072 = vsub.s32 %v1069, %v1071
    %v1073 = vrot.slane %v41, %v1072
    %v1075 = vunpack.c.l.s4 1983009808
    %v1076 = vunpack.c.0.s8 %v1075
    %v1077 = vlaneseq
    %v1078 = vshrl.u32 %v1077, 7
    %v1079 = vsub.s32 %v1076, %v1078
    %v1080 = vrot.slane %v1066, %v1079
    %v1081 = vcombine.high %v1073, %v1073
    %v1082 = vcombine.high %v1080, %v1080
    %v1083 = vcombine.high %v42, %v42
    %v1085 = vunpack.c.l.s4 1983009808
    %v1086 = vunpack.c.0.s8 %v1085
    %v1087 = vlaneseq
    %v1088 = vshrl.u32 %v1087, 7
    %v1089 = vsub.s32 %v1086, %v1088
    %v1090 = vrot.slane %v42, %v1089
    %v1092 = vunpack.c.l.s4 1983009808
    %v1093 = vunpack.c.0.s8 %v1092
    %v1094 = vlaneseq
    %v1095 = vshrl.u32 %v1094, 7
    %v1096 = vsub.s32 %v1093, %v1095
    %v1097 = vrot.slane %v1083, %v1096
    %v1098 = vcombine.high %v1090, %v1090
    %v1099 = vcombine.high %v1097, %v1097
    %v1101 = vunpack.c.l.s4 1983009808
    %v1102 = vunpack.c.0.s8 %v1101
    %v1103 = vlaneseq
    %v1104 = vshrl.u32 %v1103, 7
    %v1105 = vsub.s32 %v1102, %v1104
    %v1106 = vrot.slane %v43, %v1105
    %v1107 = vcombine.high %v1106, %v1106
    %v2078 = vunpack.c.l.b16 %v44
    %v2079 = vunpack.c.h.b16 %v44
    %v2080 = vunpack.c.l.b16 %v45
    %v2081 = vunpack.c.h.b16 %v45
    %v2082 = vunpack.c.l.b16 %v46
    %v2083 = vunpack.c.h.b16 %v46
    %v2084 = vunpack.c.l.b16 %v47
    %v2085 = vunpack.c.h.b16 %v47
    %v2086 = vunpack.c.l.b16 %v48
    %v2087 = vunpack.c.h.b16 %v48
    %v2088 = vunpack.c.l.b16 %v49
    %v2089 = vunpack.c.l.b16 %v50
    %v2090 = vunpack.c.h.b16 %v50
    %v2091 = vunpack.c.l.b16 %v51
    %v2092 = vunpack.c.h.b16 %v51
    %v2093 = vunpack.c.l.b16 %v52
    %v2094 = vunpack.c.h.b16 %v52
    %v2095 = vunpack.c.l.b16 %v53
    %v2096 = vunpack.c.h.b16 %v53
    %v2097 = vunpack.c.l.b16 %v54
    %v2098 = vunpack.c.h.b16 %v54
    %v2099 = vunpack.c.l.b16 %v55
    %v2100 = vunpack.c.l.b16 %v56
    %v2101 = vunpack.c.h.b16 %v56
    %v2102 = vunpack.c.l.b16 %v57
    %v2103 = vunpack.c.h.b16 %v57
    %v2104 = vunpack.c.l.b16 %v58
    %v2105 = vunpack.c.h.b16 %v58
    %v2106 = vunpack.c.l.b16 %v59
    %v2107 = vunpack.c.h.b16 %v59
    %v2108 = vunpack.c.l.b16 %v60
    %v2109 = vunpack.c.h.b16 %v60
    %v2110 = vunpack.c.l.b16 %v61
    %v2111 = vunpack.c.l.b16 %v62
    %v2112 = vunpack.c.h.b16 %v62
    %v2113 = vunpack.c.l.b16 %v63
    %v2114 = vunpack.c.h.b16 %v63
    %v2115 = vunpack.c.l.b16 %v64
    %v2116 = vunpack.c.h.b16 %v64
    %v2117 = vunpack.c.l.b16 %v65
    %v2118 = vunpack.c.h.b16 %v65
    %v2119 = vunpack.c.l.b16 %v66
    %v2120 = vunpack.c.h.b16 %v66
    %v2121 = vunpack.c.l.b16 %v67
    %v2122 = vunpack.c.l.b16 %v68
    %v2123 = vunpack.c.h.b16 %v68
    %v2124 = vunpack.c.l.b16 %v69
    %v2125 = vunpack.c.h.b16 %v69
    %v2126 = vunpack.c.l.b16 %v70
    %v2127 = vunpack.c.h.b16 %v70
    %v2128 = vunpack.c.l.b16 %v71
    %v2129 = vunpack.c.h.b16 %v71
    %v2130 = vunpack.c.l.b16 %v72
    %v2131 = vunpack.c.h.b16 %v72
    %v2132 = vunpack.c.l.b16 %v73
    %v2133 = vunpack.c.l.b16 %v74
    %v2134 = vunpack.c.h.b16 %v74
    %v2135 = vunpack.c.l.b16 %v75
    %v2136 = vunpack.c.h.b16 %v75
    %v2137 = vunpack.c.l.b16 %v76
    %v2138 = vunpack.c.h.b16 %v76
    %v2139 = vunpack.c.l.b16 %v77
    %v2140 = vunpack.c.h.b16 %v77
    %v2141 = vunpack.c.l.b16 %v78
    %v2142 = vunpack.c.h.b16 %v78
    %v2143 = vunpack.c.l.b16 %v79
    %v2144 = vunpack.c.l.b16 %v80
    %v2145 = vunpack.c.h.b16 %v80
    %v2146 = vunpack.c.l.b16 %v81
    %v2147 = vunpack.c.h.b16 %v81
    %v2148 = vunpack.c.l.b16 %v82
    %v2149 = vunpack.c.h.b16 %v82
    %v2150 = vunpack.c.l.b16 %v83
    %v2151 = vunpack.c.h.b16 %v83
    %v2152 = vunpack.c.l.b16 %v84
    %v2153 = vunpack.c.h.b16 %v84
    %v2154 = vunpack.c.l.b16 %v85
    %v2155 = vunpack.c.l.b16 %v86
    %v2156 = vunpack.c.h.b16 %v86
    %v2157 = vunpack.c.l.b16 %v87
    %v2158 = vunpack.c.h.b16 %v87
    %v2159 = vunpack.c.l.b16 %v88
    %v2160 = vunpack.c.h.b16 %v88
    %v2161 = vunpack.c.l.b16 %v89
    %v2162 = vunpack.c.h.b16 %v89
    %v2163 = vunpack.c.l.b16 %v90
    %v2164 = vunpack.c.h.b16 %v90
    %v2165 = vunpack.c.l.b16 %v91
    %v2166 = vunpack.c.l.b16 %v92
    %v2167 = vunpack.c.h.b16 %v92
    %v2168 = vunpack.c.l.b16 %v93
    %v2169 = vunpack.c.h.b16 %v93
    %v2170 = vunpack.c.l.b16 %v94
    %v2171 = vunpack.c.h.b16 %v94
    %v2172 = vunpack.c.l.b16 %v95
    %v2173 = vunpack.c.h.b16 %v95
    %v2174 = vunpack.c.l.b16 %v96
    %v2175 = vunpack.c.h.b16 %v96
    %v2176 = vunpack.c.l.b16 %v97
    %v2177 = vunpack.c.l.b16 %v98
    %v2178 = vunpack.c.h.b16 %v98
    %v2179 = vunpack.c.l.b16 %v99
    %v2180 = vunpack.c.h.b16 %v99
    %v2181 = vunpack.c.l.b16 %v100
    %v2182 = vunpack.c.h.b16 %v100
    %v2183 = vunpack.c.l.b16 %v101
    %v2184 = vunpack.c.h.b16 %v101
    %v2185 = vunpack.c.l.b16 %v102
    %v2186 = vunpack.c.h.b16 %v102
    %v2187 = vunpack.c.l.b16 %v103
    %v2188 = vunpack.c.l.b16 %v104
    %v2189 = vunpack.c.h.b16 %v104
    %v2190 = vunpack.c.l.b16 %v105
    %v2191 = vunpack.c.h.b16 %v105
    %v2192 = vunpack.c.l.b16 %v106
    %v2193 = vunpack.c.h.b16 %v106
    %v2194 = vunpack.c.l.b16 %v107
    %v2195 = vunpack.c.h.b16 %v107
    %v2196 = vunpack.c.l.b16 %v108
    %v2197 = vunpack.c.h.b16 %v108
    %v2198 = vunpack.c.l.b16 %v109
    %v2199 = vunpack.c.l.b16 %v110
    %v2200 = vunpack.c.h.b16 %v110
    %v2201 = vunpack.c.l.b16 %v111
    %v2202 = vunpack.c.h.b16 %v111
    %v2203 = vunpack.c.l.b16 %v112
    %v2204 = vunpack.c.h.b16 %v112
    %v2205 = vunpack.c.l.b16 %v113
    %v2206 = vunpack.c.h.b16 %v113
    %v2207 = vunpack.c.l.b16 %v114
    %v2208 = vunpack.c.h.b16 %v114
    %v2209 = vunpack.c.l.b16 %v115
    %v2210 = vunpack.c.l.b16 %v116
    %v2211 = vunpack.c.h.b16 %v116
    %v2212 = vunpack.c.l.b16 %v117
    %v2213 = vunpack.c.h.b16 %v117
    %v2214 = vunpack.c.l.b16 %v118
    %v2215 = vunpack.c.h.b16 %v118
    %v2216 = vunpack.c.l.b16 %v119
    %v2217 = vunpack.c.h.b16 %v119
    %v2218 = vunpack.c.l.b16 %v120
    %v2219 = vunpack.c.h.b16 %v120
    %v2220 = vunpack.c.l.b16 %v121
    %v2221 = vunpack.c.l.b16 %v122
    %v2222 = vunpack.c.h.b16 %v122
    %v2223 = vunpack.c.l.b16 %v123
    %v2224 = vunpack.c.h.b16 %v123
    %v2225 = vunpack.c.l.b16 %v124
    %v2226 = vunpack.c.h.b16 %v124
    %v2227 = vunpack.c.l.b16 %v125
    %v2228 = vunpack.c.h.b16 %v125
    %v2229 = vunpack.c.l.b16 %v126
    %v2230 = vunpack.c.h.b16 %v126
    %v2231 = vunpack.c.l.b16 %v127
    %v2232 = vunpack.c.l.b16 %v128
    %v2233 = vunpack.c.h.b16 %v128
    %v2234 = vunpack.c.l.b16 %v129
    %v2235 = vunpack.c.h.b16 %v129
    %v2236 = vunpack.c.l.b16 %v130
    %v2237 = vunpack.c.h.b16 %v130
    %v2238 = vunpack.c.l.b16 %v131
    %v2239 = vunpack.c.h.b16 %v131
    %v2240 = vunpack.c.l.b16 %v132
    %v2241 = vunpack.c.h.b16 %v132
    %v2242 = vunpack.c.l.b16 %v133
    %v2243 = vunpack.c.l.b16 %v134
    %v2244 = vunpack.c.h.b16 %v134
    %v2245 = vunpack.c.l.b16 %v135
    %v2246 = vunpack.c.h.b16 %v135
    %v2247 = vunpack.c.l.b16 %v136
    %v2248 = vunpack.c.h.b16 %v136
    %v2249 = vunpack.c.l.b16 %v137
    %v2250 = vunpack.c.h.b16 %v137
    %v2251 = vunpack.c.l.b16 %v138
    %v2252 = vunpack.c.h.b16 %v138
    %v2253 = vunpack.c.l.b16 %v139
    %v2254 = vunpack.c.l.b16 %v140
    %v2255 = vunpack.c.h.b16 %v140
    %v2256 = vunpack.c.l.b16 %v141
    %v2257 = vunpack.c.h.b16 %v141
    %v2258 = vunpack.c.l.b16 %v142
    %v2259 = vunpack.c.h.b16 %v142
    %v2260 = vunpack.c.l.b16 %v143
    %v2261 = vunpack.c.h.b16 %v143
    %v2262 = vunpack.c.l.b16 %v144
    %v2263 = vunpack.c.h.b16 %v144
    %v2264 = vunpack.c.l.b16 %v145
    %v2265 = vunpack.c.l.b16 %v146
    %v2266 = vunpack.c.h.b16 %v146
    %v2267 = vunpack.c.l.b16 %v147
    %v2268 = vunpack.c.h.b16 %v147
    %v2269 = vunpack.c.l.b16 %v148
    %v2270 = vunpack.c.h.b16 %v148
    %v2271 = vunpack.c.l.b16 %v149
    %v2272 = vunpack.c.h.b16 %v149
    %v2273 = vunpack.c.l.b16 %v150
    %v2274 = vunpack.c.h.b16 %v150
    %v2275 = vunpack.c.l.b16 %v151
    %v2276 = vunpack.c.l.b16 %v152
    %v2277 = vunpack.c.h.b16 %v152
    %v2278 = vunpack.c.l.b16 %v153
    %v2279 = vunpack.c.h.b16 %v153
    %v2280 = vunpack.c.l.b16 %v154
    %v2281 = vunpack.c.h.b16 %v154
    %v2282 = vunpack.c.l.b16 %v155
    %v2283 = vunpack.c.h.b16 %v155
    %v2284 = vunpack.c.l.b16 %v156
    %v2285 = vunpack.c.h.b16 %v156
    %v2286 = vunpack.c.l.b16 %v157
    %v2287 = vunpack.c.l.b16 %v158
    %v2288 = vunpack.c.h.b16 %v158
    %v2289 = vunpack.c.l.b16 %v159
    %v2290 = vunpack.c.h.b16 %v159
    %v2291 = vunpack.c.l.b16 %v160
    %v2292 = vunpack.c.h.b16 %v160
    %v2293 = vunpack.c.l.b16 %v161
    %v2294 = vunpack.c.h.b16 %v161
    %v2295 = vunpack.c.l.b16 %v162
    %v2296 = vunpack.c.h.b16 %v162
    %v2297 = vunpack.c.l.b16 %v163
    %v2298 = vunpack.c.l.b16 %v164
    %v2299 = vunpack.c.h.b16 %v164
    %v2300 = vunpack.c.l.b16 %v165
    %v2301 = vunpack.c.h.b16 %v165
    %v2302 = vunpack.c.l.b16 %v166
    %v2303 = vunpack.c.h.b16 %v166
    %v2304 = vunpack.c.l.b16 %v167
    %v2305 = vunpack.c.h.b16 %v167
    %v2306 = vunpack.c.l.b16 %v168
    %v2307 = vunpack.c.h.b16 %v168
    %v2308 = vunpack.c.l.b16 %v169
    %v2309 = vunpack.c.l.b16 %v170
    %v2310 = vunpack.c.h.b16 %v170
    %v2311 = vunpack.c.l.b16 %v171
    %v2312 = vunpack.c.h.b16 %v171
    %v2313 = vunpack.c.l.b16 %v172
    %v2314 = vunpack.c.h.b16 %v172
    %v2315 = vunpack.c.l.b16 %v173
    %v2316 = vunpack.c.h.b16 %v173
    %v2317 = vunpack.c.l.b16 %v174
    %v2318 = vunpack.c.h.b16 %v174
    %v2319 = vunpack.c.l.b16 %v175
    %v2320 = vunpack.c.l.b16 %v176
    %v2321 = vunpack.c.h.b16 %v176
    %v2322 = vunpack.c.l.b16 %v177
    %v2323 = vunpack.c.h.b16 %v177
    %v2324 = vunpack.c.l.b16 %v178
    %v2325 = vunpack.c.h.b16 %v178
    %v2326 = vunpack.c.l.b16 %v179
    %v2327 = vunpack.c.h.b16 %v179
    %v2328 = vunpack.c.l.b16 %v180
    %v2329 = vunpack.c.h.b16 %v180
    %v2330 = vunpack.c.l.b16 %v181
    %v2331 = vunpack.c.l.b16 %v182
    %v2332 = vunpack.c.h.b16 %v182
    %v2333 = vunpack.c.l.b16 %v183
    %v2334 = vunpack.c.h.b16 %v183
    %v2335 = vunpack.c.l.b16 %v184
    %v2336 = vunpack.c.h.b16 %v184
    %v2337 = vunpack.c.l.b16 %v185
    %v2338 = vunpack.c.h.b16 %v185
    %v2339 = vunpack.c.l.b16 %v186
    %v2340 = vunpack.c.h.b16 %v186
    %v2341 = vunpack.c.l.b16 %v187
    %v2342 = vunpack.c.l.b16 %v188
    %v2343 = vunpack.c.h.b16 %v188
    %v2344 = vunpack.c.l.b16 %v189
    %v2345 = vunpack.c.h.b16 %v189
    %v2346 = vunpack.c.l.b16 %v190
    %v2347 = vunpack.c.h.b16 %v190
    %v2348 = vunpack.c.l.b16 %v191
    %v2349 = vunpack.c.h.b16 %v191
    %v2350 = vunpack.c.l.b16 %v192
    %v2351 = vunpack.c.h.b16 %v192
    %v2352 = vunpack.c.l.b16 %v193
    %v2353 = vunpack.c.l.b16 %v194
    %v2354 = vunpack.c.h.b16 %v194
    %v2355 = vunpack.c.l.b16 %v195
    %v2356 = vunpack.c.h.b16 %v195
    %v2357 = vunpack.c.l.b16 %v196
    %v2358 = vunpack.c.h.b16 %v196
    %v2359 = vunpack.c.l.b16 %v197
    %v2360 = vunpack.c.h.b16 %v197
    %v2361 = vunpack.c.l.b16 %v198
    %v2362 = vunpack.c.h.b16 %v198
    %v2363 = vunpack.c.l.b16 %v199
    %v2364 = vunpack.c.l.b16 %v200
    %v2365 = vunpack.c.h.b16 %v200
    %v2366 = vunpack.c.l.b16 %v201
    %v2367 = vunpack.c.h.b16 %v201
    %v2368 = vunpack.c.l.b16 %v202
    %v2369 = vunpack.c.h.b16 %v202
    %v2370 = vunpack.c.l.b16 %v203
    %v2371 = vunpack.c.h.b16 %v203
    %v2372 = vunpack.c.l.b16 %v204
    %v2373 = vunpack.c.h.b16 %v204
    %v2374 = vunpack.c.l.b16 %v205
    %v2375 = vunpack.c.l.b16 %v206
    %v2376 = vunpack.c.h.b16 %v206
    %v2377 = vunpack.c.l.b16 %v207
    %v2378 = vunpack.c.h.b16 %v207
    %v2379 = vunpack.c.l.b16 %v208
    %v2380 = vunpack.c.h.b16 %v208
    %v2381 = vunpack.c.l.b16 %v209
    %v2382 = vunpack.c.h.b16 %v209
    %v2383 = vunpack.c.l.b16 %v210
    %v2384 = vunpack.c.h.b16 %v210
    %v2385 = vunpack.c.l.b16 %v211
    %v2386 = vunpack.c.l.b16 %v212
    %v2387 = vunpack.c.h.b16 %v212
    %v2388 = vunpack.c.l.b16 %v213
    %v2389 = vunpack.c.h.b16 %v213
    %v2390 = vunpack.c.l.b16 %v214
    %v2391 = vunpack.c.h.b16 %v214
    %v2392 = vunpack.c.l.b16 %v215
    %v2393 = vunpack.c.h.b16 %v215
    %v2394 = vunpack.c.l.b16 %v216
    %v2395 = vunpack.c.h.b16 %v216
    %v2396 = vunpack.c.l.b16 %v217
    %v2397 = vunpack.c.l.b16 %v218
    %v2398 = vunpack.c.h.b16 %v218
    %v2399 = vunpack.c.l.b16 %v219
    %v2400 = vunpack.c.h.b16 %v219
    %v2401 = vunpack.c.l.b16 %v220
    %v2402 = vunpack.c.h.b16 %v220
    %v2403 = vunpack.c.l.b16 %v221
    %v2404 = vunpack.c.h.b16 %v221
    %v2405 = vunpack.c.l.b16 %v222
    %v2406 = vunpack.c.h.b16 %v222
    %v2407 = vunpack.c.l.b16 %v223
    %v2408 = vunpack.c.l.b16 %v224
    %v2409 = vunpack.c.h.b16 %v224
    %v2410 = vunpack.c.l.b16 %v225
    %v2411 = vunpack.c.h.b16 %v225
    %v2412 = vunpack.c.l.b16 %v226
    %v2413 = vunpack.c.h.b16 %v226
    %v2414 = vunpack.c.l.b16 %v227
    %v2415 = vunpack.c.h.b16 %v227
    %v2416 = vunpack.c.l.b16 %v228
    %v2417 = vunpack.c.h.b16 %v228
    %v2418 = vunpack.c.l.b16 %v229
    %v2419 = vunpack.c.l.b16 %v230
    %v2420 = vunpack.c.h.b16 %v230
    %v2421 = vunpack.c.l.b16 %v231
    %v2422 = vunpack.c.h.b16 %v231
    %v2423 = vunpack.c.l.b16 %v232
    %v2424 = vunpack.c.h.b16 %v232
    %v2425 = vunpack.c.l.b16 %v233
    %v2426 = vunpack.c.h.b16 %v233
    %v2427 = vunpack.c.l.b16 %v234
    %v2428 = vunpack.c.h.b16 %v234
    %v2429 = vunpack.c.l.b16 %v235
    %v2430 = vunpack.c.l.b16 %v236
    %v2431 = vunpack.c.h.b16 %v236
    %v2432 = vunpack.c.l.b16 %v237
    %v2433 = vunpack.c.h.b16 %v237
    %v2434 = vunpack.c.l.b16 %v238
    %v2435 = vunpack.c.h.b16 %v238
    %v2436 = vunpack.c.l.b16 %v239
    %v2437 = vunpack.c.h.b16 %v239
    %v2438 = vunpack.c.l.b16 %v240
    %v2439 = vunpack.c.h.b16 %v240
    %v2440 = vunpack.c.l.b16 %v241
    %v2441 = vunpack.c.l.b16 %v242
    %v2442 = vunpack.c.h.b16 %v242
    %v2443 = vunpack.c.l.b16 %v243
    %v2444 = vunpack.c.h.b16 %v243
    %v2445 = vunpack.c.l.b16 %v244
    %v2446 = vunpack.c.h.b16 %v244
    %v2447 = vunpack.c.l.b16 %v245
    %v2448 = vunpack.c.h.b16 %v245
    %v2449 = vunpack.c.l.b16 %v246
    %v2450 = vunpack.c.h.b16 %v246
    %v2451 = vunpack.c.l.b16 %v247
    %v2452 = vunpack.c.l.b16 %v248
    %v2453 = vunpack.c.h.b16 %v248
    %v2454 = vunpack.c.l.b16 %v249
    %v2455 = vunpack.c.h.b16 %v249
    %v2456 = vunpack.c.l.b16 %v250
    %v2457 = vunpack.c.h.b16 %v250
    %v2458 = vunpack.c.l.b16 %v251
    %v2459 = vunpack.c.h.b16 %v251
    %v2460 = vunpack.c.l.b16 %v252
    %v2461 = vunpack.c.h.b16 %v252
    %v2462 = vunpack.c.l.b16 %v253
    %v2463 = vunpack.c.l.b16 %v254
    %v2464 = vunpack.c.h.b16 %v254
    %v2465 = vunpack.c.l.b16 %v255
    %v2466 = vunpack.c.h.b16 %v255
    %v2467 = vunpack.c.l.b16 %v256
    %v2468 = vunpack.c.h.b16 %v256
    %v2469 = vunpack.c.l.b16 %v257
    %v2470 = vunpack.c.h.b16 %v257
    %v2471 = vunpack.c.l.b16 %v258
    %v2472 = vunpack.c.h.b16 %v258
    %v2473 = vunpack.c.l.b16 %v259
    %v2474 = vunpack.c.l.b16 %v260
    %v2475 = vunpack.c.h.b16 %v260
    %v2476 = vunpack.c.l.b16 %v261
    %v2477 = vunpack.c.h.b16 %v261
    %v2478 = vunpack.c.l.b16 %v262
    %v2479 = vunpack.c.h.b16 %v262
    %v2480 = vunpack.c.l.b16 %v263
    %v2481 = vunpack.c.h.b16 %v263
    %v2482 = vunpack.c.l.b16 %v264
    %v2483 = vunpack.c.h.b16 %v264
    %v2484 = vunpack.c.l.b16 %v265
    %v2485 = vunpack.c.l.b16 %v266
    %v2486 = vunpack.c.h.b16 %v266
    %v2487 = vunpack.c.l.b16 %v267
    %v2488 = vunpack.c.h.b16 %v267
    %v2489 = vunpack.c.l.b16 %v268
    %v2490 = vunpack.c.h.b16 %v268
    %v2491 = vunpack.c.l.b16 %v269
    %v2492 = vunpack.c.h.b16 %v269
    %v2493 = vunpack.c.l.b16 %v270
    %v2494 = vunpack.c.h.b16 %v270
    %v2495 = vunpack.c.l.b16 %v271
    %v2496 = vunpack.c.l.b16 %v272
    %v2497 = vunpack.c.h.b16 %v272
    %v2498 = vunpack.c.l.b16 %v273
    %v2499 = vunpack.c.h.b16 %v273
    %v2500 = vunpack.c.l.b16 %v274
    %v2501 = vunpack.c.h.b16 %v274
    %v2502 = vunpack.c.l.b16 %v275
    %v2503 = vunpack.c.h.b16 %v275
    %v2504 = vunpack.c.l.b16 %v276
    %v2505 = vunpack.c.h.b16 %v276
    %v2506 = vunpack.c.l.b16 %v277
    %v2507 = vunpack.c.l.b16 %v278
    %v2508 = vunpack.c.h.b16 %v278
    %v2509 = vunpack.c.l.b16 %v279
    %v2510 = vunpack.c.h.b16 %v279
    %v2511 = vunpack.c.l.b16 %v280
    %v2512 = vunpack.c.h.b16 %v280
    %v2513 = vunpack.c.l.b16 %v281
    %v2514 = vunpack.c.h.b16 %v281
    %v2515 = vunpack.c.l.b16 %v282
    %v2516 = vunpack.c.h.b16 %v282
    %v2517 = vunpack.c.l.b16 %v283
    %v2518 = vunpack.c.l.b16 %v284
    %v2519 = vunpack.c.h.b16 %v284
    %v2520 = vunpack.c.l.b16 %v285
    %v2521 = vunpack.c.h.b16 %v285
    %v2522 = vunpack.c.l.b16 %v286
    %v2523 = vunpack.c.h.b16 %v286
    %v2524 = vunpack.c.l.b16 %v287
    %v2525 = vunpack.c.h.b16 %v287
    %v2526 = vunpack.c.l.b16 %v288
    %v2527 = vunpack.c.h.b16 %v288
    %v2528 = vunpack.c.l.b16 %v289
    %v2529 = vunpack.c.l.b16 %v290
    %v2530 = vunpack.c.h.b16 %v290
    %v2531 = vunpack.c.l.b16 %v291
    %v2532 = vunpack.c.h.b16 %v291
    %v2533 = vunpack.c.l.b16 %v292
    %v2534 = vunpack.c.h.b16 %v292
    %v2535 = vunpack.c.l.b16 %v293
    %v2536 = vunpack.c.h.b16 %v293
    %v2537 = vunpack.c.l.b16 %v294
    %v2538 = vunpack.c.h.b16 %v294
    %v2539 = vunpack.c.l.b16 %v295
    %v2540 = vunpack.c.l.b16 %v296
    %v2541 = vunpack.c.h.b16 %v296
    %v2542 = vunpack.c.l.b16 %v297
    %v2543 = vunpack.c.h.b16 %v297
    %v2544 = vunpack.c.l.b16 %v298
    %v2545 = vunpack.c.h.b16 %v298
    %v2546 = vunpack.c.l.b16 %v299
    %v2547 = vunpack.c.h.b16 %v299
    %v2548 = vunpack.c.l.b16 %v300
    %v2549 = vunpack.c.h.b16 %v300
    %v2550 = vunpack.c.l.b16 %v301
    %v2551 = vunpack.c.l.b16 %v302
    %v2552 = vunpack.c.h.b16 %v302
    %v2553 = vunpack.c.l.b16 %v303
    %v2554 = vunpack.c.h.b16 %v303
    %v2555 = vunpack.c.l.b16 %v304
    %v2556 = vunpack.c.h.b16 %v304
    %v2557 = vunpack.c.l.b16 %v305
    %v2558 = vunpack.c.h.b16 %v305
    %v2559 = vunpack.c.l.b16 %v306
    %v2560 = vunpack.c.h.b16 %v306
    %v2561 = vunpack.c.l.b16 %v307
    %v2562 = vunpack.c.l.b16 %v308
    %v2563 = vunpack.c.h.b16 %v308
    %v2564 = vunpack.c.l.b16 %v309
    %v2565 = vunpack.c.h.b16 %v309
    %v2566 = vunpack.c.l.b16 %v310
    %v2567 = vunpack.c.h.b16 %v310
    %v2568 = vunpack.c.l.b16 %v311
    %v2569 = vunpack.c.h.b16 %v311
    %v2570 = vunpack.c.l.b16 %v312
    %v2571 = vunpack.c.h.b16 %v312
    %v2572 = vunpack.c.l.b16 %v313
    %v2573 = vunpack.c.l.b16 %v314
    %v2574 = vunpack.c.h.b16 %v314
    %v2575 = vunpack.c.l.b16 %v315
    %v2576 = vunpack.c.h.b16 %v315
    %v2577 = vunpack.c.l.b16 %v316
    %v2578 = vunpack.c.h.b16 %v316
    %v2579 = vunpack.c.l.b16 %v317
    %v2580 = vunpack.c.h.b16 %v317
    %v2581 = vunpack.c.l.b16 %v318
    %v2582 = vunpack.c.h.b16 %v318
    %v2583 = vunpack.c.l.b16 %v319
    %v2584 = vunpack.c.l.b16 %v320
    %v2585 = vunpack.c.h.b16 %v320
    %v2586 = vunpack.c.l.b16 %v321
    %v2587 = vunpack.c.h.b16 %v321
    %v2588 = vunpack.c.l.b16 %v322
    %v2589 = vunpack.c.h.b16 %v322
    %v2590 = vunpack.c.l.b16 %v323
    %v2591 = vunpack.c.h.b16 %v323
    %v2592 = vunpack.c.l.b16 %v324
    %v2593 = vunpack.c.h.b16 %v324
    %v2594 = vunpack.c.l.b16 %v325
    %v2595 = vunpack.c.l.b16 %v326
    %v2596 = vunpack.c.h.b16 %v326
    %v2597 = vunpack.c.l.b16 %v327
    %v2598 = vunpack.c.h.b16 %v327
    %v2599 = vunpack.c.l.b16 %v328
    %v2600 = vunpack.c.h.b16 %v328
    %v2601 = vunpack.c.l.b16 %v329
    %v2602 = vunpack.c.h.b16 %v329
    %v2603 = vunpack.c.l.b16 %v330
    %v2604 = vunpack.c.h.b16 %v330
    %v2605 = vunpack.c.l.b16 %v331
    %v2606 = vunpack.c.l.b16 %v332
    %v2607 = vunpack.c.h.b16 %v332
    %v2608 = vunpack.c.l.b16 %v333
    %v2609 = vunpack.c.h.b16 %v333
    %v2610 = vunpack.c.l.b16 %v334
    %v2611 = vunpack.c.h.b16 %v334
    %v2612 = vunpack.c.l.b16 %v335
    %v2613 = vunpack.c.h.b16 %v335
    %v2614 = vunpack.c.l.b16 %v336
    %v2615 = vunpack.c.h.b16 %v336
    %v2616 = vunpack.c.l.b16 %v337
    %v2617 = vunpack.c.l.b16 %v338
    %v2618 = vunpack.c.h.b16 %v338
    %v2619 = vunpack.c.l.b16 %v339
    %v2620 = vunpack.c.h.b16 %v339
    %v2621 = vunpack.c.l.b16 %v340
    %v2622 = vunpack.c.h.b16 %v340
    %v2623 = vunpack.c.l.b16 %v341
    %v2624 = vunpack.c.h.b16 %v341
    %v2625 = vunpack.c.l.b16 %v342
    %v2626 = vunpack.c.h.b16 %v342
    %v2627 = vunpack.c.l.b16 %v343
    %v2628 = vunpack.c.l.b16 %v344
    %v2629 = vunpack.c.h.b16 %v344
    %v2630 = vunpack.c.l.b16 %v345
    %v2631 = vunpack.c.h.b16 %v345
    %v2632 = vunpack.c.l.b16 %v346
    %v2633 = vunpack.c.h.b16 %v346
    %v2634 = vunpack.c.l.b16 %v347
    %v2635 = vunpack.c.h.b16 %v347
    %v2636 = vunpack.c.l.b16 %v348
    %v2637 = vunpack.c.h.b16 %v348
    %v2638 = vunpack.c.l.b16 %v349
    %v2639 = vunpack.c.l.b16 %v350
    %v2640 = vunpack.c.h.b16 %v350
    %v2641 = vunpack.c.l.b16 %v351
    %v2642 = vunpack.c.h.b16 %v351
    %v2643 = vunpack.c.l.b16 %v352
    %v2644 = vunpack.c.h.b16 %v352
    %v2645 = vunpack.c.l.b16 %v353
    %v2646 = vunpack.c.h.b16 %v353
    %v2647 = vunpack.c.l.b16 %v354
    %v2648 = vunpack.c.h.b16 %v354
    %v2649 = vunpack.c.l.b16 %v355
    %v2650 = vunpack.c.l.b16 %v356
    %v2651 = vunpack.c.h.b16 %v356
    %v2652 = vunpack.c.l.b16 %v357
    %v2653 = vunpack.c.h.b16 %v357
    %v2654 = vunpack.c.l.b16 %v358
    %v2655 = vunpack.c.h.b16 %v358
    %v2656 = vunpack.c.l.b16 %v359
    %v2657 = vunpack.c.h.b16 %v359
    %v2658 = vunpack.c.l.b16 %v360
    %v2659 = vunpack.c.h.b16 %v360
    %v2660 = vunpack.c.l.b16 %v361
    %v2661 = vunpack.c.l.b16 %v362
    %v2662 = vunpack.c.h.b16 %v362
    %v2663 = vunpack.c.l.b16 %v363
    %v2664 = vunpack.c.h.b16 %v363
    %v2665 = vunpack.c.l.b16 %v364
    %v2666 = vunpack.c.h.b16 %v364
    %v2667 = vunpack.c.l.b16 %v365
    %v2668 = vunpack.c.h.b16 %v365
    %v2669 = vunpack.c.l.b16 %v366
    %v2670 = vunpack.c.h.b16 %v366
    %v2671 = vunpack.c.l.b16 %v367
    %v2672 = vunpack.c.l.b16 %v368
    %v2673 = vunpack.c.h.b16 %v368
    %v2674 = vunpack.c.l.b16 %v369
    %v2675 = vunpack.c.h.b16 %v369
    %v2676 = vunpack.c.l.b16 %v370
    %v2677 = vunpack.c.h.b16 %v370
    %v2678 = vunpack.c.l.b16 %v371
    %v2679 = vunpack.c.h.b16 %v371
    %v2680 = vunpack.c.l.b16 %v372
    %v2681 = vunpack.c.h.b16 %v372
    %v2682 = vunpack.c.l.b16 %v373
    %v2683 = vunpack.c.l.b16 %v374
    %v2684 = vunpack.c.h.b16 %v374
    %v2685 = vunpack.c.l.b16 %v375
    %v2686 = vunpack.c.h.b16 %v375
    %v2687 = vunpack.c.l.b16 %v376
    %v2688 = vunpack.c.h.b16 %v376
    %v2689 = vunpack.c.l.b16 %v377
    %v2690 = vunpack.c.h.b16 %v377
    %v2691 = vunpack.c.l.b16 %v378
    %v2692 = vunpack.c.h.b16 %v378
    %v2693 = vunpack.c.l.b16 %v379
    %v2694 = vunpack.c.l.b16 %v380
    %v2695 = vunpack.c.h.b16 %v380
    %v2696 = vunpack.c.l.b16 %v381
    %v2697 = vunpack.c.h.b16 %v381
    %v2698 = vunpack.c.l.b16 %v382
    %v2699 = vunpack.c.h.b16 %v382
    %v2700 = vunpack.c.l.b16 %v383
    %v2701 = vunpack.c.h.b16 %v383
    %v2702 = vunpack.c.l.b16 %v384
    %v2703 = vunpack.c.h.b16 %v384
    %v2704 = vunpack.c.l.b16 %v385
    %v2705 = vunpack.c.l.b16 %v386
    %v2706 = vunpack.c.h.b16 %v386
    %v2707 = vunpack.c.l.b16 %v387
    %v2708 = vunpack.c.h.b16 %v387
    %v2709 = vunpack.c.l.b16 %v388
    %v2710 = vunpack.c.h.b16 %v388
    %v2711 = vunpack.c.l.b16 %v389
    %v2712 = vunpack.c.h.b16 %v389
    %v2713 = vunpack.c.l.b16 %v390
    %v2714 = vunpack.c.h.b16 %v390
    %v2715 = vunpack.c.l.b16 %v391
    %v2716 = vunpack.c.l.b16 %v392
    %v2717 = vunpack.c.h.b16 %v392
    %v2718 = vunpack.c.l.b16 %v393
    %v2719 = vunpack.c.h.b16 %v393
    %v2720 = vunpack.c.l.b16 %v394
    %v2721 = vunpack.c.h.b16 %v394
    %v2722 = vunpack.c.l.b16 %v395
    %v2723 = vunpack.c.h.b16 %v395
    %v2724 = vunpack.c.l.b16 %v396
    %v2725 = vunpack.c.h.b16 %v396
    %v2726 = vunpack.c.l.b16 %v397
    %v2727 = vunpack.c.l.b16 %v398
    %v2728 = vunpack.c.h.b16 %v398
    %v2729 = vunpack.c.l.b16 %v399
    %v2730 = vunpack.c.h.b16 %v399
    %v2731 = vunpack.c.l.b16 %v400
    %v2732 = vunpack.c.h.b16 %v400
    %v2733 = vunpack.c.l.b16 %v401
    %v2734 = vunpack.c.h.b16 %v401
    %v2735 = vunpack.c.l.b16 %v402
    %v2736 = vunpack.c.h.b16 %v402
    %v2737 = vunpack.c.l.b16 %v403
    %v2738 = vunpack.c.l.b16 %v404
    %v2739 = vunpack.c.h.b16 %v404
    %v2740 = vunpack.c.l.b16 %v405
    %v2741 = vunpack.c.h.b16 %v405
    %v2742 = vunpack.c.l.b16 %v406
    %v2743 = vunpack.c.h.b16 %v406
    %v2744 = vunpack.c.l.b16 %v407
    %v2745 = vunpack.c.h.b16 %v407
    %v2746 = vunpack.c.l.b16 %v408
    %v2747 = vunpack.c.h.b16 %v408
    %v2748 = vunpack.c.l.b16 %v409
    %v2749 = vunpack.c.l.b16 %v410
    %v2750 = vunpack.c.h.b16 %v410
    %v2751 = vunpack.c.l.b16 %v411
    %v2752 = vunpack.c.h.b16 %v411
    %v2753 = vunpack.c.l.b16 %v412
    %v2754 = vunpack.c.h.b16 %v412
    %v2755 = vunpack.c.l.b16 %v413
    %v2756 = vunpack.c.h.b16 %v413
    %v2757 = vunpack.c.l.b16 %v414
    %v2758 = vunpack.c.h.b16 %v414
    %v2759 = vunpack.c.l.b16 %v415
    %v2760 = vunpack.c.l.b16 %v416
    %v2761 = vunpack.c.h.b16 %v416
    %v2762 = vunpack.c.l.b16 %v417
    %v2763 = vunpack.c.h.b16 %v417
    %v2764 = vunpack.c.l.b16 %v418
    %v2765 = vunpack.c.h.b16 %v418
    %v2766 = vunpack.c.l.b16 %v419
    %v2767 = vunpack.c.h.b16 %v419
    %v2768 = vunpack.c.l.b16 %v420
    %v2769 = vunpack.c.h.b16 %v420
    %v2770 = vunpack.c.l.b16 %v421
    %v2771 = vunpack.c.l.b16 %v422
    %v2772 = vunpack.c.h.b16 %v422
    %v2773 = vunpack.c.l.b16 %v423
    %v2774 = vunpack.c.h.b16 %v423
    %v2775 = vunpack.c.l.b16 %v424
    %v2776 = vunpack.c.h.b16 %v424
    %v2777 = vunpack.c.l.b16 %v425
    %v2778 = vunpack.c.h.b16 %v425
    %v2779 = vunpack.c.l.b16 %v426
    %v2780 = vunpack.c.h.b16 %v426
    %v2781 = vunpack.c.l.b16 %v427
    %v2782 = vunpack.c.l.b16 %v428
    %v2783 = vunpack.c.h.b16 %v428
    %v2784 = vunpack.c.l.b16 %v429
    %v2785 = vunpack.c.h.b16 %v429
    %v2786 = vunpack.c.l.b16 %v430
    %v2787 = vunpack.c.h.b16 %v430
    %v2788 = vunpack.c.l.b16 %v431
    %v2789 = vunpack.c.h.b16 %v431
    %v2790 = vunpack.c.l.b16 %v432
    %v2791 = vunpack.c.h.b16 %v432
    %v2792 = vunpack.c.l.b16 %v433
    %v2793 = vunpack.c.l.b16 %v434
    %v2794 = vunpack.c.h.b16 %v434
    %v2795 = vunpack.c.l.b16 %v435
    %v2796 = vunpack.c.h.b16 %v435
    %v2797 = vunpack.c.l.b16 %v436
    %v2798 = vunpack.c.h.b16 %v436
    %v2799 = vunpack.c.l.b16 %v437
    %v2800 = vunpack.c.h.b16 %v437
    %v2801 = vunpack.c.l.b16 %v438
    %v2802 = vunpack.c.h.b16 %v438
    %v2803 = vunpack.c.l.b16 %v439
    %v2804 = vunpack.c.l.b16 %v440
    %v2805 = vunpack.c.h.b16 %v440
    %v2806 = vunpack.c.l.b16 %v441
    %v2807 = vunpack.c.h.b16 %v441
    %v2808 = vunpack.c.l.b16 %v442
    %v2809 = vunpack.c.h.b16 %v442
    %v2810 = vunpack.c.l.b16 %v443
    %v2811 = vunpack.c.h.b16 %v443
    %v2812 = vunpack.c.l.b16 %v444
    %v2813 = vunpack.c.h.b16 %v444
    %v2814 = vunpack.c.l.b16 %v445
    %v2815 = vunpack.c.l.b16 %v446
    %v2816 = vunpack.c.h.b16 %v446
    %v2817 = vunpack.c.l.b16 %v447
    %v2818 = vunpack.c.h.b16 %v447
    %v2819 = vunpack.c.l.b16 %v448
    %v2820 = vunpack.c.h.b16 %v448
    %v2821 = vunpack.c.l.b16 %v449
    %v2822 = vunpack.c.h.b16 %v449
    %v2823 = vunpack.c.l.b16 %v450
    %v2824 = vunpack.c.h.b16 %v450
    %v2825 = vunpack.c.l.b16 %v451
    %v2826 = vunpack.c.l.b16 %v452
    %v2827 = vunpack.c.h.b16 %v452
    %v2828 = vunpack.c.l.b16 %v453
    %v2829 = vunpack.c.h.b16 %v453
    %v2830 = vunpack.c.l.b16 %v454
    %v2831 = vunpack.c.h.b16 %v454
    %v2832 = vunpack.c.l.b16 %v455
    %v2833 = vunpack.c.h.b16 %v455
    %v2834 = vunpack.c.l.b16 %v456
    %v2835 = vunpack.c.h.b16 %v456
    %v2836 = vunpack.c.l.b16 %v457
    %v2837 = vunpack.c.l.b16 %v458
    %v2838 = vunpack.c.h.b16 %v458
    %v2839 = vunpack.c.l.b16 %v459
    %v2840 = vunpack.c.h.b16 %v459
    %v2841 = vunpack.c.l.b16 %v460
    %v2842 = vunpack.c.h.b16 %v460
    %v2843 = vunpack.c.l.b16 %v461
    %v2844 = vunpack.c.h.b16 %v461
    %v2845 = vunpack.c.l.b16 %v462
    %v2846 = vunpack.c.h.b16 %v462
    %v2847 = vunpack.c.l.b16 %v463
    %v2848 = vunpack.c.l.b16 %v464
    %v2849 = vunpack.c.h.b16 %v464
    %v2850 = vunpack.c.l.b16 %v465
    %v2851 = vunpack.c.h.b16 %v465
    %v2852 = vunpack.c.l.b16 %v466
    %v2853 = vunpack.c.h.b16 %v466
    %v2854 = vunpack.c.l.b16 %v467
    %v2855 = vunpack.c.h.b16 %v467
    %v2856 = vunpack.c.l.b16 %v468
    %v2857 = vunpack.c.h.b16 %v468
    %v2858 = vunpack.c.l.b16 %v469
    %v2859 = vunpack.c.l.b16 %v470
    %v2860 = vunpack.c.h.b16 %v470
    %v2861 = vunpack.c.l.b16 %v471
    %v2862 = vunpack.c.h.b16 %v471
    %v2863 = vunpack.c.l.b16 %v472
    %v2864 = vunpack.c.h.b16 %v472
    %v2865 = vunpack.c.l.b16 %v473
    %v2866 = vunpack.c.h.b16 %v473
    %v2867 = vunpack.c.l.b16 %v474
    %v2868 = vunpack.c.h.b16 %v474
    %v2869 = vunpack.c.l.b16 %v475
    %v2870 = vunpack.c.l.b16 %v476
    %v2871 = vunpack.c.h.b16 %v476
    %v2872 = vunpack.c.l.b16 %v477
    %v2873 = vunpack.c.h.b16 %v477
    %v2874 = vunpack.c.l.b16 %v478
    %v2875 = vunpack.c.h.b16 %v478
    %v2876 = vunpack.c.l.b16 %v479
    %v2877 = vunpack.c.h.b16 %v479
    %v2878 = vunpack.c.l.b16 %v480
    %v2879 = vunpack.c.h.b16 %v480
    %v2880 = vunpack.c.l.b16 %v481
    %v2881 = vunpack.c.l.b16 %v482
    %v2882 = vunpack.c.h.b16 %v482
    %v2883 = vunpack.c.l.b16 %v483
    %v2884 = vunpack.c.h.b16 %v483
    %v2885 = vunpack.c.l.b16 %v484
    %v2886 = vunpack.c.h.b16 %v484
    %v2887 = vunpack.c.l.b16 %v485
    %v2888 = vunpack.c.h.b16 %v485
    %v2889 = vunpack.c.l.b16 %v486
    %v2890 = vunpack.c.h.b16 %v486
    %v2891 = vunpack.c.l.b16 %v487
    %v2892 = vunpack.c.l.b16 %v488
    %v2893 = vunpack.c.h.b16 %v488
    %v2894 = vunpack.c.l.b16 %v489
    %v2895 = vunpack.c.h.b16 %v489
    %v2896 = vunpack.c.l.b16 %v490
    %v2897 = vunpack.c.h.b16 %v490
    %v2898 = vunpack.c.l.b16 %v491
    %v2899 = vunpack.c.h.b16 %v491
    %v2900 = vunpack.c.l.b16 %v492
    %v2901 = vunpack.c.h.b16 %v492
    %v2902 = vunpack.c.l.b16 %v493
    %v2903 = vunpack.c.l.b16 %v494
    %v2904 = vunpack.c.h.b16 %v494
    %v2905 = vunpack.c.l.b16 %v495
    %v2906 = vunpack.c.h.b16 %v495
    %v2907 = vunpack.c.l.b16 %v496
    %v2908 = vunpack.c.h.b16 %v496
    %v2909 = vunpack.c.l.b16 %v497
    %v2910 = vunpack.c.h.b16 %v497
    %v2911 = vunpack.c.l.b16 %v498
    %v2912 = vunpack.c.h.b16 %v498
    %v2913 = vunpack.c.l.b16 %v499
    %v2914 = vunpack.c.l.b16 %v500
    %v2915 = vunpack.c.h.b16 %v500
    %v2916 = vunpack.c.l.b16 %v501
    %v2917 = vunpack.c.h.b16 %v501
    %v2918 = vunpack.c.l.b16 %v502
    %v2919 = vunpack.c.h.b16 %v502
    %v2920 = vunpack.c.l.b16 %v503
    %v2921 = vunpack.c.h.b16 %v503
    %v2922 = vunpack.c.l.b16 %v504
    %v2923 = vunpack.c.h.b16 %v504
    %v2924 = vunpack.c.l.b16 %v505
    %v2925 = vunpack.c.l.b16 %v506
    %v2926 = vunpack.c.h.b16 %v506
    %v2927 = vunpack.c.l.b16 %v507
    %v2928 = vunpack.c.h.b16 %v507
    %v2929 = vunpack.c.l.b16 %v508
    %v2930 = vunpack.c.h.b16 %v508
    %v2931 = vunpack.c.l.b16 %v509
    %v2932 = vunpack.c.h.b16 %v509
    %v2933 = vunpack.c.l.b16 %v510
    %v2934 = vunpack.c.h.b16 %v510
    %v2935 = vunpack.c.l.b16 %v511
    %v2936 = vunpack.c.l.b16 %v512
    %v2937 = vunpack.c.h.b16 %v512
    %v2938 = vunpack.c.l.b16 %v513
    %v2939 = vunpack.c.h.b16 %v513
    %v2940 = vunpack.c.l.b16 %v514
    %v2941 = vunpack.c.h.b16 %v514
    %v2942 = vunpack.c.l.b16 %v515
    %v2943 = vunpack.c.h.b16 %v515
    %v2944 = vunpack.c.l.b16 %v516
    %v2945 = vunpack.c.h.b16 %v516
    %v2946 = vunpack.c.l.b16 %v517
    %v2947 = vunpack.c.l.b16 %v518
    %v2948 = vunpack.c.h.b16 %v518
    %v2949 = vunpack.c.l.b16 %v519
    %v2950 = vunpack.c.h.b16 %v519
    %v2951 = vunpack.c.l.b16 %v520
    %v2952 = vunpack.c.h.b16 %v520
    %v2953 = vunpack.c.l.b16 %v521
    %v2954 = vunpack.c.h.b16 %v521
    %v2955 = vunpack.c.l.b16 %v522
    %v2956 = vunpack.c.h.b16 %v522
    %v2957 = vunpack.c.l.b16 %v523
    %v2958 = vunpack.c.l.b16 %v524
    %v2959 = vunpack.c.h.b16 %v524
    %v2960 = vunpack.c.l.b16 %v525
    %v2961 = vunpack.c.h.b16 %v525
    %v2962 = vunpack.c.l.b16 %v526
    %v2963 = vunpack.c.h.b16 %v526
    %v2964 = vunpack.c.l.b16 %v527
    %v2965 = vunpack.c.h.b16 %v527
    %v2966 = vunpack.c.l.b16 %v528
    %v2967 = vunpack.c.h.b16 %v528
    %v2968 = vunpack.c.l.b16 %v529
    %v2969 = vunpack.c.l.b16 %v530
    %v2970 = vunpack.c.h.b16 %v530
    %v2971 = vunpack.c.l.b16 %v531
    %v2972 = vunpack.c.h.b16 %v531
    %v2973 = vunpack.c.l.b16 %v532
    %v2974 = vunpack.c.h.b16 %v532
    %v2975 = vunpack.c.l.b16 %v533
    %v2976 = vunpack.c.h.b16 %v533
    %v2977 = vunpack.c.l.b16 %v534
    %v2978 = vunpack.c.h.b16 %v534
    %v2979 = vunpack.c.l.b16 %v535
    %v2980 = vunpack.c.l.b16 %v536
    %v2981 = vunpack.c.h.b16 %v536
    %v2982 = vunpack.c.l.b16 %v537
    %v2983 = vunpack.c.h.b16 %v537
    %v2984 = vunpack.c.l.b16 %v538
    %v2985 = vunpack.c.h.b16 %v538
    %v2986 = vunpack.c.l.b16 %v539
    %v2987 = vunpack.c.h.b16 %v539
    %v2988 = vunpack.c.l.b16 %v540
    %v2989 = vunpack.c.h.b16 %v540
    %v2990 = vunpack.c.l.b16 %v541
    %v2991 = vunpack.c.l.b16 %v542
    %v2992 = vunpack.c.h.b16 %v542
    %v2993 = vunpack.c.l.b16 %v543
    %v2994 = vunpack.c.h.b16 %v543
    %v2995 = vunpack.c.l.b16 %v544
    %v2996 = vunpack.c.h.b16 %v544
    %v2997 = vunpack.c.l.b16 %v545
    %v2998 = vunpack.c.h.b16 %v545
    %v2999 = vunpack.c.l.b16 %v546
    %v3000 = vunpack.c.h.b16 %v546
    %v3001 = vunpack.c.l.b16 %v547
    %v3002 = vunpack.c.l.b16 %v548
    %v3003 = vunpack.c.h.b16 %v548
    %v3004 = vunpack.c.l.b16 %v549
    %v3005 = vunpack.c.h.b16 %v549
    %v3006 = vunpack.c.l.b16 %v550
    %v3007 = vunpack.c.h.b16 %v550
    %v3008 = vunpack.c.l.b16 %v551
    %v3009 = vunpack.c.h.b16 %v551
    %v3010 = vunpack.c.l.b16 %v552
    %v3011 = vunpack.c.h.b16 %v552
    %v3012 = vunpack.c.l.b16 %v553
    %v3013 = vunpack.c.l.b16 %v554
    %v3014 = vunpack.c.h.b16 %v554
    %v3015 = vunpack.c.l.b16 %v555
    %v3016 = vunpack.c.h.b16 %v555
    %v3017 = vunpack.c.l.b16 %v556
    %v3018 = vunpack.c.h.b16 %v556
    %v3019 = vunpack.c.l.b16 %v557
    %v3020 = vunpack.c.h.b16 %v557
    %v3021 = vunpack.c.l.b16 %v558
    %v3022 = vunpack.c.h.b16 %v558
    %v3023 = vunpack.c.l.b16 %v559
    %v3024 = vunpack.c.l.b16 %v560
    %v3025 = vunpack.c.h.b16 %v560
    %v3026 = vunpack.c.l.b16 %v561
    %v3027 = vunpack.c.h.b16 %v561
    %v3028 = vunpack.c.l.b16 %v562
    %v3029 = vunpack.c.h.b16 %v562
    %v3030 = vunpack.c.l.b16 %v563
    %v3031 = vunpack.c.h.b16 %v563
    %v3032 = vunpack.c.l.b16 %v564
    %v3033 = vunpack.c.h.b16 %v564
    %v3034 = vunpack.c.l.b16 %v565
    %v3035 = vunpack.c.l.b16 %v566
    %v3036 = vunpack.c.h.b16 %v566
    %v3037 = vunpack.c.l.b16 %v567
    %v3038 = vunpack.c.h.b16 %v567
    %v3039 = vunpack.c.l.b16 %v568
    %v3040 = vunpack.c.h.b16 %v568
    %v3041 = vunpack.c.l.b16 %v569
    %v3042 = vunpack.c.h.b16 %v569
    %v3043 = vunpack.c.l.b16 %v570
    %v3044 = vunpack.c.h.b16 %v570
    %v3045 = vunpack.c.l.b16 %v571
    %v3046 = vunpack.c.l.b16 %v572
    %v3047 = vunpack.c.h.b16 %v572
    %v3048 = vunpack.c.l.b16 %v573
    %v3049 = vunpack.c.h.b16 %v573
    %v3050 = vunpack.c.l.b16 %v574
    %v3051 = vunpack.c.h.b16 %v574
    %v3052 = vunpack.c.l.b16 %v575
    %v3053 = vunpack.c.h.b16 %v575
    %v3054 = vunpack.c.l.b16 %v576
    %v3055 = vunpack.c.h.b16 %v576
    %v3056 = vunpack.c.l.b16 %v577
    %v3057 = vunpack.c.l.b16 %v578
    %v3058 = vunpack.c.h.b16 %v578
    %v3059 = vunpack.c.l.b16 %v579
    %v3060 = vunpack.c.h.b16 %v579
    %v3061 = vunpack.c.l.b16 %v580
    %v3062 = vunpack.c.h.b16 %v580
    %v3063 = vunpack.c.l.b16 %v581
    %v3064 = vunpack.c.h.b16 %v581
    %v3065 = vunpack.c.l.b16 %v582
    %v3066 = vunpack.c.h.b16 %v582
    %v3067 = vunpack.c.l.b16 %v583
    %v3068 = vunpack.c.l.b16 %v584
    %v3069 = vunpack.c.h.b16 %v584
    %v3070 = vunpack.c.l.b16 %v585
    %v3071 = vunpack.c.h.b16 %v585
    %v3072 = vunpack.c.l.b16 %v586
    %v3073 = vunpack.c.h.b16 %v586
    %v3074 = vunpack.c.l.b16 %v587
    %v3075 = vunpack.c.h.b16 %v587
    %v3076 = vunpack.c.l.b16 %v588
    %v3077 = vunpack.c.h.b16 %v588
    %v3078 = vunpack.c.l.b16 %v589
    %v3079 = vunpack.c.l.b16 %v590
    %v3080 = vunpack.c.h.b16 %v590
    %v3081 = vunpack.c.l.b16 %v591
    %v3082 = vunpack.c.h.b16 %v591
    %v3083 = vunpack.c.l.b16 %v592
    %v3084 = vunpack.c.h.b16 %v592
    %v3085 = vunpack.c.l.b16 %v593
    %v3086 = vunpack.c.h.b16 %v593
    %v3087 = vunpack.c.l.b16 %v594
    %v3088 = vunpack.c.h.b16 %v594
    %v3089 = vunpack.c.l.b16 %v595
    %v3090 = vunpack.c.l.b16 %v596
    %v3091 = vunpack.c.h.b16 %v596
    %v3092 = vunpack.c.l.b16 %v597
    %v3093 = vunpack.c.h.b16 %v597
    %v3094 = vunpack.c.l.b16 %v598
    %v3095 = vunpack.c.h.b16 %v598
    %v3096 = vunpack.c.l.b16 %v599
    %v3097 = vunpack.c.h.b16 %v599
    %v3098 = vunpack.c.l.b16 %v600
    %v3099 = vunpack.c.h.b16 %v600
    %v3100 = vunpack.c.l.b16 %v601
    %v3101 = vunpack.c.l.b16 %v602
    %v3102 = vunpack.c.h.b16 %v602
    %v3103 = vunpack.c.l.b16 %v603
    %v3104 = vunpack.c.h.b16 %v603
    %v3105 = vunpack.c.l.b16 %v604
    %v3106 = vunpack.c.h.b16 %v604
    %v3107 = vunpack.c.l.b16 %v605
    %v3108 = vunpack.c.h.b16 %v605
    %v3109 = vunpack.c.l.b16 %v606
    %v3110 = vunpack.c.h.b16 %v606
    %v3111 = vunpack.c.l.b16 %v607
    %v3112 = vunpack.c.l.b16 %v608
    %v3113 = vunpack.c.h.b16 %v608
    %v3114 = vunpack.c.l.b16 %v609
    %v3115 = vunpack.c.h.b16 %v609
    %v3116 = vunpack.c.l.b16 %v610
    %v3117 = vunpack.c.h.b16 %v610
    %v3118 = vunpack.c.l.b16 %v611
    %v3119 = vunpack.c.h.b16 %v611
    %v3120 = vunpack.c.l.b16 %v612
    %v3121 = vunpack.c.h.b16 %v612
    %v3122 = vunpack.c.l.b16 %v613
    %v3123 = vunpack.c.l.b16 %v614
    %v3124 = vunpack.c.h.b16 %v614
    %v3125 = vunpack.c.l.b16 %v615
    %v3126 = vunpack.c.h.b16 %v615
    %v3127 = vunpack.c.l.b16 %v616
    %v3128 = vunpack.c.h.b16 %v616
    %v3129 = vunpack.c.l.b16 %v617
    %v3130 = vunpack.c.h.b16 %v617
    %v3131 = vunpack.c.l.b16 %v618
    %v3132 = vunpack.c.h.b16 %v618
    %v3133 = vunpack.c.l.b16 %v619
    %v3134 = vunpack.c.l.b16 %v620
    %v3135 = vunpack.c.h.b16 %v620
    %v3136 = vunpack.c.l.b16 %v621
    %v3137 = vunpack.c.h.b16 %v621
    %v3138 = vunpack.c.l.b16 %v622
    %v3139 = vunpack.c.h.b16 %v622
    %v3140 = vunpack.c.l.b16 %v623
    %v3141 = vunpack.c.h.b16 %v623
    %v3142 = vunpack.c.l.b16 %v624
    %v3143 = vunpack.c.h.b16 %v624
    %v3144 = vunpack.c.l.b16 %v625
    %v3145 = vunpack.c.l.b16 %v626
    %v3146 = vunpack.c.h.b16 %v626
    %v3147 = vunpack.c.l.b16 %v627
    %v3148 = vunpack.c.h.b16 %v627
    %v3149 = vunpack.c.l.b16 %v628
    %v3150 = vunpack.c.h.b16 %v628
    %v3151 = vunpack.c.l.b16 %v629
    %v3152 = vunpack.c.h.b16 %v629
    %v3153 = vunpack.c.l.b16 %v630
    %v3154 = vunpack.c.h.b16 %v630
    %v3155 = vunpack.c.l.b16 %v631
    %v3156 = vunpack.c.l.b16 %v632
    %v3157 = vunpack.c.h.b16 %v632
    %v3158 = vunpack.c.l.b16 %v633
    %v3159 = vunpack.c.h.b16 %v633
    %v3160 = vunpack.c.l.b16 %v634
    %v3161 = vunpack.c.h.b16 %v634
    %v3162 = vunpack.c.l.b16 %v635
    %v3163 = vunpack.c.h.b16 %v635
    %v3164 = vunpack.c.l.b16 %v636
    %v3165 = vunpack.c.h.b16 %v636
    %v3166 = vunpack.c.l.b16 %v637
    %v3167 = vunpack.c.l.b16 %v638
    %v3168 = vunpack.c.h.b16 %v638
    %v3169 = vunpack.c.l.b16 %v639
    %v3170 = vunpack.c.h.b16 %v639
    %v3171 = vunpack.c.l.b16 %v640
    %v3172 = vunpack.c.h.b16 %v640
    %v3173 = vunpack.c.l.b16 %v641
    %v3174 = vunpack.c.h.b16 %v641
    %v3175 = vunpack.c.l.b16 %v642
    %v3176 = vunpack.c.h.b16 %v642
    %v3177 = vunpack.c.l.b16 %v643
    %v3178 = vunpack.c.l.b16 %v644
    %v3179 = vunpack.c.h.b16 %v644
    %v3180 = vunpack.c.l.b16 %v645
    %v3181 = vunpack.c.h.b16 %v645
    %v3182 = vunpack.c.l.b16 %v646
    %v3183 = vunpack.c.h.b16 %v646
    %v3184 = vunpack.c.l.b16 %v647
    %v3185 = vunpack.c.h.b16 %v647
    %v3186 = vunpack.c.l.b16 %v648
    %v3187 = vunpack.c.h.b16 %v648
    %v3188 = vunpack.c.l.b16 %v649
    %v3189 = vunpack.c.l.b16 %v650
    %v3190 = vunpack.c.h.b16 %v650
    %v3191 = vunpack.c.l.b16 %v651
    %v3192 = vunpack.c.h.b16 %v651
    %v3193 = vunpack.c.l.b16 %v652
    %v3194 = vunpack.c.h.b16 %v652
    %v3195 = vunpack.c.l.b16 %v653
    %v3196 = vunpack.c.h.b16 %v653
    %v3197 = vunpack.c.l.b16 %v654
    %v3198 = vunpack.c.h.b16 %v654
    %v3199 = vunpack.c.l.b16 %v655
    %v3200 = vunpack.c.l.b16 %v656
    %v3201 = vunpack.c.h.b16 %v656
    %v3202 = vunpack.c.l.b16 %v657
    %v3203 = vunpack.c.h.b16 %v657
    %v3204 = vunpack.c.l.b16 %v658
    %v3205 = vunpack.c.h.b16 %v658
    %v3206 = vunpack.c.l.b16 %v659
    %v3207 = vunpack.c.h.b16 %v659
    %v3208 = vunpack.c.l.b16 %v660
    %v3209 = vunpack.c.h.b16 %v660
    %v3210 = vunpack.c.l.b16 %v661
    %v3211 = vunpack.c.l.b16 %v662
    %v3212 = vunpack.c.h.b16 %v662
    %v3213 = vunpack.c.l.b16 %v663
    %v3214 = vunpack.c.h.b16 %v663
    %v3215 = vunpack.c.l.b16 %v664
    %v3216 = vunpack.c.h.b16 %v664
    %v3217 = vunpack.c.l.b16 %v665
    %v3218 = vunpack.c.h.b16 %v665
    %v3219 = vunpack.c.l.b16 %v666
    %v3220 = vunpack.c.h.b16 %v666
    %v3221 = vunpack.c.l.b16 %v667
    %v3222 = vunpack.c.l.b16 %v668
    %v3223 = vunpack.c.h.b16 %v668
    %v3224 = vunpack.c.l.b16 %v669
    %v3225 = vunpack.c.h.b16 %v669
    %v3226 = vunpack.c.l.b16 %v670
    %v3227 = vunpack.c.h.b16 %v670
    %v3228 = vunpack.c.l.b16 %v671
    %v3229 = vunpack.c.h.b16 %v671
    %v3230 = vunpack.c.l.b16 %v672
    %v3231 = vunpack.c.h.b16 %v672
    %v3232 = vunpack.c.l.b16 %v673
    %v3233 = vunpack.c.l.b16 %v674
    %v3234 = vunpack.c.h.b16 %v674
    %v3235 = vunpack.c.l.b16 %v675
    %v3236 = vunpack.c.h.b16 %v675
    %v3237 = vunpack.c.l.b16 %v676
    %v3238 = vunpack.c.h.b16 %v676
    %v3239 = vunpack.c.l.b16 %v677
    %v3240 = vunpack.c.h.b16 %v677
    %v3241 = vunpack.c.l.b16 %v678
    %v3242 = vunpack.c.h.b16 %v678
    %v3243 = vunpack.c.l.b16 %v679
    %v3244 = vunpack.c.l.b16 %v680
    %v3245 = vunpack.c.h.b16 %v680
    %v3246 = vunpack.c.l.b16 %v681
    %v3247 = vunpack.c.h.b16 %v681
    %v3248 = vunpack.c.l.b16 %v682
    %v3249 = vunpack.c.h.b16 %v682
    %v3250 = vunpack.c.l.b16 %v683
    %v3251 = vunpack.c.h.b16 %v683
    %v3252 = vunpack.c.l.b16 %v684
    %v3253 = vunpack.c.h.b16 %v684
    %v3254 = vunpack.c.l.b16 %v685
    %v3255 = vunpack.c.l.b16 %v686
    %v3256 = vunpack.c.h.b16 %v686
    %v3257 = vunpack.c.l.b16 %v687
    %v3258 = vunpack.c.h.b16 %v687
    %v3259 = vunpack.c.l.b16 %v688
    %v3260 = vunpack.c.h.b16 %v688
    %v3261 = vunpack.c.l.b16 %v689
    %v3262 = vunpack.c.h.b16 %v689
    %v3263 = vunpack.c.l.b16 %v690
    %v3264 = vunpack.c.h.b16 %v690
    %v3265 = vunpack.c.l.b16 %v691
    %v3266 = vunpack.c.l.b16 %v692
    %v3267 = vunpack.c.h.b16 %v692
    %v3268 = vunpack.c.l.b16 %v693
    %v3269 = vunpack.c.h.b16 %v693
    %v3270 = vunpack.c.l.b16 %v694
    %v3271 = vunpack.c.h.b16 %v694
    %v3272 = vunpack.c.l.b16 %v695
    %v3273 = vunpack.c.h.b16 %v695
    %v3274 = vunpack.c.l.b16 %v696
    %v3275 = vunpack.c.h.b16 %v696
    %v3276 = vunpack.c.l.b16 %v697
    %v3277 = vunpack.c.l.b16 %v698
    %v3278 = vunpack.c.h.b16 %v698
    %v3279 = vunpack.c.l.b16 %v699
    %v3280 = vunpack.c.h.b16 %v699
    %v3281 = vunpack.c.l.b16 %v700
    %v3282 = vunpack.c.h.b16 %v700
    %v3283 = vunpack.c.l.b16 %v701
    %v3284 = vunpack.c.h.b16 %v701
    %v3285 = vunpack.c.l.b16 %v702
    %v3286 = vunpack.c.h.b16 %v702
    %v3287 = vunpack.c.l.b16 %v703
    %v3288 = vunpack.c.l.b16 %v704
    %v3289 = vunpack.c.h.b16 %v704
    %v3290 = vunpack.c.l.b16 %v705
    %v3291 = vunpack.c.h.b16 %v705
    %v3292 = vunpack.c.l.b16 %v706
    %v3293 = vunpack.c.h.b16 %v706
    %v3294 = vunpack.c.l.b16 %v707
    %v3295 = vunpack.c.h.b16 %v707
    %v3296 = vunpack.c.l.b16 %v708
    %v3297 = vunpack.c.h.b16 %v708
    %v3298 = vunpack.c.l.b16 %v709
    %v3299 = vunpack.c.l.b16 %v710
    %v3300 = vunpack.c.h.b16 %v710
    %v3301 = vunpack.c.l.b16 %v711
    %v3302 = vunpack.c.h.b16 %v711
    %v3303 = vunpack.c.l.b16 %v712
    %v3304 = vunpack.c.h.b16 %v712
    %v3305 = vunpack.c.l.b16 %v713
    %v3306 = vunpack.c.h.b16 %v713
    %v3307 = vunpack.c.l.b16 %v714
    %v3308 = vunpack.c.h.b16 %v714
    %v3309 = vunpack.c.l.b16 %v715
    %v3310 = vunpack.c.l.b16 %v716
    %v3311 = vunpack.c.h.b16 %v716
    %v3312 = vunpack.c.l.b16 %v717
    %v3313 = vunpack.c.h.b16 %v717
    %v3314 = vunpack.c.l.b16 %v718
    %v3315 = vunpack.c.h.b16 %v718
    %v3316 = vunpack.c.l.b16 %v719
    %v3317 = vunpack.c.h.b16 %v719
    %v3318 = vunpack.c.l.b16 %v720
    %v3319 = vunpack.c.h.b16 %v720
    %v3320 = vunpack.c.l.b16 %v721
    %v3321 = vunpack.c.l.b16 %v722
    %v3322 = vunpack.c.h.b16 %v722
    %v3323 = vunpack.c.l.b16 %v723
    %v3324 = vunpack.c.h.b16 %v723
    %v3325 = vunpack.c.l.b16 %v724
    %v3326 = vunpack.c.h.b16 %v724
    %v3327 = vunpack.c.l.b16 %v725
    %v3328 = vunpack.c.h.b16 %v725
    %v3329 = vunpack.c.l.b16 %v726
    %v3330 = vunpack.c.h.b16 %v726
    %v3331 = vunpack.c.l.b16 %v727
    %v3332 = vunpack.c.l.b16 %v728
    %v3333 = vunpack.c.h.b16 %v728
    %v3334 = vunpack.c.l.b16 %v729
    %v3335 = vunpack.c.h.b16 %v729
    %v3336 = vunpack.c.l.b16 %v730
    %v3337 = vunpack.c.h.b16 %v730
    %v3338 = vunpack.c.l.b16 %v731
    %v3339 = vunpack.c.h.b16 %v731
    %v3340 = vunpack.c.l.b16 %v732
    %v3341 = vunpack.c.h.b16 %v732
    %v3342 = vunpack.c.l.b16 %v733
    %v3343 = vunpack.c.l.b16 %v734
    %v3344 = vunpack.c.h.b16 %v734
    %v3345 = vunpack.c.l.b16 %v735
    %v3346 = vunpack.c.h.b16 %v735
    %v3347 = vunpack.c.l.b16 %v736
    %v3348 = vunpack.c.h.b16 %v736
    %v3349 = vunpack.c.l.b16 %v737
    %v3350 = vunpack.c.h.b16 %v737
    %v3351 = vunpack.c.l.b16 %v738
    %v3352 = vunpack.c.h.b16 %v738
    %v3353 = vunpack.c.l.b16 %v739
    %v3354 = vunpack.c.l.b16 %v740
    %v3355 = vunpack.c.h.b16 %v740
    %v3356 = vunpack.c.l.b16 %v741
    %v3357 = vunpack.c.h.b16 %v741
    %v3358 = vunpack.c.l.b16 %v742
    %v3359 = vunpack.c.h.b16 %v742
    %v3360 = vunpack.c.l.b16 %v743
    %v3361 = vunpack.c.h.b16 %v743
    %v3362 = vunpack.c.l.b16 %v744
    %v3363 = vunpack.c.h.b16 %v744
    %v3364 = vunpack.c.l.b16 %v745
    %v3365 = vunpack.c.l.b16 %v746
    %v3366 = vunpack.c.h.b16 %v746
    %v3367 = vunpack.c.l.b16 %v747
    %v3368 = vunpack.c.h.b16 %v747
    %v3369 = vunpack.c.l.b16 %v748
    %v3370 = vunpack.c.h.b16 %v748
    %v3371 = vunpack.c.l.b16 %v749
    %v3372 = vunpack.c.h.b16 %v749
    %v3373 = vunpack.c.l.b16 %v750
    %v3374 = vunpack.c.h.b16 %v750
    %v3375 = vunpack.c.l.b16 %v751
    %v3376 = vunpack.c.l.b16 %v752
    %v3377 = vunpack.c.h.b16 %v752
    %v3378 = vunpack.c.l.b16 %v753
    %v3379 = vunpack.c.h.b16 %v753
    %v3380 = vunpack.c.l.b16 %v754
    %v3381 = vunpack.c.h.b16 %v754
    %v3382 = vunpack.c.l.b16 %v755
    %v3383 = vunpack.c.h.b16 %v755
    %v3384 = vunpack.c.l.b16 %v756
    %v3385 = vunpack.c.h.b16 %v756
    %v3386 = vunpack.c.l.b16 %v757
    %v3387 = vunpack.c.l.b16 %v758
    %v3388 = vunpack.c.h.b16 %v758
    %v3389 = vunpack.c.l.b16 %v759
    %v3390 = vunpack.c.h.b16 %v759
    %v3391 = vunpack.c.l.b16 %v760
    %v3392 = vunpack.c.h.b16 %v760
    %v3393 = vunpack.c.l.b16 %v761
    %v3394 = vunpack.c.h.b16 %v761
    %v3395 = vunpack.c.l.b16 %v762
    %v3396 = vunpack.c.h.b16 %v762
    %v3397 = vunpack.c.l.b16 %v763
    %v3398 = vunpack.c.l.b16 %v764
    %v3399 = vunpack.c.h.b16 %v764
    %v3400 = vunpack.c.l.b16 %v765
    %v3401 = vunpack.c.h.b16 %v765
    %v3402 = vunpack.c.l.b16 %v766
    %v3403 = vunpack.c.h.b16 %v766
    %v3404 = vunpack.c.l.b16 %v767
    %v3405 = vunpack.c.h.b16 %v767
    %v3406 = vunpack.c.l.b16 %v768
    %v3407 = vunpack.c.h.b16 %v768
    %v3408 = vunpack.c.l.b16 %v769
    %v3409 = vunpack.c.l.b16 %v770
    %v3410 = vunpack.c.h.b16 %v770
    %v3411 = vunpack.c.l.b16 %v771
    %v3412 = vunpack.c.h.b16 %v771
    %v3413 = vunpack.c.l.b16 %v772
    %v3414 = vunpack.c.h.b16 %v772
    %v3415 = vunpack.c.l.b16 %v773
    %v3416 = vunpack.c.h.b16 %v773
    %v3417 = vunpack.c.l.b16 %v774
    %v3418 = vunpack.c.h.b16 %v774
    %v3419 = vunpack.c.l.b16 %v775
    %v3420 = vunpack.c.l.b16 %v776
    %v3421 = vunpack.c.h.b16 %v776
    %v3422 = vunpack.c.l.b16 %v777
    %v3423 = vunpack.c.h.b16 %v777
    %v3424 = vunpack.c.l.b16 %v778
    %v3425 = vunpack.c.h.b16 %v778
    %v3426 = vunpack.c.l.b16 %v779
    %v3427 = vunpack.c.h.b16 %v779
    %v3428 = vunpack.c.l.b16 %v780
    %v3429 = vunpack.c.h.b16 %v780
    %v3430 = vunpack.c.l.b16 %v781
    %v3431 = vunpack.c.l.b16 %v782
    %v3432 = vunpack.c.h.b16 %v782
    %v3433 = vunpack.c.l.b16 %v783
    %v3434 = vunpack.c.h.b16 %v783
    %v3435 = vunpack.c.l.b16 %v784
    %v3436 = vunpack.c.h.b16 %v784
    %v3437 = vunpack.c.l.b16 %v785
    %v3438 = vunpack.c.h.b16 %v785
    %v3439 = vunpack.c.l.b16 %v786
    %v3440 = vunpack.c.h.b16 %v786
    %v3441 = vunpack.c.l.b16 %v787
    %v3442 = vunpack.c.l.b16 %v788
    %v3443 = vunpack.c.h.b16 %v788
    %v3444 = vunpack.c.l.b16 %v789
    %v3445 = vunpack.c.h.b16 %v789
    %v3446 = vunpack.c.l.b16 %v790
    %v3447 = vunpack.c.h.b16 %v790
    %v3448 = vunpack.c.l.b16 %v791
    %v3449 = vunpack.c.h.b16 %v791
    %v3450 = vunpack.c.l.b16 %v792
    %v3451 = vunpack.c.h.b16 %v792
    %v3452 = vunpack.c.l.b16 %v793
    %v3453 = vunpack.c.l.b16 %v794
    %v3454 = vunpack.c.h.b16 %v794
    %v3455 = vunpack.c.l.b16 %v795
    %v3456 = vunpack.c.h.b16 %v795
    %v3457 = vunpack.c.l.b16 %v796
    %v3458 = vunpack.c.h.b16 %v796
    %v3459 = vunpack.c.l.b16 %v797
    %v3460 = vunpack.c.h.b16 %v797
    %v3461 = vunpack.c.l.b16 %v798
    %v3462 = vunpack.c.h.b16 %v798
    %v3463 = vunpack.c.l.b16 %v799
    %v3464 = vunpack.c.l.b16 %v800
    %v3465 = vunpack.c.h.b16 %v800
    %v3466 = vunpack.c.l.b16 %v801
    %v3467 = vunpack.c.h.b16 %v801
    %v3468 = vunpack.c.l.b16 %v802
    %v3469 = vunpack.c.h.b16 %v802
    %v3470 = vunpack.c.l.b16 %v803
    %v3471 = vunpack.c.h.b16 %v803
    %v3472 = vunpack.c.l.b16 %v804
    %v3473 = vunpack.c.h.b16 %v804
    %v3474 = vunpack.c.l.b16 %v805
    %v3475 = vunpack.c.l.b16 %v806
    %v3476 = vunpack.c.h.b16 %v806
    %v3477 = vunpack.c.l.b16 %v807
    %v3478 = vunpack.c.h.b16 %v807
    %v3479 = vunpack.c.l.b16 %v808
    %v3480 = vunpack.c.h.b16 %v808
    %v3481 = vunpack.c.l.b16 %v809
    %v3482 = vunpack.c.h.b16 %v809
    %v3483 = vunpack.c.l.b16 %v810
    %v3484 = vunpack.c.h.b16 %v810
    %v3485 = vunpack.c.l.b16 %v811
    %v3486 = vunpack.c.l.b16 %v812
    %v3487 = vunpack.c.h.b16 %v812
    %v3488 = vunpack.c.l.b16 %v813
    %v3489 = vunpack.c.h.b16 %v813
    %v3490 = vunpack.c.l.b16 %v814
    %v3491 = vunpack.c.h.b16 %v814
    %v3492 = vunpack.c.l.b16 %v815
    %v3493 = vunpack.c.h.b16 %v815
    %v3494 = vunpack.c.l.b16 %v816
    %v3495 = vunpack.c.h.b16 %v816
    %v3496 = vunpack.c.l.b16 %v817
    %v3497 = vunpack.c.l.b16 %v818
    %v3498 = vunpack.c.h.b16 %v818
    %v3499 = vunpack.c.l.b16 %v819
    %v3500 = vunpack.c.h.b16 %v819
    %v3501 = vunpack.c.l.b16 %v820
    %v3502 = vunpack.c.h.b16 %v820
    %v3503 = vunpack.c.l.b16 %v821
    %v3504 = vunpack.c.h.b16 %v821
    %v3505 = vunpack.c.l.b16 %v822
    %v3506 = vunpack.c.h.b16 %v822
    %v3507 = vunpack.c.l.b16 %v823
    %v3508 = vunpack.c.l.b16 %v824
    %v3509 = vunpack.c.h.b16 %v824
    %v3510 = vunpack.c.l.b16 %v825
    %v3511 = vunpack.c.h.b16 %v825
    %v3512 = vunpack.c.l.b16 %v826
    %v3513 = vunpack.c.h.b16 %v826
    %v3514 = vunpack.c.l.b16 %v827
    %v3515 = vunpack.c.h.b16 %v827
    %v3516 = vunpack.c.l.b16 %v828
    %v3517 = vunpack.c.h.b16 %v828
    %v3518 = vunpack.c.l.b16 %v829
    %v3519 = vunpack.c.l.b16 %v830
    %v3520 = vunpack.c.h.b16 %v830
    %v3521 = vunpack.c.l.b16 %v831
    %v3522 = vunpack.c.h.b16 %v831
    %v3523 = vunpack.c.l.b16 %v832
    %v3524 = vunpack.c.h.b16 %v832
    %v3525 = vunpack.c.l.b16 %v833
    %v3526 = vunpack.c.h.b16 %v833
    %v3527 = vunpack.c.l.b16 %v834
    %v3528 = vunpack.c.h.b16 %v834
    %v3529 = vunpack.c.l.b16 %v835
    %v3530 = vunpack.c.l.b16 %v836
    %v3531 = vunpack.c.h.b16 %v836
    %v3532 = vunpack.c.l.b16 %v837
    %v3533 = vunpack.c.h.b16 %v837
    %v3534 = vunpack.c.l.b16 %v838
    %v3535 = vunpack.c.h.b16 %v838
    %v3536 = vunpack.c.l.b16 %v839
    %v3537 = vunpack.c.h.b16 %v839
    %v3538 = vunpack.c.l.b16 %v840
    %v3539 = vunpack.c.h.b16 %v840
    %v3540 = vunpack.c.l.b16 %v841
    %v3541 = vunpack.c.l.b16 %v842
    %v3542 = vunpack.c.h.b16 %v842
    %v3543 = vunpack.c.l.b16 %v843
    %v3544 = vunpack.c.h.b16 %v843
    %v3545 = vunpack.c.l.b16 %v844
    %v3546 = vunpack.c.h.b16 %v844
    %v3547 = vunpack.c.l.b16 %v845
    %v3548 = vunpack.c.h.b16 %v845
    %v3549 = vunpack.c.l.b16 %v846
    %v3550 = vunpack.c.h.b16 %v846
    %v3551 = vunpack.c.l.b16 %v847
    %v3552 = vunpack.c.l.b16 %v848
    %v3553 = vunpack.c.h.b16 %v848
    %v3554 = vunpack.c.l.b16 %v849
    %v3555 = vunpack.c.h.b16 %v849
    %v3556 = vunpack.c.l.b16 %v850
    %v3557 = vunpack.c.h.b16 %v850
    %v3558 = vunpack.c.l.b16 %v851
    %v3559 = vunpack.c.h.b16 %v851
    %v3560 = vunpack.c.l.b16 %v852
    %v3561 = vunpack.c.h.b16 %v852
    %v3562 = vunpack.c.l.b16 %v853
    %v3563 = vunpack.c.l.b16 %v854
    %v3564 = vunpack.c.h.b16 %v854
    %v3565 = vunpack.c.l.b16 %v855
    %v3566 = vunpack.c.h.b16 %v855
    %v3567 = vunpack.c.l.b16 %v856
    %v3568 = vunpack.c.h.b16 %v856
    %v3569 = vunpack.c.l.b16 %v857
    %v3570 = vunpack.c.h.b16 %v857
    %v3571 = vunpack.c.l.b16 %v858
    %v3572 = vunpack.c.h.b16 %v858
    %v3573 = vunpack.c.l.b16 %v859
    %v3574 = vunpack.c.l.b16 %v860
    %v3575 = vunpack.c.h.b16 %v860
    %v3576 = vunpack.c.l.b16 %v861
    %v3577 = vunpack.c.h.b16 %v861
    %v3578 = vunpack.c.l.b16 %v862
    %v3579 = vunpack.c.h.b16 %v862
    %v3580 = vunpack.c.l.b16 %v863
    %v3581 = vunpack.c.h.b16 %v863
    %v3582 = vunpack.c.l.b16 %v864
    %v3583 = vunpack.c.h.b16 %v864
    %v3584 = vunpack.c.l.b16 %v865
    %v3585 = vunpack.c.l.b16 %v866
    %v3586 = vunpack.c.h.b16 %v866
    %v3587 = vunpack.c.l.b16 %v867
    %v3588 = vunpack.c.h.b16 %v867
    %v3589 = vunpack.c.l.b16 %v868
    %v3590 = vunpack.c.h.b16 %v868
    %v3591 = vunpack.c.l.b16 %v869
    %v3592 = vunpack.c.h.b16 %v869
    %v3593 = vunpack.c.l.b16 %v870
    %v3594 = vunpack.c.h.b16 %v870
    %v3595 = vunpack.c.l.b16 %v871
    %v3596 = vunpack.c.l.b16 %v872
    %v3597 = vunpack.c.h.b16 %v872
    %v3598 = vunpack.c.l.b16 %v873
    %v3599 = vunpack.c.h.b16 %v873
    %v3600 = vunpack.c.l.b16 %v874
    %v3601 = vunpack.c.h.b16 %v874
    %v3602 = vunpack.c.l.b16 %v875
    %v3603 = vunpack.c.h.b16 %v875
    %v3604 = vunpack.c.l.b16 %v876
    %v3605 = vunpack.c.h.b16 %v876
    %v3606 = vunpack.c.l.b16 %v877
    %v3607 = vunpack.c.l.b16 %v878
    %v3608 = vunpack.c.h.b16 %v878
    %v3609 = vunpack.c.l.b16 %v879
    %v3610 = vunpack.c.h.b16 %v879
    %v3611 = vunpack.c.l.b16 %v880
    %v3612 = vunpack.c.h.b16 %v880
    %v3613 = vunpack.c.l.b16 %v881
    %v3614 = vunpack.c.h.b16 %v881
    %v3615 = vunpack.c.l.b16 %v882
    %v3616 = vunpack.c.h.b16 %v882
    %v3617 = vunpack.c.l.b16 %v883
    %v3618 = vunpack.c.l.b16 %v884
    %v3619 = vunpack.c.h.b16 %v884
    %v3620 = vunpack.c.l.b16 %v885
    %v3621 = vunpack.c.h.b16 %v885
    %v3622 = vunpack.c.l.b16 %v886
    %v3623 = vunpack.c.h.b16 %v886
    %v3624 = vunpack.c.l.b16 %v887
    %v3625 = vunpack.c.h.b16 %v887
    %v3626 = vunpack.c.l.b16 %v888
    %v3627 = vunpack.c.h.b16 %v888
    %v3628 = vunpack.c.l.b16 %v889
    %v3629 = vunpack.c.l.b16 %v890
    %v3630 = vunpack.c.h.b16 %v890
    %v3631 = vunpack.c.l.b16 %v891
    %v3632 = vunpack.c.h.b16 %v891
    %v3633 = vunpack.c.l.b16 %v892
    %v3634 = vunpack.c.h.b16 %v892
    %v3635 = vunpack.c.l.b16 %v893
    %v3636 = vunpack.c.h.b16 %v893
    %v3637 = vunpack.c.l.b16 %v894
    %v3638 = vunpack.c.h.b16 %v894
    %v3639 = vunpack.c.l.b16 %v895
    %v3640 = vunpack.c.l.b16 %v896
    %v3641 = vunpack.c.h.b16 %v896
    %v3642 = vunpack.c.l.b16 %v897
    %v3643 = vunpack.c.h.b16 %v897
    %v3644 = vunpack.c.l.b16 %v898
    %v3645 = vunpack.c.h.b16 %v898
    %v3646 = vunpack.c.l.b16 %v899
    %v3647 = vunpack.c.h.b16 %v899
    %v3648 = vunpack.c.l.b16 %v900
    %v3649 = vunpack.c.h.b16 %v900
    %v3650 = vunpack.c.l.b16 %v901
    %v3651 = vunpack.c.l.b16 %v902
    %v3652 = vunpack.c.h.b16 %v902
    %v3653 = vunpack.c.l.b16 %v903
    %v3654 = vunpack.c.h.b16 %v903
    %v3655 = vunpack.c.l.b16 %v904
    %v3656 = vunpack.c.h.b16 %v904
    %v3657 = vunpack.c.l.b16 %v905
    %v3658 = vunpack.c.h.b16 %v905
    %v3659 = vunpack.c.l.b16 %v906
    %v3660 = vunpack.c.h.b16 %v906
    %v3661 = vunpack.c.l.b16 %v907
    %v3662 = vunpack.c.l.b16 %v908
    %v3663 = vunpack.c.h.b16 %v908
    %v3664 = vunpack.c.l.b16 %v909
    %v3665 = vunpack.c.h.b16 %v909
    %v3666 = vunpack.c.l.b16 %v910
    %v3667 = vunpack.c.h.b16 %v910
    %v3668 = vunpack.c.l.b16 %v911
    %v3669 = vunpack.c.h.b16 %v911
    %v3670 = vunpack.c.l.b16 %v912
    %v3671 = vunpack.c.h.b16 %v912
    %v3672 = vunpack.c.l.b16 %v913
    %v3673 = vunpack.c.l.b16 %v914
    %v3674 = vunpack.c.h.b16 %v914
    %v3675 = vunpack.c.l.b16 %v915
    %v3676 = vunpack.c.h.b16 %v915
    %v3677 = vunpack.c.l.b16 %v916
    %v3678 = vunpack.c.h.b16 %v916
    %v3679 = vunpack.c.l.b16 %v917
    %v3680 = vunpack.c.h.b16 %v917
    %v3681 = vunpack.c.l.b16 %v918
    %v3682 = vunpack.c.h.b16 %v918
    %v3683 = vunpack.c.l.b16 %v919
    %v3684 = vunpack.c.l.b16 %v920
    %v3685 = vunpack.c.h.b16 %v920
    %v3686 = vunpack.c.l.b16 %v921
    %v3687 = vunpack.c.h.b16 %v921
    %v3688 = vunpack.c.l.b16 %v922
    %v3689 = vunpack.c.h.b16 %v922
    %v3690 = vunpack.c.l.b16 %v923
    %v3691 = vunpack.c.h.b16 %v923
    %v3692 = vunpack.c.l.b16 %v924
    %v3693 = vunpack.c.h.b16 %v924
    %v3694 = vunpack.c.l.b16 %v925
    %v3695 = vunpack.c.l.b16 %v926
    %v3696 = vunpack.c.h.b16 %v926
    %v3697 = vunpack.c.l.b16 %v927
    %v3698 = vunpack.c.h.b16 %v927
    %v3699 = vunpack.c.l.b16 %v928
    %v3700 = vunpack.c.h.b16 %v928
    %v3701 = vunpack.c.l.b16 %v929
    %v3702 = vunpack.c.h.b16 %v929
    %v3703 = vunpack.c.l.b16 %v930
    %v3704 = vunpack.c.h.b16 %v930
    %v3705 = vunpack.c.l.b16 %v931
    %v3706 = vunpack.c.l.b16 %v932
    %v3707 = vunpack.c.h.b16 %v932
    %v3708 = vunpack.c.l.b16 %v933
    %v3709 = vunpack.c.h.b16 %v933
    %v3710 = vunpack.c.l.b16 %v934
    %v3711 = vunpack.c.h.b16 %v934
    %v3712 = vunpack.c.l.b16 %v935
    %v3713 = vunpack.c.h.b16 %v935
    %v3714 = vunpack.c.l.b16 %v936
    %v3715 = vunpack.c.h.b16 %v936
    %v3716 = vunpack.c.l.b16 %v937
    %v3717 = vunpack.c.l.b16 %v938
    %v3718 = vunpack.c.h.b16 %v938
    %v3719 = vunpack.c.l.b16 %v939
    %v3720 = vunpack.c.h.b16 %v939
    %v3721 = vunpack.c.l.b16 %v940
    %v3722 = vunpack.c.h.b16 %v940
    %v3723 = vunpack.c.l.b16 %v941
    %v3724 = vunpack.c.h.b16 %v941
    %v3725 = vunpack.c.l.b16 %v942
    %v3726 = vunpack.c.h.b16 %v942
    %v3727 = vunpack.c.l.b16 %v943
    %v3728 = vunpack.c.l.b16 %v944
    %v3729 = vunpack.c.h.b16 %v944
    %v3730 = vunpack.c.l.b16 %v945
    %v3731 = vunpack.c.h.b16 %v945
    %v3732 = vunpack.c.l.b16 %v946
    %v3733 = vunpack.c.h.b16 %v946
    %v3734 = vunpack.c.l.b16 %v947
    %v3735 = vunpack.c.h.b16 %v947
    %v3736 = vunpack.c.l.b16 %v948
    %v3737 = vunpack.c.h.b16 %v948
    %v3738 = vunpack.c.l.b16 %v949
    %v3739 = vunpack.c.l.b16 %v950
    %v3740 = vunpack.c.h.b16 %v950
    %v3741 = vunpack.c.l.b16 %v951
    %v3742 = vunpack.c.h.b16 %v951
    %v3743 = vunpack.c.l.b16 %v952
    %v3744 = vunpack.c.h.b16 %v952
    %v3745 = vunpack.c.l.b16 %v953
    %v3746 = vunpack.c.h.b16 %v953
    %v3747 = vunpack.c.l.b16 %v954
    %v3748 = vunpack.c.h.b16 %v954
    %v3749 = vunpack.c.l.b16 %v955
    %v3750 = vunpack.c.l.b16 %v956
    %v3751 = vunpack.c.h.b16 %v956
    %v3752 = vunpack.c.l.b16 %v957
    %v3753 = vunpack.c.h.b16 %v957
    %v3754 = vunpack.c.l.b16 %v958
    %v3755 = vunpack.c.h.b16 %v958
    %v3756 = vunpack.c.l.b16 %v959
    %v3757 = vunpack.c.h.b16 %v959
    %v3758 = vunpack.c.l.b16 %v960
    %v3759 = vunpack.c.h.b16 %v960
    %v3760 = vunpack.c.l.b16 %v961
    %v3761 = vunpack.c.l.b16 %v962
    %v3762 = vunpack.c.h.b16 %v962
    %v3763 = vunpack.c.l.b16 %v963
    %v3764 = vunpack.c.h.b16 %v963
    %v3765 = vunpack.c.l.b16 %v964
    %v3766 = vunpack.c.h.b16 %v964
    %v3767 = vunpack.c.l.b16 %v965
    %v3768 = vunpack.c.h.b16 %v965
    %v3769 = vunpack.c.l.b16 %v966
    %v3770 = vunpack.c.h.b16 %v966
    %v3771 = vunpack.c.l.b16 %v967
    %v3772 = vunpack.c.l.b16 %v968
    %v3773 = vunpack.c.h.b16 %v968
    %v3774 = vunpack.c.l.b16 %v969
    %v3775 = vunpack.c.h.b16 %v969
    %v3776 = vunpack.c.l.b16 %v970
    %v3777 = vunpack.c.h.b16 %v970
    %v3778 = vunpack.c.l.b16 %v971
    %v3779 = vunpack.c.h.b16 %v971
    %v3780 = vunpack.c.l.b16 %v972
    %v3781 = vunpack.c.h.b16 %v972
    %v3782 = vunpack.c.l.b16 %v973
    %v3783 = vunpack.c.l.b16 %v974
    %v3784 = vunpack.c.h.b16 %v974
    %v3785 = vunpack.c.l.b16 %v975
    %v3786 = vunpack.c.h.b16 %v975
    %v3787 = vunpack.c.l.b16 %v976
    %v3788 = vunpack.c.h.b16 %v976
    %v3789 = vunpack.c.l.b16 %v977
    %v3790 = vunpack.c.h.b16 %v977
    %v3791 = vunpack.c.l.b16 %v978
    %v3792 = vunpack.c.h.b16 %v978
    %v3793 = vunpack.c.l.b16 %v979
    %v3794 = vunpack.c.l.b16 %v980
    %v3795 = vunpack.c.h.b16 %v980
    %v3796 = vunpack.c.l.b16 %v981
    %v3797 = vunpack.c.h.b16 %v981
    %v3798 = vunpack.c.l.b16 %v982
    %v3799 = vunpack.c.h.b16 %v982
    %v3800 = vunpack.c.l.b16 %v983
    %v3801 = vunpack.c.h.b16 %v983
    %v3802 = vunpack.c.l.b16 %v984
    %v3803 = vunpack.c.h.b16 %v984
    %v3804 = vunpack.c.l.b16 %v985
    %v3805 = vunpack.c.l.b16 %v986
    %v3806 = vunpack.c.h.b16 %v986
    %v3807 = vunpack.c.l.b16 %v987
    %v3808 = vunpack.c.h.b16 %v987
    %v3809 = vunpack.c.l.b16 %v988
    %v3810 = vunpack.c.h.b16 %v988
    %v3811 = vunpack.c.l.b16 %v989
    %v3812 = vunpack.c.h.b16 %v989
    %v3813 = vunpack.c.l.b16 %v990
    %v3814 = vunpack.c.h.b16 %v990
    %v3815 = vunpack.c.l.b16 %v991
    %v3816 = vunpack.c.l.b16 %v992
    %v3817 = vunpack.c.h.b16 %v992
    %v3818 = vunpack.c.l.b16 %v993
    %v3819 = vunpack.c.h.b16 %v993
    %v3820 = vunpack.c.l.b16 %v994
    %v3821 = vunpack.c.h.b16 %v994
    %v3822 = vunpack.c.l.b16 %v995
    %v3823 = vunpack.c.h.b16 %v995
    %v3824 = vunpack.c.l.b16 %v996
    %v3825 = vunpack.c.h.b16 %v996
    %v3826 = vunpack.c.l.b16 %v997
    %v3827 = vunpack.c.l.b16 %v998
    %v3828 = vunpack.c.h.b16 %v998
    %v3829 = vunpack.c.l.b16 %v999
    %v3830 = vunpack.c.h.b16 %v999
    %v3831 = vunpack.c.l.b16 %v1000
    %v3832 = vunpack.c.h.b16 %v1000
    %v3833 = vunpack.c.l.b16 %v1001
    %v3834 = vunpack.c.h.b16 %v1001
    %v3835 = vunpack.c.l.b16 %v1002
    %v3836 = vunpack.c.h.b16 %v1002
    %v3837 = vunpack.c.l.b16 %v1003
    %v3838 = vpack.c.b16 %v2089, %v2078
    %v3839 = vpack.c.b16 %v2090, %v2079
    %v3840 = vpack.c.b16 %v2091, %v2080
    %v3841 = vpack.c.b16 %v2092, %v2081
    %v3842 = vpack.c.b16 %v2093, %v2082
    %v3843 = vpack.c.b16 %v2094, %v2083
    %v3844 = vpack.c.b16 %v2095, %v2084
    %v3845 = vpack.c.b16 %v2096, %v2085
    %v3846 = vpack.c.b16 %v2097, %v2086
    %v3847 = vpack.c.b16 %v2098, %v2087
    %v3848 = vpack.c.b16 %v2099, %v2088
    %v3849 = vpack.c.b16 %v2111, %v2100
    %v3850 = vpack.c.b16 %v2112, %v2101
    %v3851 = vpack.c.b16 %v2113, %v2102
    %v3852 = vpack.c.b16 %v2114, %v2103
    %v3853 = vpack.c.b16 %v2115, %v2104
    %v3854 = vpack.c.b16 %v2116, %v2105
    %v3855 = vpack.c.b16 %v2117, %v2106
    %v3856 = vpack.c.b16 %v2118, %v2107
    %v3857 = vpack.c.b16 %v2119, %v2108
    %v3858 = vpack.c.b16 %v2120, %v2109
    %v3859 = vpack.c.b16 %v2121, %v2110
    %v3860 = vpack.c.b16 %v2133, %v2122
    %v3861 = vpack.c.b16 %v2134, %v2123
    %v3862 = vpack.c.b16 %v2135, %v2124
    %v3863 = vpack.c.b16 %v2136, %v2125
    %v3864 = vpack.c.b16 %v2137, %v2126
    %v3865 = vpack.c.b16 %v2138, %v2127
    %v3866 = vpack.c.b16 %v2139, %v2128
    %v3867 = vpack.c.b16 %v2140, %v2129
    %v3868 = vpack.c.b16 %v2141, %v2130
    %v3869 = vpack.c.b16 %v2142, %v2131
    %v3870 = vpack.c.b16 %v2143, %v2132
    %v3871 = vpack.c.b16 %v2155, %v2144
    %v3872 = vpack.c.b16 %v2156, %v2145
    %v3873 = vpack.c.b16 %v2157, %v2146
    %v3874 = vpack.c.b16 %v2158, %v2147
    %v3875 = vpack.c.b16 %v2159, %v2148
    %v3876 = vpack.c.b16 %v2160, %v2149
    %v3877 = vpack.c.b16 %v2161, %v2150
    %v3878 = vpack.c.b16 %v2162, %v2151
    %v3879 = vpack.c.b16 %v2163, %v2152
    %v3880 = vpack.c.b16 %v2164, %v2153
    %v3881 = vpack.c.b16 %v2165, %v2154
    %v3882 = vpack.c.b16 %v2177, %v2166
    %v3883 = vpack.c.b16 %v2178, %v2167
    %v3884 = vpack.c.b16 %v2179, %v2168
    %v3885 = vpack.c.b16 %v2180, %v2169
    %v3886 = vpack.c.b16 %v2181, %v2170
    %v3887 = vpack.c.b16 %v2182, %v2171
    %v3888 = vpack.c.b16 %v2183, %v2172
    %v3889 = vpack.c.b16 %v2184, %v2173
    %v3890 = vpack.c.b16 %v2185, %v2174
    %v3891 = vpack.c.b16 %v2186, %v2175
    %v3892 = vpack.c.b16 %v2187, %v2176
    %v3893 = vpack.c.b16 %v2199, %v2188
    %v3894 = vpack.c.b16 %v2200, %v2189
    %v3895 = vpack.c.b16 %v2201, %v2190
    %v3896 = vpack.c.b16 %v2202, %v2191
    %v3897 = vpack.c.b16 %v2203, %v2192
    %v3898 = vpack.c.b16 %v2204, %v2193
    %v3899 = vpack.c.b16 %v2205, %v2194
    %v3900 = vpack.c.b16 %v2206, %v2195
    %v3901 = vpack.c.b16 %v2207, %v2196
    %v3902 = vpack.c.b16 %v2208, %v2197
    %v3903 = vpack.c.b16 %v2209, %v2198
    %v3904 = vpack.c.b16 %v2221, %v2210
    %v3905 = vpack.c.b16 %v2222, %v2211
    %v3906 = vpack.c.b16 %v2223, %v2212
    %v3907 = vpack.c.b16 %v2224, %v2213
    %v3908 = vpack.c.b16 %v2225, %v2214
    %v3909 = vpack.c.b16 %v2226, %v2215
    %v3910 = vpack.c.b16 %v2227, %v2216
    %v3911 = vpack.c.b16 %v2228, %v2217
    %v3912 = vpack.c.b16 %v2229, %v2218
    %v3913 = vpack.c.b16 %v2230, %v2219
    %v3914 = vpack.c.b16 %v2231, %v2220
    %v3915 = vpack.c.b16 %v2243, %v2232
    %v3916 = vpack.c.b16 %v2244, %v2233
    %v3917 = vpack.c.b16 %v2245, %v2234
    %v3918 = vpack.c.b16 %v2246, %v2235
    %v3919 = vpack.c.b16 %v2247, %v2236
    %v3920 = vpack.c.b16 %v2248, %v2237
    %v3921 = vpack.c.b16 %v2249, %v2238
    %v3922 = vpack.c.b16 %v2250, %v2239
    %v3923 = vpack.c.b16 %v2251, %v2240
    %v3924 = vpack.c.b16 %v2252, %v2241
    %v3925 = vpack.c.b16 %v2253, %v2242
    %v3926 = vpack.c.b16 %v2265, %v2254
    %v3927 = vpack.c.b16 %v2266, %v2255
    %v3928 = vpack.c.b16 %v2267, %v2256
    %v3929 = vpack.c.b16 %v2268, %v2257
    %v3930 = vpack.c.b16 %v2269, %v2258
    %v3931 = vpack.c.b16 %v2270, %v2259
    %v3932 = vpack.c.b16 %v2271, %v2260
    %v3933 = vpack.c.b16 %v2272, %v2261
    %v3934 = vpack.c.b16 %v2273, %v2262
    %v3935 = vpack.c.b16 %v2274, %v2263
    %v3936 = vpack.c.b16 %v2275, %v2264
    %v3937 = vpack.c.b16 %v2287, %v2276
    %v3938 = vpack.c.b16 %v2288, %v2277
    %v3939 = vpack.c.b16 %v2289, %v2278
    %v3940 = vpack.c.b16 %v2290, %v2279
    %v3941 = vpack.c.b16 %v2291, %v2280
    %v3942 = vpack.c.b16 %v2292, %v2281
    %v3943 = vpack.c.b16 %v2293, %v2282
    %v3944 = vpack.c.b16 %v2294, %v2283
    %v3945 = vpack.c.b16 %v2295, %v2284
    %v3946 = vpack.c.b16 %v2296, %v2285
    %v3947 = vpack.c.b16 %v2297, %v2286
    %v3948 = vpack.c.b16 %v2309, %v2298
    %v3949 = vpack.c.b16 %v2310, %v2299
    %v3950 = vpack.c.b16 %v2311, %v2300
    %v3951 = vpack.c.b16 %v2312, %v2301
    %v3952 = vpack.c.b16 %v2313, %v2302
    %v3953 = vpack.c.b16 %v2314, %v2303
    %v3954 = vpack.c.b16 %v2315, %v2304
    %v3955 = vpack.c.b16 %v2316, %v2305
    %v3956 = vpack.c.b16 %v2317, %v2306
    %v3957 = vpack.c.b16 %v2318, %v2307
    %v3958 = vpack.c.b16 %v2319, %v2308
    %v3959 = vpack.c.b16 %v2331, %v2320
    %v3960 = vpack.c.b16 %v2332, %v2321
    %v3961 = vpack.c.b16 %v2333, %v2322
    %v3962 = vpack.c.b16 %v2334, %v2323
    %v3963 = vpack.c.b16 %v2335, %v2324
    %v3964 = vpack.c.b16 %v2336, %v2325
    %v3965 = vpack.c.b16 %v2337, %v2326
    %v3966 = vpack.c.b16 %v2338, %v2327
    %v3967 = vpack.c.b16 %v2339, %v2328
    %v3968 = vpack.c.b16 %v2340, %v2329
    %v3969 = vpack.c.b16 %v2341, %v2330
    %v3970 = vpack.c.b16 %v2353, %v2342
    %v3971 = vpack.c.b16 %v2354, %v2343
    %v3972 = vpack.c.b16 %v2355, %v2344
    %v3973 = vpack.c.b16 %v2356, %v2345
    %v3974 = vpack.c.b16 %v2357, %v2346
    %v3975 = vpack.c.b16 %v2358, %v2347
    %v3976 = vpack.c.b16 %v2359, %v2348
    %v3977 = vpack.c.b16 %v2360, %v2349
    %v3978 = vpack.c.b16 %v2361, %v2350
    %v3979 = vpack.c.b16 %v2362, %v2351
    %v3980 = vpack.c.b16 %v2363, %v2352
    %v3981 = vpack.c.b16 %v2375, %v2364
    %v3982 = vpack.c.b16 %v2376, %v2365
    %v3983 = vpack.c.b16 %v2377, %v2366
    %v3984 = vpack.c.b16 %v2378, %v2367
    %v3985 = vpack.c.b16 %v2379, %v2368
    %v3986 = vpack.c.b16 %v2380, %v2369
    %v3987 = vpack.c.b16 %v2381, %v2370
    %v3988 = vpack.c.b16 %v2382, %v2371
    %v3989 = vpack.c.b16 %v2383, %v2372
    %v3990 = vpack.c.b16 %v2384, %v2373
    %v3991 = vpack.c.b16 %v2385, %v2374
    %v3992 = vpack.c.b16 %v2397, %v2386
    %v3993 = vpack.c.b16 %v2398, %v2387
    %v3994 = vpack.c.b16 %v2399, %v2388
    %v3995 = vpack.c.b16 %v2400, %v2389
    %v3996 = vpack.c.b16 %v2401, %v2390
    %v3997 = vpack.c.b16 %v2402, %v2391
    %v3998 = vpack.c.b16 %v2403, %v2392
    %v3999 = vpack.c.b16 %v2404, %v2393
    %v4000 = vpack.c.b16 %v2405, %v2394
    %v4001 = vpack.c.b16 %v2406, %v2395
    %v4002 = vpack.c.b16 %v2407, %v2396
    %v4003 = vpack.c.b16 %v2419, %v2408
    %v4004 = vpack.c.b16 %v2420, %v2409
    %v4005 = vpack.c.b16 %v2421, %v2410
    %v4006 = vpack.c.b16 %v2422, %v2411
    %v4007 = vpack.c.b16 %v2423, %v2412
    %v4008 = vpack.c.b16 %v2424, %v2413
    %v4009 = vpack.c.b16 %v2425, %v2414
    %v4010 = vpack.c.b16 %v2426, %v2415
    %v4011 = vpack.c.b16 %v2427, %v2416
    %v4012 = vpack.c.b16 %v2428, %v2417
    %v4013 = vpack.c.b16 %v2429, %v2418
    %v4014 = vpack.c.b16 %v2441, %v2430
    %v4015 = vpack.c.b16 %v2442, %v2431
    %v4016 = vpack.c.b16 %v2443, %v2432
    %v4017 = vpack.c.b16 %v2444, %v2433
    %v4018 = vpack.c.b16 %v2445, %v2434
    %v4019 = vpack.c.b16 %v2446, %v2435
    %v4020 = vpack.c.b16 %v2447, %v2436
    %v4021 = vpack.c.b16 %v2448, %v2437
    %v4022 = vpack.c.b16 %v2449, %v2438
    %v4023 = vpack.c.b16 %v2450, %v2439
    %v4024 = vpack.c.b16 %v2451, %v2440
    %v4025 = vpack.c.b16 %v2463, %v2452
    %v4026 = vpack.c.b16 %v2464, %v2453
    %v4027 = vpack.c.b16 %v2465, %v2454
    %v4028 = vpack.c.b16 %v2466, %v2455
    %v4029 = vpack.c.b16 %v2467, %v2456
    %v4030 = vpack.c.b16 %v2468, %v2457
    %v4031 = vpack.c.b16 %v2469, %v2458
    %v4032 = vpack.c.b16 %v2470, %v2459
    %v4033 = vpack.c.b16 %v2471, %v2460
    %v4034 = vpack.c.b16 %v2472, %v2461
    %v4035 = vpack.c.b16 %v2473, %v2462
    %v4036 = vpack.c.b16 %v2485, %v2474
    %v4037 = vpack.c.b16 %v2486, %v2475
    %v4038 = vpack.c.b16 %v2487, %v2476
    %v4039 = vpack.c.b16 %v2488, %v2477
    %v4040 = vpack.c.b16 %v2489, %v2478
    %v4041 = vpack.c.b16 %v2490, %v2479
    %v4042 = vpack.c.b16 %v2491, %v2480
    %v4043 = vpack.c.b16 %v2492, %v2481
    %v4044 = vpack.c.b16 %v2493, %v2482
    %v4045 = vpack.c.b16 %v2494, %v2483
    %v4046 = vpack.c.b16 %v2495, %v2484
    %v4047 = vpack.c.b16 %v2507, %v2496
    %v4048 = vpack.c.b16 %v2508, %v2497
    %v4049 = vpack.c.b16 %v2509, %v2498
    %v4050 = vpack.c.b16 %v2510, %v2499
    %v4051 = vpack.c.b16 %v2511, %v2500
    %v4052 = vpack.c.b16 %v2512, %v2501
    %v4053 = vpack.c.b16 %v2513, %v2502
    %v4054 = vpack.c.b16 %v2514, %v2503
    %v4055 = vpack.c.b16 %v2515, %v2504
    %v4056 = vpack.c.b16 %v2516, %v2505
    %v4057 = vpack.c.b16 %v2517, %v2506
    %v4058 = vpack.c.b16 %v2529, %v2518
    %v4059 = vpack.c.b16 %v2530, %v2519
    %v4060 = vpack.c.b16 %v2531, %v2520
    %v4061 = vpack.c.b16 %v2532, %v2521
    %v4062 = vpack.c.b16 %v2533, %v2522
    %v4063 = vpack.c.b16 %v2534, %v2523
    %v4064 = vpack.c.b16 %v2535, %v2524
    %v4065 = vpack.c.b16 %v2536, %v2525
    %v4066 = vpack.c.b16 %v2537, %v2526
    %v4067 = vpack.c.b16 %v2538, %v2527
    %v4068 = vpack.c.b16 %v2539, %v2528
    %v4069 = vpack.c.b16 %v2551, %v2540
    %v4070 = vpack.c.b16 %v2552, %v2541
    %v4071 = vpack.c.b16 %v2553, %v2542
    %v4072 = vpack.c.b16 %v2554, %v2543
    %v4073 = vpack.c.b16 %v2555, %v2544
    %v4074 = vpack.c.b16 %v2556, %v2545
    %v4075 = vpack.c.b16 %v2557, %v2546
    %v4076 = vpack.c.b16 %v2558, %v2547
    %v4077 = vpack.c.b16 %v2559, %v2548
    %v4078 = vpack.c.b16 %v2560, %v2549
    %v4079 = vpack.c.b16 %v2561, %v2550
    %v4080 = vpack.c.b16 %v2573, %v2562
    %v4081 = vpack.c.b16 %v2574, %v2563
    %v4082 = vpack.c.b16 %v2575, %v2564
    %v4083 = vpack.c.b16 %v2576, %v2565
    %v4084 = vpack.c.b16 %v2577, %v2566
    %v4085 = vpack.c.b16 %v2578, %v2567
    %v4086 = vpack.c.b16 %v2579, %v2568
    %v4087 = vpack.c.b16 %v2580, %v2569
    %v4088 = vpack.c.b16 %v2581, %v2570
    %v4089 = vpack.c.b16 %v2582, %v2571
    %v4090 = vpack.c.b16 %v2583, %v2572
    %v4091 = vpack.c.b16 %v2595, %v2584
    %v4092 = vpack.c.b16 %v2596, %v2585
    %v4093 = vpack.c.b16 %v2597, %v2586
    %v4094 = vpack.c.b16 %v2598, %v2587
    %v4095 = vpack.c.b16 %v2599, %v2588
    %v4096 = vpack.c.b16 %v2600, %v2589
    %v4097 = vpack.c.b16 %v2601, %v2590
    %v4098 = vpack.c.b16 %v2602, %v2591
    %v4099 = vpack.c.b16 %v2603, %v2592
    %v4100 = vpack.c.b16 %v2604, %v2593
    %v4101 = vpack.c.b16 %v2605, %v2594
    %v4102 = vpack.c.b16 %v2617, %v2606
    %v4103 = vpack.c.b16 %v2618, %v2607
    %v4104 = vpack.c.b16 %v2619, %v2608
    %v4105 = vpack.c.b16 %v2620, %v2609
    %v4106 = vpack.c.b16 %v2621, %v2610
    %v4107 = vpack.c.b16 %v2622, %v2611
    %v4108 = vpack.c.b16 %v2623, %v2612
    %v4109 = vpack.c.b16 %v2624, %v2613
    %v4110 = vpack.c.b16 %v2625, %v2614
    %v4111 = vpack.c.b16 %v2626, %v2615
    %v4112 = vpack.c.b16 %v2627, %v2616
    %v4113 = vpack.c.b16 %v2639, %v2628
    %v4114 = vpack.c.b16 %v2640, %v2629
    %v4115 = vpack.c.b16 %v2641, %v2630
    %v4116 = vpack.c.b16 %v2642, %v2631
    %v4117 = vpack.c.b16 %v2643, %v2632
    %v4118 = vpack.c.b16 %v2644, %v2633
    %v4119 = vpack.c.b16 %v2645, %v2634
    %v4120 = vpack.c.b16 %v2646, %v2635
    %v4121 = vpack.c.b16 %v2647, %v2636
    %v4122 = vpack.c.b16 %v2648, %v2637
    %v4123 = vpack.c.b16 %v2649, %v2638
    %v4124 = vpack.c.b16 %v2661, %v2650
    %v4125 = vpack.c.b16 %v2662, %v2651
    %v4126 = vpack.c.b16 %v2663, %v2652
    %v4127 = vpack.c.b16 %v2664, %v2653
    %v4128 = vpack.c.b16 %v2665, %v2654
    %v4129 = vpack.c.b16 %v2666, %v2655
    %v4130 = vpack.c.b16 %v2667, %v2656
    %v4131 = vpack.c.b16 %v2668, %v2657
    %v4132 = vpack.c.b16 %v2669, %v2658
    %v4133 = vpack.c.b16 %v2670, %v2659
    %v4134 = vpack.c.b16 %v2671, %v2660
    %v4135 = vpack.c.b16 %v2683, %v2672
    %v4136 = vpack.c.b16 %v2684, %v2673
    %v4137 = vpack.c.b16 %v2685, %v2674
    %v4138 = vpack.c.b16 %v2686, %v2675
    %v4139 = vpack.c.b16 %v2687, %v2676
    %v4140 = vpack.c.b16 %v2688, %v2677
    %v4141 = vpack.c.b16 %v2689, %v2678
    %v4142 = vpack.c.b16 %v2690, %v2679
    %v4143 = vpack.c.b16 %v2691, %v2680
    %v4144 = vpack.c.b16 %v2692, %v2681
    %v4145 = vpack.c.b16 %v2693, %v2682
    %v4146 = vpack.c.b16 %v2705, %v2694
    %v4147 = vpack.c.b16 %v2706, %v2695
    %v4148 = vpack.c.b16 %v2707, %v2696
    %v4149 = vpack.c.b16 %v2708, %v2697
    %v4150 = vpack.c.b16 %v2709, %v2698
    %v4151 = vpack.c.b16 %v2710, %v2699
    %v4152 = vpack.c.b16 %v2711, %v2700
    %v4153 = vpack.c.b16 %v2712, %v2701
    %v4154 = vpack.c.b16 %v2713, %v2702
    %v4155 = vpack.c.b16 %v2714, %v2703
    %v4156 = vpack.c.b16 %v2715, %v2704
    %v4157 = vpack.c.b16 %v2727, %v2716
    %v4158 = vpack.c.b16 %v2728, %v2717
    %v4159 = vpack.c.b16 %v2729, %v2718
    %v4160 = vpack.c.b16 %v2730, %v2719
    %v4161 = vpack.c.b16 %v2731, %v2720
    %v4162 = vpack.c.b16 %v2732, %v2721
    %v4163 = vpack.c.b16 %v2733, %v2722
    %v4164 = vpack.c.b16 %v2734, %v2723
    %v4165 = vpack.c.b16 %v2735, %v2724
    %v4166 = vpack.c.b16 %v2736, %v2725
    %v4167 = vpack.c.b16 %v2737, %v2726
    %v4168 = vpack.c.b16 %v2749, %v2738
    %v4169 = vpack.c.b16 %v2750, %v2739
    %v4170 = vpack.c.b16 %v2751, %v2740
    %v4171 = vpack.c.b16 %v2752, %v2741
    %v4172 = vpack.c.b16 %v2753, %v2742
    %v4173 = vpack.c.b16 %v2754, %v2743
    %v4174 = vpack.c.b16 %v2755, %v2744
    %v4175 = vpack.c.b16 %v2756, %v2745
    %v4176 = vpack.c.b16 %v2757, %v2746
    %v4177 = vpack.c.b16 %v2758, %v2747
    %v4178 = vpack.c.b16 %v2759, %v2748
    %v4179 = vpack.c.b16 %v2771, %v2760
    %v4180 = vpack.c.b16 %v2772, %v2761
    %v4181 = vpack.c.b16 %v2773, %v2762
    %v4182 = vpack.c.b16 %v2774, %v2763
    %v4183 = vpack.c.b16 %v2775, %v2764
    %v4184 = vpack.c.b16 %v2776, %v2765
    %v4185 = vpack.c.b16 %v2777, %v2766
    %v4186 = vpack.c.b16 %v2778, %v2767
    %v4187 = vpack.c.b16 %v2779, %v2768
    %v4188 = vpack.c.b16 %v2780, %v2769
    %v4189 = vpack.c.b16 %v2781, %v2770
    %v4190 = vpack.c.b16 %v2793, %v2782
    %v4191 = vpack.c.b16 %v2794, %v2783
    %v4192 = vpack.c.b16 %v2795, %v2784
    %v4193 = vpack.c.b16 %v2796, %v2785
    %v4194 = vpack.c.b16 %v2797, %v2786
    %v4195 = vpack.c.b16 %v2798, %v2787
    %v4196 = vpack.c.b16 %v2799, %v2788
    %v4197 = vpack.c.b16 %v2800, %v2789
    %v4198 = vpack.c.b16 %v2801, %v2790
    %v4199 = vpack.c.b16 %v2802, %v2791
    %v4200 = vpack.c.b16 %v2803, %v2792
    %v4201 = vpack.c.b16 %v2815, %v2804
    %v4202 = vpack.c.b16 %v2816, %v2805
    %v4203 = vpack.c.b16 %v2817, %v2806
    %v4204 = vpack.c.b16 %v2818, %v2807
    %v4205 = vpack.c.b16 %v2819, %v2808
    %v4206 = vpack.c.b16 %v2820, %v2809
    %v4207 = vpack.c.b16 %v2821, %v2810
    %v4208 = vpack.c.b16 %v2822, %v2811
    %v4209 = vpack.c.b16 %v2823, %v2812
    %v4210 = vpack.c.b16 %v2824, %v2813
    %v4211 = vpack.c.b16 %v2825, %v2814
    %v4212 = vpack.c.b16 %v2837, %v2826
    %v4213 = vpack.c.b16 %v2838, %v2827
    %v4214 = vpack.c.b16 %v2839, %v2828
    %v4215 = vpack.c.b16 %v2840, %v2829
    %v4216 = vpack.c.b16 %v2841, %v2830
    %v4217 = vpack.c.b16 %v2842, %v2831
    %v4218 = vpack.c.b16 %v2843, %v2832
    %v4219 = vpack.c.b16 %v2844, %v2833
    %v4220 = vpack.c.b16 %v2845, %v2834
    %v4221 = vpack.c.b16 %v2846, %v2835
    %v4222 = vpack.c.b16 %v2847, %v2836
    %v4223 = vpack.c.b16 %v2859, %v2848
    %v4224 = vpack.c.b16 %v2860, %v2849
    %v4225 = vpack.c.b16 %v2861, %v2850
    %v4226 = vpack.c.b16 %v2862, %v2851
    %v4227 = vpack.c.b16 %v2863, %v2852
    %v4228 = vpack.c.b16 %v2864, %v2853
    %v4229 = vpack.c.b16 %v2865, %v2854
    %v4230 = vpack.c.b16 %v2866, %v2855
    %v4231 = vpack.c.b16 %v2867, %v2856
    %v4232 = vpack.c.b16 %v2868, %v2857
    %v4233 = vpack.c.b16 %v2869, %v2858
    %v4234 = vpack.c.b16 %v2881, %v2870
    %v4235 = vpack.c.b16 %v2882, %v2871
    %v4236 = vpack.c.b16 %v2883, %v2872
    %v4237 = vpack.c.b16 %v2884, %v2873
    %v4238 = vpack.c.b16 %v2885, %v2874
    %v4239 = vpack.c.b16 %v2886, %v2875
    %v4240 = vpack.c.b16 %v2887, %v2876
    %v4241 = vpack.c.b16 %v2888, %v2877
    %v4242 = vpack.c.b16 %v2889, %v2878
    %v4243 = vpack.c.b16 %v2890, %v2879
    %v4244 = vpack.c.b16 %v2891, %v2880
    %v4245 = vpack.c.b16 %v2903, %v2892
    %v4246 = vpack.c.b16 %v2904, %v2893
    %v4247 = vpack.c.b16 %v2905, %v2894
    %v4248 = vpack.c.b16 %v2906, %v2895
    %v4249 = vpack.c.b16 %v2907, %v2896
    %v4250 = vpack.c.b16 %v2908, %v2897
    %v4251 = vpack.c.b16 %v2909, %v2898
    %v4252 = vpack.c.b16 %v2910, %v2899
    %v4253 = vpack.c.b16 %v2911, %v2900
    %v4254 = vpack.c.b16 %v2912, %v2901
    %v4255 = vpack.c.b16 %v2913, %v2902
    %v4256 = vpack.c.b16 %v2925, %v2914
    %v4257 = vpack.c.b16 %v2926, %v2915
    %v4258 = vpack.c.b16 %v2927, %v2916
    %v4259 = vpack.c.b16 %v2928, %v2917
    %v4260 = vpack.c.b16 %v2929, %v2918
    %v4261 = vpack.c.b16 %v2930, %v2919
    %v4262 = vpack.c.b16 %v2931, %v2920
    %v4263 = vpack.c.b16 %v2932, %v2921
    %v4264 = vpack.c.b16 %v2933, %v2922
    %v4265 = vpack.c.b16 %v2934, %v2923
    %v4266 = vpack.c.b16 %v2935, %v2924
    %v4267 = vpack.c.b16 %v2947, %v2936
    %v4268 = vpack.c.b16 %v2948, %v2937
    %v4269 = vpack.c.b16 %v2949, %v2938
    %v4270 = vpack.c.b16 %v2950, %v2939
    %v4271 = vpack.c.b16 %v2951, %v2940
    %v4272 = vpack.c.b16 %v2952, %v2941
    %v4273 = vpack.c.b16 %v2953, %v2942
    %v4274 = vpack.c.b16 %v2954, %v2943
    %v4275 = vpack.c.b16 %v2955, %v2944
    %v4276 = vpack.c.b16 %v2956, %v2945
    %v4277 = vpack.c.b16 %v2957, %v2946
    %v4278 = vpack.c.b16 %v2969, %v2958
    %v4279 = vpack.c.b16 %v2970, %v2959
    %v4280 = vpack.c.b16 %v2971, %v2960
    %v4281 = vpack.c.b16 %v2972, %v2961
    %v4282 = vpack.c.b16 %v2973, %v2962
    %v4283 = vpack.c.b16 %v2974, %v2963
    %v4284 = vpack.c.b16 %v2975, %v2964
    %v4285 = vpack.c.b16 %v2976, %v2965
    %v4286 = vpack.c.b16 %v2977, %v2966
    %v4287 = vpack.c.b16 %v2978, %v2967
    %v4288 = vpack.c.b16 %v2979, %v2968
    %v4289 = vpack.c.b16 %v2991, %v2980
    %v4290 = vpack.c.b16 %v2992, %v2981
    %v4291 = vpack.c.b16 %v2993, %v2982
    %v4292 = vpack.c.b16 %v2994, %v2983
    %v4293 = vpack.c.b16 %v2995, %v2984
    %v4294 = vpack.c.b16 %v2996, %v2985
    %v4295 = vpack.c.b16 %v2997, %v2986
    %v4296 = vpack.c.b16 %v2998, %v2987
    %v4297 = vpack.c.b16 %v2999, %v2988
    %v4298 = vpack.c.b16 %v3000, %v2989
    %v4299 = vpack.c.b16 %v3001, %v2990
    %v4300 = vpack.c.b16 %v3013, %v3002
    %v4301 = vpack.c.b16 %v3014, %v3003
    %v4302 = vpack.c.b16 %v3015, %v3004
    %v4303 = vpack.c.b16 %v3016, %v3005
    %v4304 = vpack.c.b16 %v3017, %v3006
    %v4305 = vpack.c.b16 %v3018, %v3007
    %v4306 = vpack.c.b16 %v3019, %v3008
    %v4307 = vpack.c.b16 %v3020, %v3009
    %v4308 = vpack.c.b16 %v3021, %v3010
    %v4309 = vpack.c.b16 %v3022, %v3011
    %v4310 = vpack.c.b16 %v3023, %v3012
    %v4311 = vpack.c.b16 %v3035, %v3024
    %v4312 = vpack.c.b16 %v3036, %v3025
    %v4313 = vpack.c.b16 %v3037, %v3026
    %v4314 = vpack.c.b16 %v3038, %v3027
    %v4315 = vpack.c.b16 %v3039, %v3028
    %v4316 = vpack.c.b16 %v3040, %v3029
    %v4317 = vpack.c.b16 %v3041, %v3030
    %v4318 = vpack.c.b16 %v3042, %v3031
    %v4319 = vpack.c.b16 %v3043, %v3032
    %v4320 = vpack.c.b16 %v3044, %v3033
    %v4321 = vpack.c.b16 %v3045, %v3034
    %v4322 = vpack.c.b16 %v3057, %v3046
    %v4323 = vpack.c.b16 %v3058, %v3047
    %v4324 = vpack.c.b16 %v3059, %v3048
    %v4325 = vpack.c.b16 %v3060, %v3049
    %v4326 = vpack.c.b16 %v3061, %v3050
    %v4327 = vpack.c.b16 %v3062, %v3051
    %v4328 = vpack.c.b16 %v3063, %v3052
    %v4329 = vpack.c.b16 %v3064, %v3053
    %v4330 = vpack.c.b16 %v3065, %v3054
    %v4331 = vpack.c.b16 %v3066, %v3055
    %v4332 = vpack.c.b16 %v3067, %v3056
    %v4333 = vpack.c.b16 %v3079, %v3068
    %v4334 = vpack.c.b16 %v3080, %v3069
    %v4335 = vpack.c.b16 %v3081, %v3070
    %v4336 = vpack.c.b16 %v3082, %v3071
    %v4337 = vpack.c.b16 %v3083, %v3072
    %v4338 = vpack.c.b16 %v3084, %v3073
    %v4339 = vpack.c.b16 %v3085, %v3074
    %v4340 = vpack.c.b16 %v3086, %v3075
    %v4341 = vpack.c.b16 %v3087, %v3076
    %v4342 = vpack.c.b16 %v3088, %v3077
    %v4343 = vpack.c.b16 %v3089, %v3078
    %v4344 = vpack.c.b16 %v3101, %v3090
    %v4345 = vpack.c.b16 %v3102, %v3091
    %v4346 = vpack.c.b16 %v3103, %v3092
    %v4347 = vpack.c.b16 %v3104, %v3093
    %v4348 = vpack.c.b16 %v3105, %v3094
    %v4349 = vpack.c.b16 %v3106, %v3095
    %v4350 = vpack.c.b16 %v3107, %v3096
    %v4351 = vpack.c.b16 %v3108, %v3097
    %v4352 = vpack.c.b16 %v3109, %v3098
    %v4353 = vpack.c.b16 %v3110, %v3099
    %v4354 = vpack.c.b16 %v3111, %v3100
    %v4355 = vpack.c.b16 %v3123, %v3112
    %v4356 = vpack.c.b16 %v3124, %v3113
    %v4357 = vpack.c.b16 %v3125, %v3114
    %v4358 = vpack.c.b16 %v3126, %v3115
    %v4359 = vpack.c.b16 %v3127, %v3116
    %v4360 = vpack.c.b16 %v3128, %v3117
    %v4361 = vpack.c.b16 %v3129, %v3118
    %v4362 = vpack.c.b16 %v3130, %v3119
    %v4363 = vpack.c.b16 %v3131, %v3120
    %v4364 = vpack.c.b16 %v3132, %v3121
    %v4365 = vpack.c.b16 %v3133, %v3122
    %v4366 = vpack.c.b16 %v3145, %v3134
    %v4367 = vpack.c.b16 %v3146, %v3135
    %v4368 = vpack.c.b16 %v3147, %v3136
    %v4369 = vpack.c.b16 %v3148, %v3137
    %v4370 = vpack.c.b16 %v3149, %v3138
    %v4371 = vpack.c.b16 %v3150, %v3139
    %v4372 = vpack.c.b16 %v3151, %v3140
    %v4373 = vpack.c.b16 %v3152, %v3141
    %v4374 = vpack.c.b16 %v3153, %v3142
    %v4375 = vpack.c.b16 %v3154, %v3143
    %v4376 = vpack.c.b16 %v3155, %v3144
    %v4377 = vpack.c.b16 %v3167, %v3156
    %v4378 = vpack.c.b16 %v3168, %v3157
    %v4379 = vpack.c.b16 %v3169, %v3158
    %v4380 = vpack.c.b16 %v3170, %v3159
    %v4381 = vpack.c.b16 %v3171, %v3160
    %v4382 = vpack.c.b16 %v3172, %v3161
    %v4383 = vpack.c.b16 %v3173, %v3162
    %v4384 = vpack.c.b16 %v3174, %v3163
    %v4385 = vpack.c.b16 %v3175, %v3164
    %v4386 = vpack.c.b16 %v3176, %v3165
    %v4387 = vpack.c.b16 %v3177, %v3166
    %v4388 = vpack.c.b16 %v3189, %v3178
    %v4389 = vpack.c.b16 %v3190, %v3179
    %v4390 = vpack.c.b16 %v3191, %v3180
    %v4391 = vpack.c.b16 %v3192, %v3181
    %v4392 = vpack.c.b16 %v3193, %v3182
    %v4393 = vpack.c.b16 %v3194, %v3183
    %v4394 = vpack.c.b16 %v3195, %v3184
    %v4395 = vpack.c.b16 %v3196, %v3185
    %v4396 = vpack.c.b16 %v3197, %v3186
    %v4397 = vpack.c.b16 %v3198, %v3187
    %v4398 = vpack.c.b16 %v3199, %v3188
    %v4399 = vpack.c.b16 %v3211, %v3200
    %v4400 = vpack.c.b16 %v3212, %v3201
    %v4401 = vpack.c.b16 %v3213, %v3202
    %v4402 = vpack.c.b16 %v3214, %v3203
    %v4403 = vpack.c.b16 %v3215, %v3204
    %v4404 = vpack.c.b16 %v3216, %v3205
    %v4405 = vpack.c.b16 %v3217, %v3206
    %v4406 = vpack.c.b16 %v3218, %v3207
    %v4407 = vpack.c.b16 %v3219, %v3208
    %v4408 = vpack.c.b16 %v3220, %v3209
    %v4409 = vpack.c.b16 %v3221, %v3210
    %v4410 = vpack.c.b16 %v3233, %v3222
    %v4411 = vpack.c.b16 %v3234, %v3223
    %v4412 = vpack.c.b16 %v3235, %v3224
    %v4413 = vpack.c.b16 %v3236, %v3225
    %v4414 = vpack.c.b16 %v3237, %v3226
    %v4415 = vpack.c.b16 %v3238, %v3227
    %v4416 = vpack.c.b16 %v3239, %v3228
    %v4417 = vpack.c.b16 %v3240, %v3229
    %v4418 = vpack.c.b16 %v3241, %v3230
    %v4419 = vpack.c.b16 %v3242, %v3231
    %v4420 = vpack.c.b16 %v3243, %v3232
    %v4421 = vpack.c.b16 %v3255, %v3244
    %v4422 = vpack.c.b16 %v3256, %v3245
    %v4423 = vpack.c.b16 %v3257, %v3246
    %v4424 = vpack.c.b16 %v3258, %v3247
    %v4425 = vpack.c.b16 %v3259, %v3248
    %v4426 = vpack.c.b16 %v3260, %v3249
    %v4427 = vpack.c.b16 %v3261, %v3250
    %v4428 = vpack.c.b16 %v3262, %v3251
    %v4429 = vpack.c.b16 %v3263, %v3252
    %v4430 = vpack.c.b16 %v3264, %v3253
    %v4431 = vpack.c.b16 %v3265, %v3254
    %v4432 = vpack.c.b16 %v3277, %v3266
    %v4433 = vpack.c.b16 %v3278, %v3267
    %v4434 = vpack.c.b16 %v3279, %v3268
    %v4435 = vpack.c.b16 %v3280, %v3269
    %v4436 = vpack.c.b16 %v3281, %v3270
    %v4437 = vpack.c.b16 %v3282, %v3271
    %v4438 = vpack.c.b16 %v3283, %v3272
    %v4439 = vpack.c.b16 %v3284, %v3273
    %v4440 = vpack.c.b16 %v3285, %v3274
    %v4441 = vpack.c.b16 %v3286, %v3275
    %v4442 = vpack.c.b16 %v3287, %v3276
    %v4443 = vpack.c.b16 %v3299, %v3288
    %v4444 = vpack.c.b16 %v3300, %v3289
    %v4445 = vpack.c.b16 %v3301, %v3290
    %v4446 = vpack.c.b16 %v3302, %v3291
    %v4447 = vpack.c.b16 %v3303, %v3292
    %v4448 = vpack.c.b16 %v3304, %v3293
    %v4449 = vpack.c.b16 %v3305, %v3294
    %v4450 = vpack.c.b16 %v3306, %v3295
    %v4451 = vpack.c.b16 %v3307, %v3296
    %v4452 = vpack.c.b16 %v3308, %v3297
    %v4453 = vpack.c.b16 %v3309, %v3298
    %v4454 = vpack.c.b16 %v3321, %v3310
    %v4455 = vpack.c.b16 %v3322, %v3311
    %v4456 = vpack.c.b16 %v3323, %v3312
    %v4457 = vpack.c.b16 %v3324, %v3313
    %v4458 = vpack.c.b16 %v3325, %v3314
    %v4459 = vpack.c.b16 %v3326, %v3315
    %v4460 = vpack.c.b16 %v3327, %v3316
    %v4461 = vpack.c.b16 %v3328, %v3317
    %v4462 = vpack.c.b16 %v3329, %v3318
    %v4463 = vpack.c.b16 %v3330, %v3319
    %v4464 = vpack.c.b16 %v3331, %v3320
    %v4465 = vpack.c.b16 %v3343, %v3332
    %v4466 = vpack.c.b16 %v3344, %v3333
    %v4467 = vpack.c.b16 %v3345, %v3334
    %v4468 = vpack.c.b16 %v3346, %v3335
    %v4469 = vpack.c.b16 %v3347, %v3336
    %v4470 = vpack.c.b16 %v3348, %v3337
    %v4471 = vpack.c.b16 %v3349, %v3338
    %v4472 = vpack.c.b16 %v3350, %v3339
    %v4473 = vpack.c.b16 %v3351, %v3340
    %v4474 = vpack.c.b16 %v3352, %v3341
    %v4475 = vpack.c.b16 %v3353, %v3342
    %v4476 = vpack.c.b16 %v3365, %v3354
    %v4477 = vpack.c.b16 %v3366, %v3355
    %v4478 = vpack.c.b16 %v3367, %v3356
    %v4479 = vpack.c.b16 %v3368, %v3357
    %v4480 = vpack.c.b16 %v3369, %v3358
    %v4481 = vpack.c.b16 %v3370, %v3359
    %v4482 = vpack.c.b16 %v3371, %v3360
    %v4483 = vpack.c.b16 %v3372, %v3361
    %v4484 = vpack.c.b16 %v3373, %v3362
    %v4485 = vpack.c.b16 %v3374, %v3363
    %v4486 = vpack.c.b16 %v3375, %v3364
    %v4487 = vpack.c.b16 %v3387, %v3376
    %v4488 = vpack.c.b16 %v3388, %v3377
    %v4489 = vpack.c.b16 %v3389, %v3378
    %v4490 = vpack.c.b16 %v3390, %v3379
    %v4491 = vpack.c.b16 %v3391, %v3380
    %v4492 = vpack.c.b16 %v3392, %v3381
    %v4493 = vpack.c.b16 %v3393, %v3382
    %v4494 = vpack.c.b16 %v3394, %v3383
    %v4495 = vpack.c.b16 %v3395, %v3384
    %v4496 = vpack.c.b16 %v3396, %v3385
    %v4497 = vpack.c.b16 %v3397, %v3386
    %v4498 = vpack.c.b16 %v3409, %v3398
    %v4499 = vpack.c.b16 %v3410, %v3399
    %v4500 = vpack.c.b16 %v3411, %v3400
    %v4501 = vpack.c.b16 %v3412, %v3401
    %v4502 = vpack.c.b16 %v3413, %v3402
    %v4503 = vpack.c.b16 %v3414, %v3403
    %v4504 = vpack.c.b16 %v3415, %v3404
    %v4505 = vpack.c.b16 %v3416, %v3405
    %v4506 = vpack.c.b16 %v3417, %v3406
    %v4507 = vpack.c.b16 %v3418, %v3407
    %v4508 = vpack.c.b16 %v3419, %v3408
    %v4509 = vpack.c.b16 %v3431, %v3420
    %v4510 = vpack.c.b16 %v3432, %v3421
    %v4511 = vpack.c.b16 %v3433, %v3422
    %v4512 = vpack.c.b16 %v3434, %v3423
    %v4513 = vpack.c.b16 %v3435, %v3424
    %v4514 = vpack.c.b16 %v3436, %v3425
    %v4515 = vpack.c.b16 %v3437, %v3426
    %v4516 = vpack.c.b16 %v3438, %v3427
    %v4517 = vpack.c.b16 %v3439, %v3428
    %v4518 = vpack.c.b16 %v3440, %v3429
    %v4519 = vpack.c.b16 %v3441, %v3430
    %v4520 = vpack.c.b16 %v3453, %v3442
    %v4521 = vpack.c.b16 %v3454, %v3443
    %v4522 = vpack.c.b16 %v3455, %v3444
    %v4523 = vpack.c.b16 %v3456, %v3445
    %v4524 = vpack.c.b16 %v3457, %v3446
    %v4525 = vpack.c.b16 %v3458, %v3447
    %v4526 = vpack.c.b16 %v3459, %v3448
    %v4527 = vpack.c.b16 %v3460, %v3449
    %v4528 = vpack.c.b16 %v3461, %v3450
    %v4529 = vpack.c.b16 %v3462, %v3451
    %v4530 = vpack.c.b16 %v3463, %v3452
    %v4531 = vpack.c.b16 %v3475, %v3464
    %v4532 = vpack.c.b16 %v3476, %v3465
    %v4533 = vpack.c.b16 %v3477, %v3466
    %v4534 = vpack.c.b16 %v3478, %v3467
    %v4535 = vpack.c.b16 %v3479, %v3468
    %v4536 = vpack.c.b16 %v3480, %v3469
    %v4537 = vpack.c.b16 %v3481, %v3470
    %v4538 = vpack.c.b16 %v3482, %v3471
    %v4539 = vpack.c.b16 %v3483, %v3472
    %v4540 = vpack.c.b16 %v3484, %v3473
    %v4541 = vpack.c.b16 %v3485, %v3474
    %v4542 = vpack.c.b16 %v3497, %v3486
    %v4543 = vpack.c.b16 %v3498, %v3487
    %v4544 = vpack.c.b16 %v3499, %v3488
    %v4545 = vpack.c.b16 %v3500, %v3489
    %v4546 = vpack.c.b16 %v3501, %v3490
    %v4547 = vpack.c.b16 %v3502, %v3491
    %v4548 = vpack.c.b16 %v3503, %v3492
    %v4549 = vpack.c.b16 %v3504, %v3493
    %v4550 = vpack.c.b16 %v3505, %v3494
    %v4551 = vpack.c.b16 %v3506, %v3495
    %v4552 = vpack.c.b16 %v3507, %v3496
    %v4553 = vpack.c.b16 %v3519, %v3508
    %v4554 = vpack.c.b16 %v3520, %v3509
    %v4555 = vpack.c.b16 %v3521, %v3510
    %v4556 = vpack.c.b16 %v3522, %v3511
    %v4557 = vpack.c.b16 %v3523, %v3512
    %v4558 = vpack.c.b16 %v3524, %v3513
    %v4559 = vpack.c.b16 %v3525, %v3514
    %v4560 = vpack.c.b16 %v3526, %v3515
    %v4561 = vpack.c.b16 %v3527, %v3516
    %v4562 = vpack.c.b16 %v3528, %v3517
    %v4563 = vpack.c.b16 %v3529, %v3518
    %v4564 = vpack.c.b16 %v3541, %v3530
    %v4565 = vpack.c.b16 %v3542, %v3531
    %v4566 = vpack.c.b16 %v3543, %v3532
    %v4567 = vpack.c.b16 %v3544, %v3533
    %v4568 = vpack.c.b16 %v3545, %v3534
    %v4569 = vpack.c.b16 %v3546, %v3535
    %v4570 = vpack.c.b16 %v3547, %v3536
    %v4571 = vpack.c.b16 %v3548, %v3537
    %v4572 = vpack.c.b16 %v3549, %v3538
    %v4573 = vpack.c.b16 %v3550, %v3539
    %v4574 = vpack.c.b16 %v3551, %v3540
    %v4575 = vpack.c.b16 %v3563, %v3552
    %v4576 = vpack.c.b16 %v3564, %v3553
    %v4577 = vpack.c.b16 %v3565, %v3554
    %v4578 = vpack.c.b16 %v3566, %v3555
    %v4579 = vpack.c.b16 %v3567, %v3556
    %v4580 = vpack.c.b16 %v3568, %v3557
    %v4581 = vpack.c.b16 %v3569, %v3558
    %v4582 = vpack.c.b16 %v3570, %v3559
    %v4583 = vpack.c.b16 %v3571, %v3560
    %v4584 = vpack.c.b16 %v3572, %v3561
    %v4585 = vpack.c.b16 %v3573, %v3562
    %v4586 = vpack.c.b16 %v3585, %v3574
    %v4587 = vpack.c.b16 %v3586, %v3575
    %v4588 = vpack.c.b16 %v3587, %v3576
    %v4589 = vpack.c.b16 %v3588, %v3577
    %v4590 = vpack.c.b16 %v3589, %v3578
    %v4591 = vpack.c.b16 %v3590, %v3579
    %v4592 = vpack.c.b16 %v3591, %v3580
    %v4593 = vpack.c.b16 %v3592, %v3581
    %v4594 = vpack.c.b16 %v3593, %v3582
    %v4595 = vpack.c.b16 %v3594, %v3583
    %v4596 = vpack.c.b16 %v3595, %v3584
    %v4597 = vpack.c.b16 %v3607, %v3596
    %v4598 = vpack.c.b16 %v3608, %v3597
    %v4599 = vpack.c.b16 %v3609, %v3598
    %v4600 = vpack.c.b16 %v3610, %v3599
    %v4601 = vpack.c.b16 %v3611, %v3600
    %v4602 = vpack.c.b16 %v3612, %v3601
    %v4603 = vpack.c.b16 %v3613, %v3602
    %v4604 = vpack.c.b16 %v3614, %v3603
    %v4605 = vpack.c.b16 %v3615, %v3604
    %v4606 = vpack.c.b16 %v3616, %v3605
    %v4607 = vpack.c.b16 %v3617, %v3606
    %v4608 = vpack.c.b16 %v3629, %v3618
    %v4609 = vpack.c.b16 %v3630, %v3619
    %v4610 = vpack.c.b16 %v3631, %v3620
    %v4611 = vpack.c.b16 %v3632, %v3621
    %v4612 = vpack.c.b16 %v3633, %v3622
    %v4613 = vpack.c.b16 %v3634, %v3623
    %v4614 = vpack.c.b16 %v3635, %v3624
    %v4615 = vpack.c.b16 %v3636, %v3625
    %v4616 = vpack.c.b16 %v3637, %v3626
    %v4617 = vpack.c.b16 %v3638, %v3627
    %v4618 = vpack.c.b16 %v3639, %v3628
    %v4619 = vpack.c.b16 %v3651, %v3640
    %v4620 = vpack.c.b16 %v3652, %v3641
    %v4621 = vpack.c.b16 %v3653, %v3642
    %v4622 = vpack.c.b16 %v3654, %v3643
    %v4623 = vpack.c.b16 %v3655, %v3644
    %v4624 = vpack.c.b16 %v3656, %v3645
    %v4625 = vpack.c.b16 %v3657, %v3646
    %v4626 = vpack.c.b16 %v3658, %v3647
    %v4627 = vpack.c.b16 %v3659, %v3648
    %v4628 = vpack.c.b16 %v3660, %v3649
    %v4629 = vpack.c.b16 %v3661, %v3650
    %v4630 = vpack.c.b16 %v3673, %v3662
    %v4631 = vpack.c.b16 %v3674, %v3663
    %v4632 = vpack.c.b16 %v3675, %v3664
    %v4633 = vpack.c.b16 %v3676, %v3665
    %v4634 = vpack.c.b16 %v3677, %v3666
    %v4635 = vpack.c.b16 %v3678, %v3667
    %v4636 = vpack.c.b16 %v3679, %v3668
    %v4637 = vpack.c.b16 %v3680, %v3669
    %v4638 = vpack.c.b16 %v3681, %v3670
    %v4639 = vpack.c.b16 %v3682, %v3671
    %v4640 = vpack.c.b16 %v3683, %v3672
    %v4641 = vpack.c.b16 %v3695, %v3684
    %v4642 = vpack.c.b16 %v3696, %v3685
    %v4643 = vpack.c.b16 %v3697, %v3686
    %v4644 = vpack.c.b16 %v3698, %v3687
    %v4645 = vpack.c.b16 %v3699, %v3688
    %v4646 = vpack.c.b16 %v3700, %v3689
    %v4647 = vpack.c.b16 %v3701, %v3690
    %v4648 = vpack.c.b16 %v3702, %v3691
    %v4649 = vpack.c.b16 %v3703, %v3692
    %v4650 = vpack.c.b16 %v3704, %v3693
    %v4651 = vpack.c.b16 %v3705, %v3694
    %v4652 = vpack.c.b16 %v3717, %v3706
    %v4653 = vpack.c.b16 %v3718, %v3707
    %v4654 = vpack.c.b16 %v3719, %v3708
    %v4655 = vpack.c.b16 %v3720, %v3709
    %v4656 = vpack.c.b16 %v3721, %v3710
    %v4657 = vpack.c.b16 %v3722, %v3711
    %v4658 = vpack.c.b16 %v3723, %v3712
    %v4659 = vpack.c.b16 %v3724, %v3713
    %v4660 = vpack.c.b16 %v3725, %v3714
    %v4661 = vpack.c.b16 %v3726, %v3715
    %v4662 = vpack.c.b16 %v3727, %v3716
    %v4663 = vpack.c.b16 %v3739, %v3728
    %v4664 = vpack.c.b16 %v3740, %v3729
    %v4665 = vpack.c.b16 %v3741, %v3730
    %v4666 = vpack.c.b16 %v3742, %v3731
    %v4667 = vpack.c.b16 %v3743, %v3732
    %v4668 = vpack.c.b16 %v3744, %v3733
    %v4669 = vpack.c.b16 %v3745, %v3734
    %v4670 = vpack.c.b16 %v3746, %v3735
    %v4671 = vpack.c.b16 %v3747, %v3736
    %v4672 = vpack.c.b16 %v3748, %v3737
    %v4673 = vpack.c.b16 %v3749, %v3738
    %v4674 = vpack.c.b16 %v3761, %v3750
    %v4675 = vpack.c.b16 %v3762, %v3751
    %v4676 = vpack.c.b16 %v3763, %v3752
    %v4677 = vpack.c.b16 %v3764, %v3753
    %v4678 = vpack.c.b16 %v3765, %v3754
    %v4679 = vpack.c.b16 %v3766, %v3755
    %v4680 = vpack.c.b16 %v3767, %v3756
    %v4681 = vpack.c.b16 %v3768, %v3757
    %v4682 = vpack.c.b16 %v3769, %v3758
    %v4683 = vpack.c.b16 %v3770, %v3759
    %v4684 = vpack.c.b16 %v3771, %v3760
    %v4685 = vpack.c.b16 %v3783, %v3772
    %v4686 = vpack.c.b16 %v3784, %v3773
    %v4687 = vpack.c.b16 %v3785, %v3774
    %v4688 = vpack.c.b16 %v3786, %v3775
    %v4689 = vpack.c.b16 %v3787, %v3776
    %v4690 = vpack.c.b16 %v3788, %v3777
    %v4691 = vpack.c.b16 %v3789, %v3778
    %v4692 = vpack.c.b16 %v3790, %v3779
    %v4693 = vpack.c.b16 %v3791, %v3780
    %v4694 = vpack.c.b16 %v3792, %v3781
    %v4695 = vpack.c.b16 %v3793, %v3782
    %v4696 = vpack.c.b16 %v3805, %v3794
    %v4697 = vpack.c.b16 %v3806, %v3795
    %v4698 = vpack.c.b16 %v3807, %v3796
    %v4699 = vpack.c.b16 %v3808, %v3797
    %v4700 = vpack.c.b16 %v3809, %v3798
    %v4701 = vpack.c.b16 %v3810, %v3799
    %v4702 = vpack.c.b16 %v3811, %v3800
    %v4703 = vpack.c.b16 %v3812, %v3801
    %v4704 = vpack.c.b16 %v3813, %v3802
    %v4705 = vpack.c.b16 %v3814, %v3803
    %v4706 = vpack.c.b16 %v3815, %v3804
    %v4707 = vpack.c.b16 %v3827, %v3816
    %v4708 = vpack.c.b16 %v3828, %v3817
    %v4709 = vpack.c.b16 %v3829, %v3818
    %v4710 = vpack.c.b16 %v3830, %v3819
    %v4711 = vpack.c.b16 %v3831, %v3820
    %v4712 = vpack.c.b16 %v3832, %v3821
    %v4713 = vpack.c.b16 %v3833, %v3822
    %v4714 = vpack.c.b16 %v3834, %v3823
    %v4715 = vpack.c.b16 %v3835, %v3824
    %v4716 = vpack.c.b16 %v3836, %v3825
    %v4717 = vpack.c.b16 %v3837, %v3826
    %5598 = vmatprep.subr.bf16.mxu0 %v3839
    %5599 = vmatpush1.bf16.msra.mxu0 %v3838
    %5600 = vmatprep.subr.bf16.mxu0 %v3850
    %5601 = vmatpush1.bf16.msra.mxu0 %v3849
    %5602 = vmatprep.subr.bf16.mxu0 %v3861
    %5603 = vmatpush1.bf16.msra.mxu0 %v3860
    %5604 = vmatprep.subr.bf16.mxu0 %v3872
    %5605 = vmatpush1.bf16.msra.mxu0 %v3871
    %5606 = vmatprep.subr.bf16.mxu0 %v3883
    %5607 = vmatpush1.bf16.msra.mxu0 %v3882
    %5608 = vmatprep.subr.bf16.mxu0 %v3894
    %5609 = vmatpush1.bf16.msra.mxu0 %v3893
    %5610 = vmatprep.subr.bf16.mxu0 %v3905
    %5611 = vmatpush1.bf16.msra.mxu0 %v3904
    %5612 = vmatprep.subr.bf16.mxu0 %v3916
    %5613 = vmatpush1.bf16.msra.mxu0 %v3915
    %5614 = vmatprep.subr.bf16.mxu0 %v3927
    %5615 = vmatpush1.bf16.msra.mxu0 %v3926
    %5616 = vmatprep.subr.bf16.mxu0 %v3938
    %5617 = vmatpush1.bf16.msra.mxu0 %v3937
    %5618 = vmatprep.subr.bf16.mxu0 %v3949
    %5619 = vmatpush1.bf16.msra.mxu0 %v3948
    %5620 = vmatprep.subr.bf16.mxu0 %v3960
    %5621 = vmatpush1.bf16.msra.mxu0 %v3959
    %5622 = vmatprep.subr.bf16.mxu0 %v3971
    %5623 = vmatpush1.bf16.msra.mxu0 %v3970
    %5624 = vmatprep.subr.bf16.mxu0 %v3982
    %5625 = vmatpush1.bf16.msra.mxu0 %v3981
    %5626 = vmatprep.subr.bf16.mxu0 %v3993
    %5627 = vmatpush1.bf16.msra.mxu0 %v3992
    %5628 = vmatprep.subr.bf16.mxu0 %v4004
    %5629 = vmatpush1.bf16.msra.mxu0 %v4003
    %5630 = vmatprep.mubr.bf16.mxu0 %v1081
    %5631 = vmatmul.mubr.bf16.gmra.mrb[0].mxu0 %v1073
    %v5632 = vpop.f32.mrb[0].mxu0
    %v5633 = vadd.f32 %v1011, %v5632
    %v5634 = vpop.f32.mrb[0].mxu0
    %v5635 = vadd.f32 %v1015, %v5634
    %v5636 = vpop.f32.mrb[0].mxu0
    %v5637 = vpop.f32.mrb[0].mxu0
    %5638 = vdwg.mxu0
    %5639 = vmatprep.subr.bf16.mxu0 %v4015
    %5640 = vmatpush1.bf16.msra.mxu0 %v4014
    %5641 = vmatprep.subr.bf16.mxu0 %v4026
    %5642 = vmatpush1.bf16.msra.mxu0 %v4025
    %5643 = vmatprep.subr.bf16.mxu0 %v4037
    %5644 = vmatpush1.bf16.msra.mxu0 %v4036
    %5645 = vmatprep.subr.bf16.mxu0 %v4048
    %5646 = vmatpush1.bf16.msra.mxu0 %v4047
    %5647 = vmatprep.subr.bf16.mxu0 %v4059
    %5648 = vmatpush1.bf16.msra.mxu0 %v4058
    %5649 = vmatprep.subr.bf16.mxu0 %v4070
    %5650 = vmatpush1.bf16.msra.mxu0 %v4069
    %5651 = vmatprep.subr.bf16.mxu0 %v4081
    %5652 = vmatpush1.bf16.msra.mxu0 %v4080
    %5653 = vmatprep.subr.bf16.mxu0 %v4092
    %5654 = vmatpush1.bf16.msra.mxu0 %v4091
    %5655 = vmatprep.subr.bf16.mxu0 %v4103
    %5656 = vmatpush1.bf16.msra.mxu0 %v4102
    %5657 = vmatprep.subr.bf16.mxu0 %v4114
    %5658 = vmatpush1.bf16.msra.mxu0 %v4113
    %5659 = vmatprep.subr.bf16.mxu0 %v4125
    %5660 = vmatpush1.bf16.msra.mxu0 %v4124
    %5661 = vmatprep.subr.bf16.mxu0 %v4136
    %5662 = vmatpush1.bf16.msra.mxu0 %v4135
    %5663 = vmatprep.subr.bf16.mxu0 %v4147
    %5664 = vmatpush1.bf16.msra.mxu0 %v4146
    %5665 = vmatprep.subr.bf16.mxu0 %v4158
    %5666 = vmatpush1.bf16.msra.mxu0 %v4157
    %5667 = vmatprep.subr.bf16.mxu0 %v4169
    %5668 = vmatpush1.bf16.msra.mxu0 %v4168
    %5669 = vmatprep.subr.bf16.mxu0 %v4180
    %5670 = vmatpush1.bf16.msra.mxu0 %v4179
    %5671 = vmatprep.mubr.bf16.mxu0 %v1082
    %5672 = vmatmul.mubr.bf16.gmra.mrb[0].mxu0 %v1080
    %v5673 = vpop.f32.mrb[0].mxu0
    %v5674 = vadd.f32 %v5633, %v5673
    %v5675 = vpop.f32.mrb[0].mxu0
    %v5676 = vadd.f32 %v5635, %v5675
    %v5677 = vpop.f32.mrb[0].mxu0
    %v5678 = vpop.f32.mrb[0].mxu0
    %5679 = vdwg.mxu0
    %5680 = vmatprep.subr.bf16.mxu0 %v4191
    %5681 = vmatpush1.bf16.msra.mxu0 %v4190
    %5682 = vmatprep.subr.bf16.mxu0 %v4202
    %5683 = vmatpush1.bf16.msra.mxu0 %v4201
    %5684 = vmatprep.subr.bf16.mxu0 %v4213
    %5685 = vmatpush1.bf16.msra.mxu0 %v4212
    %5686 = vmatprep.subr.bf16.mxu0 %v4224
    %5687 = vmatpush1.bf16.msra.mxu0 %v4223
    %5688 = vmatprep.subr.bf16.mxu0 %v4235
    %5689 = vmatpush1.bf16.msra.mxu0 %v4234
    %5690 = vmatprep.subr.bf16.mxu0 %v4246
    %5691 = vmatpush1.bf16.msra.mxu0 %v4245
    %5692 = vmatprep.subr.bf16.mxu0 %v4257
    %5693 = vmatpush1.bf16.msra.mxu0 %v4256
    %5694 = vmatprep.subr.bf16.mxu0 %v4268
    %5695 = vmatpush1.bf16.msra.mxu0 %v4267
    %5696 = vmatprep.subr.bf16.mxu0 %v4279
    %5697 = vmatpush1.bf16.msra.mxu0 %v4278
    %5698 = vmatprep.subr.bf16.mxu0 %v4290
    %5699 = vmatpush1.bf16.msra.mxu0 %v4289
    %5700 = vmatprep.subr.bf16.mxu0 %v4301
    %5701 = vmatpush1.bf16.msra.mxu0 %v4300
    %5702 = vmatprep.subr.bf16.mxu0 %v4312
    %5703 = vmatpush1.bf16.msra.mxu0 %v4311
    %5704 = vmatprep.subr.bf16.mxu0 %v4323
    %5705 = vmatpush1.bf16.msra.mxu0 %v4322
    %5706 = vmatprep.subr.bf16.mxu0 %v4334
    %5707 = vmatpush1.bf16.msra.mxu0 %v4333
    %5708 = vmatprep.subr.bf16.mxu0 %v4345
    %5709 = vmatpush1.bf16.msra.mxu0 %v4344
    %5710 = vmatprep.subr.bf16.mxu0 %v4356
    %5711 = vmatpush1.bf16.msra.mxu0 %v4355
    %5712 = vmatprep.mubr.bf16.mxu0 %v1098
    %5713 = vmatmul.mubr.bf16.gmra.mrb[0].mxu0 %v1090
    %v5714 = vpop.f32.mrb[0].mxu0
    %v5715 = vadd.f32 %v5674, %v5714
    %v5716 = vpop.f32.mrb[0].mxu0
    %v5717 = vadd.f32 %v5676, %v5716
    %v5718 = vpop.f32.mrb[0].mxu0
    %v5719 = vpop.f32.mrb[0].mxu0
    %5720 = vdwg.mxu0
    %5721 = vmatprep.subr.bf16.mxu0 %v4367
    %5722 = vmatpush1.bf16.msra.mxu0 %v4366
    %5723 = vmatprep.subr.bf16.mxu0 %v4378
    %5724 = vmatpush1.bf16.msra.mxu0 %v4377
    %5725 = vmatprep.subr.bf16.mxu0 %v4389
    %5726 = vmatpush1.bf16.msra.mxu0 %v4388
    %5727 = vmatprep.subr.bf16.mxu0 %v4400
    %5728 = vmatpush1.bf16.msra.mxu0 %v4399
    %5729 = vmatprep.subr.bf16.mxu0 %v4411
    %5730 = vmatpush1.bf16.msra.mxu0 %v4410
    %5731 = vmatprep.subr.bf16.mxu0 %v4422
    %5732 = vmatpush1.bf16.msra.mxu0 %v4421
    %5733 = vmatprep.subr.bf16.mxu0 %v4433
    %5734 = vmatpush1.bf16.msra.mxu0 %v4432
    %5735 = vmatprep.subr.bf16.mxu0 %v4444
    %5736 = vmatpush1.bf16.msra.mxu0 %v4443
    %5737 = vmatprep.subr.bf16.mxu0 %v4455
    %5738 = vmatpush1.bf16.msra.mxu0 %v4454
    %5739 = vmatprep.subr.bf16.mxu0 %v4466
    %5740 = vmatpush1.bf16.msra.mxu0 %v4465
    %5741 = vmatprep.subr.bf16.mxu0 %v4477
    %5742 = vmatpush1.bf16.msra.mxu0 %v4476
    %5743 = vmatprep.subr.bf16.mxu0 %v4488
    %5744 = vmatpush1.bf16.msra.mxu0 %v4487
    %5745 = vmatprep.subr.bf16.mxu0 %v4499
    %5746 = vmatpush1.bf16.msra.mxu0 %v4498
    %5747 = vmatprep.subr.bf16.mxu0 %v4510
    %5748 = vmatpush1.bf16.msra.mxu0 %v4509
    %5749 = vmatprep.subr.bf16.mxu0 %v4521
    %5750 = vmatpush1.bf16.msra.mxu0 %v4520
    %5751 = vmatprep.subr.bf16.mxu0 %v4532
    %5752 = vmatpush1.bf16.msra.mxu0 %v4531
    %5753 = vmatprep.mubr.bf16.mxu0 %v1099
    %5754 = vmatmul.mubr.bf16.gmra.mrb[0].mxu0 %v1097
    %v5755 = vpop.f32.mrb[0].mxu0
    %v5756 = vadd.f32 %v5715, %v5755
    %v5757 = vpop.f32.mrb[0].mxu0
    %v5758 = vadd.f32 %v5717, %v5757
    %v5759 = vpop.f32.mrb[0].mxu0
    %v5760 = vpop.f32.mrb[0].mxu0
    %5761 = vdwg.mxu0
    %5762 = vmatprep.subr.bf16.mxu0 %v4543
    %5763 = vmatpush1.bf16.msra.mxu0 %v4542
    %5764 = vmatprep.subr.bf16.mxu0 %v4554
    %5765 = vmatpush1.bf16.msra.mxu0 %v4553
    %5766 = vmatprep.subr.bf16.mxu0 %v4565
    %5767 = vmatpush1.bf16.msra.mxu0 %v4564
    %5768 = vmatprep.subr.bf16.mxu0 %v4576
    %5769 = vmatpush1.bf16.msra.mxu0 %v4575
    %5770 = vmatprep.subr.bf16.mxu0 %v4587
    %5771 = vmatpush1.bf16.msra.mxu0 %v4586
    %5772 = vmatprep.subr.bf16.mxu0 %v4598
    %5773 = vmatpush1.bf16.msra.mxu0 %v4597
    %5774 = vmatprep.subr.bf16.mxu0 %v4609
    %5775 = vmatpush1.bf16.msra.mxu0 %v4608
    %5776 = vmatprep.subr.bf16.mxu0 %v4620
    %5777 = vmatpush1.bf16.msra.mxu0 %v4619
    %5778 = vmatprep.subr.bf16.mxu0 %v4631
    %5779 = vmatpush1.bf16.msra.mxu0 %v4630
    %5780 = vmatprep.subr.bf16.mxu0 %v4642
    %5781 = vmatpush1.bf16.msra.mxu0 %v4641
    %5782 = vmatprep.subr.bf16.mxu0 %v4653
    %5783 = vmatpush1.bf16.msra.mxu0 %v4652
    %5784 = vmatprep.subr.bf16.mxu0 %v4664
    %5785 = vmatpush1.bf16.msra.mxu0 %v4663
    %5786 = vmatprep.subr.bf16.mxu0 %v4675
    %5787 = vmatpush1.bf16.msra.mxu0 %v4674
    %5788 = vmatprep.subr.bf16.mxu0 %v4686
    %5789 = vmatpush1.bf16.msra.mxu0 %v4685
    %5790 = vmatprep.subr.bf16.mxu0 %v4697
    %5791 = vmatpush1.bf16.msra.mxu0 %v4696
    %5792 = vmatprep.subr.bf16.mxu0 %v4708
    %5793 = vmatpush1.bf16.msra.mxu0 %v4707
    %5794 = vmatprep.mubr.bf16.mxu0 %v1107
    %5795 = vmatmul.mubr.bf16.gmra.mrb[0].mxu0 %v1106
    %v5796 = vpop.f32.mrb[0].mxu0
    %v5797 = vadd.f32 %v5756, %v5796
    %v5798 = vpop.f32.mrb[0].mxu0
    %v5799 = vadd.f32 %v5758, %v5798
    %v5800 = vpop.f32.mrb[0].mxu0
    %v5801 = vpop.f32.mrb[0].mxu0
    %5802 = vdwg.mxu0
    %5803 = vmatprep.subr.bf16.mxu0 %v3841
    %5804 = vmatpush1.bf16.msra.mxu0 %v3840
    %5805 = vmatprep.subr.bf16.mxu0 %v3852
    %5806 = vmatpush1.bf16.msra.mxu0 %v3851
    %5807 = vmatprep.subr.bf16.mxu0 %v3863
    %5808 = vmatpush1.bf16.msra.mxu0 %v3862
    %5809 = vmatprep.subr.bf16.mxu0 %v3874
    %5810 = vmatpush1.bf16.msra.mxu0 %v3873
    %5811 = vmatprep.subr.bf16.mxu0 %v3885
    %5812 = vmatpush1.bf16.msra.mxu0 %v3884
    %5813 = vmatprep.subr.bf16.mxu0 %v3896
    %5814 = vmatpush1.bf16.msra.mxu0 %v3895
    %5815 = vmatprep.subr.bf16.mxu0 %v3907
    %5816 = vmatpush1.bf16.msra.mxu0 %v3906
    %5817 = vmatprep.subr.bf16.mxu0 %v3918
    %5818 = vmatpush1.bf16.msra.mxu0 %v3917
    %5819 = vmatprep.subr.bf16.mxu0 %v3929
    %5820 = vmatpush1.bf16.msra.mxu0 %v3928
    %5821 = vmatprep.subr.bf16.mxu0 %v3940
    %5822 = vmatpush1.bf16.msra.mxu0 %v3939
    %5823 = vmatprep.subr.bf16.mxu0 %v3951
    %5824 = vmatpush1.bf16.msra.mxu0 %v3950
    %5825 = vmatprep.subr.bf16.mxu0 %v3962
    %5826 = vmatpush1.bf16.msra.mxu0 %v3961
    %5827 = vmatprep.subr.bf16.mxu0 %v3973
    %5828 = vmatpush1.bf16.msra.mxu0 %v3972
    %5829 = vmatprep.subr.bf16.mxu0 %v3984
    %5830 = vmatpush1.bf16.msra.mxu0 %v3983
    %5831 = vmatprep.subr.bf16.mxu0 %v3995
    %5832 = vmatpush1.bf16.msra.mxu0 %v3994
    %5833 = vmatprep.subr.bf16.mxu0 %v4006
    %5834 = vmatpush1.bf16.msra.mxu0 %v4005
    %5835 = vmatprep.mubr.bf16.mxu0 %v1081
    %5836 = vmatmul.mubr.bf16.gmra.mrb[0].mxu0 %v1073
    %v5837 = vpop.f32.mrb[0].mxu0
    %v5838 = vadd.f32 %v1019, %v5837
    %v5839 = vpop.f32.mrb[0].mxu0
    %v5840 = vadd.f32 %v1023, %v5839
    %v5841 = vpop.f32.mrb[0].mxu0
    %v5842 = vpop.f32.mrb[0].mxu0
    %5843 = vdwg.mxu0
    %5844 = vmatprep.subr.bf16.mxu0 %v4017
    %5845 = vmatpush1.bf16.msra.mxu0 %v4016
    %5846 = vmatprep.subr.bf16.mxu0 %v4028
    %5847 = vmatpush1.bf16.msra.mxu0 %v4027
    %5848 = vmatprep.subr.bf16.mxu0 %v4039
    %5849 = vmatpush1.bf16.msra.mxu0 %v4038
    %5850 = vmatprep.subr.bf16.mxu0 %v4050
    %5851 = vmatpush1.bf16.msra.mxu0 %v4049
    %5852 = vmatprep.subr.bf16.mxu0 %v4061
    %5853 = vmatpush1.bf16.msra.mxu0 %v4060
    %5854 = vmatprep.subr.bf16.mxu0 %v4072
    %5855 = vmatpush1.bf16.msra.mxu0 %v4071
    %5856 = vmatprep.subr.bf16.mxu0 %v4083
    %5857 = vmatpush1.bf16.msra.mxu0 %v4082
    %5858 = vmatprep.subr.bf16.mxu0 %v4094
    %5859 = vmatpush1.bf16.msra.mxu0 %v4093
    %5860 = vmatprep.subr.bf16.mxu0 %v4105
    %5861 = vmatpush1.bf16.msra.mxu0 %v4104
    %5862 = vmatprep.subr.bf16.mxu0 %v4116
    %5863 = vmatpush1.bf16.msra.mxu0 %v4115
    %5864 = vmatprep.subr.bf16.mxu0 %v4127
    %5865 = vmatpush1.bf16.msra.mxu0 %v4126
    %5866 = vmatprep.subr.bf16.mxu0 %v4138
    %5867 = vmatpush1.bf16.msra.mxu0 %v4137
    %5868 = vmatprep.subr.bf16.mxu0 %v4149
    %5869 = vmatpush1.bf16.msra.mxu0 %v4148
    %5870 = vmatprep.subr.bf16.mxu0 %v4160
    %5871 = vmatpush1.bf16.msra.mxu0 %v4159
    %5872 = vmatprep.subr.bf16.mxu0 %v4171
    %5873 = vmatpush1.bf16.msra.mxu0 %v4170
    %5874 = vmatprep.subr.bf16.mxu0 %v4182
    %5875 = vmatpush1.bf16.msra.mxu0 %v4181
    %5876 = vmatprep.mubr.bf16.mxu0 %v1082
    %5877 = vmatmul.mubr.bf16.gmra.mrb[0].mxu0 %v1080
    %v5878 = vpop.f32.mrb[0].mxu0
    %v5879 = vadd.f32 %v5838, %v5878
    %v5880 = vpop.f32.mrb[0].mxu0
    %v5881 = vadd.f32 %v5840, %v5880
    %v5882 = vpop.f32.mrb[0].mxu0
    %v5883 = vpop.f32.mrb[0].mxu0
    %5884 = vdwg.mxu0
    %5885 = vmatprep.subr.bf16.mxu0 %v4193
    %5886 = vmatpush1.bf16.msra.mxu0 %v4192
    %5887 = vmatprep.subr.bf16.mxu0 %v4204
    %5888 = vmatpush1.bf16.msra.mxu0 %v4203
    %5889 = vmatprep.subr.bf16.mxu0 %v4215
    %5890 = vmatpush1.bf16.msra.mxu0 %v4214
    %5891 = vmatprep.subr.bf16.mxu0 %v4226
    %5892 = vmatpush1.bf16.msra.mxu0 %v4225
    %5893 = vmatprep.subr.bf16.mxu0 %v4237
    %5894 = vmatpush1.bf16.msra.mxu0 %v4236
    %5895 = vmatprep.subr.bf16.mxu0 %v4248
    %5896 = vmatpush1.bf16.msra.mxu0 %v4247
    %5897 = vmatprep.subr.bf16.mxu0 %v4259
    %5898 = vmatpush1.bf16.msra.mxu0 %v4258
    %5899 = vmatprep.subr.bf16.mxu0 %v4270
    %5900 = vmatpush1.bf16.msra.mxu0 %v4269
    %5901 = vmatprep.subr.bf16.mxu0 %v4281
    %5902 = vmatpush1.bf16.msra.mxu0 %v4280
    %5903 = vmatprep.subr.bf16.mxu0 %v4292
    %5904 = vmatpush1.bf16.msra.mxu0 %v4291
    %5905 = vmatprep.subr.bf16.mxu0 %v4303
    %5906 = vmatpush1.bf16.msra.mxu0 %v4302
    %5907 = vmatprep.subr.bf16.mxu0 %v4314
    %5908 = vmatpush1.bf16.msra.mxu0 %v4313
    %5909 = vmatprep.subr.bf16.mxu0 %v4325
    %5910 = vmatpush1.bf16.msra.mxu0 %v4324
    %5911 = vmatprep.subr.bf16.mxu0 %v4336
    %5912 = vmatpush1.bf16.msra.mxu0 %v4335
    %5913 = vmatprep.subr.bf16.mxu0 %v4347
    %5914 = vmatpush1.bf16.msra.mxu0 %v4346
    %5915 = vmatprep.subr.bf16.mxu0 %v4358
    %5916 = vmatpush1.bf16.msra.mxu0 %v4357
    %5917 = vmatprep.mubr.bf16.mxu0 %v1098
    %5918 = vmatmul.mubr.bf16.gmra.mrb[0].mxu0 %v1090
    %v5919 = vpop.f32.mrb[0].mxu0
    %v5920 = vadd.f32 %v5879, %v5919
    %v5921 = vpop.f32.mrb[0].mxu0
    %v5922 = vadd.f32 %v5881, %v5921
    %v5923 = vpop.f32.mrb[0].mxu0
    %v5924 = vpop.f32.mrb[0].mxu0
    %5925 = vdwg.mxu0
    %5926 = vmatprep.subr.bf16.mxu0 %v4369
    %5927 = vmatpush1.bf16.msra.mxu0 %v4368
    %5928 = vmatprep.subr.bf16.mxu0 %v4380
    %5929 = vmatpush1.bf16.msra.mxu0 %v4379
    %5930 = vmatprep.subr.bf16.mxu0 %v4391
    %5931 = vmatpush1.bf16.msra.mxu0 %v4390
    %5932 = vmatprep.subr.bf16.mxu0 %v4402
    %5933 = vmatpush1.bf16.msra.mxu0 %v4401
    %5934 = vmatprep.subr.bf16.mxu0 %v4413
    %5935 = vmatpush1.bf16.msra.mxu0 %v4412
    %5936 = vmatprep.subr.bf16.mxu0 %v4424
    %5937 = vmatpush1.bf16.msra.mxu0 %v4423
    %5938 = vmatprep.subr.bf16.mxu0 %v4435
    %5939 = vmatpush1.bf16.msra.mxu0 %v4434
    %5940 = vmatprep.subr.bf16.mxu0 %v4446
    %5941 = vmatpush1.bf16.msra.mxu0 %v4445
    %5942 = vmatprep.subr.bf16.mxu0 %v4457
    %5943 = vmatpush1.bf16.msra.mxu0 %v4456
    %5944 = vmatprep.subr.bf16.mxu0 %v4468
    %5945 = vmatpush1.bf16.msra.mxu0 %v4467
    %5946 = vmatprep.subr.bf16.mxu0 %v4479
    %5947 = vmatpush1.bf16.msra.mxu0 %v4478
    %5948 = vmatprep.subr.bf16.mxu0 %v4490
    %5949 = vmatpush1.bf16.msra.mxu0 %v4489
    %5950 = vmatprep.subr.bf16.mxu0 %v4501
    %5951 = vmatpush1.bf16.msra.mxu0 %v4500
    %5952 = vmatprep.subr.bf16.mxu0 %v4512
    %5953 = vmatpush1.bf16.msra.mxu0 %v4511
    %5954 = vmatprep.subr.bf16.mxu0 %v4523
    %5955 = vmatpush1.bf16.msra.mxu0 %v4522
    %5956 = vmatprep.subr.bf16.mxu0 %v4534
    %5957 = vmatpush1.bf16.msra.mxu0 %v4533
    %5958 = vmatprep.mubr.bf16.mxu0 %v1099
    %5959 = vmatmul.mubr.bf16.gmra.mrb[0].mxu0 %v1097
    %v5960 = vpop.f32.mrb[0].mxu0
    %v5961 = vadd.f32 %v5920, %v5960
    %v5962 = vpop.f32.mrb[0].mxu0
    %v5963 = vadd.f32 %v5922, %v5962
    %v5964 = vpop.f32.mrb[0].mxu0
    %v5965 = vpop.f32.mrb[0].mxu0
    %5966 = vdwg.mxu0
    %5967 = vmatprep.subr.bf16.mxu0 %v4545
    %5968 = vmatpush1.bf16.msra.mxu0 %v4544
    %5969 = vmatprep.subr.bf16.mxu0 %v4556
    %5970 = vmatpush1.bf16.msra.mxu0 %v4555
    %5971 = vmatprep.subr.bf16.mxu0 %v4567
    %5972 = vmatpush1.bf16.msra.mxu0 %v4566
    %5973 = vmatprep.subr.bf16.mxu0 %v4578
    %5974 = vmatpush1.bf16.msra.mxu0 %v4577
    %5975 = vmatprep.subr.bf16.mxu0 %v4589
    %5976 = vmatpush1.bf16.msra.mxu0 %v4588
    %5977 = vmatprep.subr.bf16.mxu0 %v4600
    %5978 = vmatpush1.bf16.msra.mxu0 %v4599
    %5979 = vmatprep.subr.bf16.mxu0 %v4611
    %5980 = vmatpush1.bf16.msra.mxu0 %v4610
    %5981 = vmatprep.subr.bf16.mxu0 %v4622
    %5982 = vmatpush1.bf16.msra.mxu0 %v4621
    %5983 = vmatprep.subr.bf16.mxu0 %v4633
    %5984 = vmatpush1.bf16.msra.mxu0 %v4632
    %5985 = vmatprep.subr.bf16.mxu0 %v4644
    %5986 = vmatpush1.bf16.msra.mxu0 %v4643
    %5987 = vmatprep.subr.bf16.mxu0 %v4655
    %5988 = vmatpush1.bf16.msra.mxu0 %v4654
    %5989 = vmatprep.subr.bf16.mxu0 %v4666
    %5990 = vmatpush1.bf16.msra.mxu0 %v4665
    %5991 = vmatprep.subr.bf16.mxu0 %v4677
    %5992 = vmatpush1.bf16.msra.mxu0 %v4676
    %5993 = vmatprep.subr.bf16.mxu0 %v4688
    %5994 = vmatpush1.bf16.msra.mxu0 %v4687
    %5995 = vmatprep.subr.bf16.mxu0 %v4699
    %5996 = vmatpush1.bf16.msra.mxu0 %v4698
    %5997 = vmatprep.subr.bf16.mxu0 %v4710
    %5998 = vmatpush1.bf16.msra.mxu0 %v4709
    %5999 = vmatprep.mubr.bf16.mxu0 %v1107
    %6000 = vmatmul.mubr.bf16.gmra.mrb[0].mxu0 %v1106
    %v6001 = vpop.f32.mrb[0].mxu0
    %v6002 = vadd.f32 %v5961, %v6001
    %v6003 = vpop.f32.mrb[0].mxu0
    %v6004 = vadd.f32 %v5963, %v6003
    %v6005 = vpop.f32.mrb[0].mxu0
    %v6006 = vpop.f32.mrb[0].mxu0
    %6007 = vdwg.mxu0
    %6008 = vmatprep.subr.bf16.mxu0 %v3843
    %6009 = vmatpush1.bf16.msra.mxu0 %v3842
    %6010 = vmatprep.subr.bf16.mxu0 %v3854
    %6011 = vmatpush1.bf16.msra.mxu0 %v3853
    %6012 = vmatprep.subr.bf16.mxu0 %v3865
    %6013 = vmatpush1.bf16.msra.mxu0 %v3864
    %6014 = vmatprep.subr.bf16.mxu0 %v3876
    %6015 = vmatpush1.bf16.msra.mxu0 %v3875
    %6016 = vmatprep.subr.bf16.mxu0 %v3887
    %6017 = vmatpush1.bf16.msra.mxu0 %v3886
    %6018 = vmatprep.subr.bf16.mxu0 %v3898
    %6019 = vmatpush1.bf16.msra.mxu0 %v3897
    %6020 = vmatprep.subr.bf16.mxu0 %v3909
    %6021 = vmatpush1.bf16.msra.mxu0 %v3908
    %6022 = vmatprep.subr.bf16.mxu0 %v3920
    %6023 = vmatpush1.bf16.msra.mxu0 %v3919
    %6024 = vmatprep.subr.bf16.mxu0 %v3931
    %6025 = vmatpush1.bf16.msra.mxu0 %v3930
    %6026 = vmatprep.subr.bf16.mxu0 %v3942
    %6027 = vmatpush1.bf16.msra.mxu0 %v3941
    %6028 = vmatprep.subr.bf16.mxu0 %v3953
    %6029 = vmatpush1.bf16.msra.mxu0 %v3952
    %6030 = vmatprep.subr.bf16.mxu0 %v3964
    %6031 = vmatpush1.bf16.msra.mxu0 %v3963
    %6032 = vmatprep.subr.bf16.mxu0 %v3975
    %6033 = vmatpush1.bf16.msra.mxu0 %v3974
    %6034 = vmatprep.subr.bf16.mxu0 %v3986
    %6035 = vmatpush1.bf16.msra.mxu0 %v3985
    %6036 = vmatprep.subr.bf16.mxu0 %v3997
    %6037 = vmatpush1.bf16.msra.mxu0 %v3996
    %6038 = vmatprep.subr.bf16.mxu0 %v4008
    %6039 = vmatpush1.bf16.msra.mxu0 %v4007
    %6040 = vmatprep.mubr.bf16.mxu0 %v1081
    %6041 = vmatmul.mubr.bf16.gmra.mrb[0].mxu0 %v1073
    %v6042 = vpop.f32.mrb[0].mxu0
    %v6043 = vadd.f32 %v1027, %v6042
    %v6044 = vpop.f32.mrb[0].mxu0
    %v6045 = vadd.f32 %v1031, %v6044
    %v6046 = vpop.f32.mrb[0].mxu0
    %v6047 = vpop.f32.mrb[0].mxu0
    %6048 = vdwg.mxu0
    %6049 = vmatprep.subr.bf16.mxu0 %v4019
    %6050 = vmatpush1.bf16.msra.mxu0 %v4018
    %6051 = vmatprep.subr.bf16.mxu0 %v4030
    %6052 = vmatpush1.bf16.msra.mxu0 %v4029
    %6053 = vmatprep.subr.bf16.mxu0 %v4041
    %6054 = vmatpush1.bf16.msra.mxu0 %v4040
    %6055 = vmatprep.subr.bf16.mxu0 %v4052
    %6056 = vmatpush1.bf16.msra.mxu0 %v4051
    %6057 = vmatprep.subr.bf16.mxu0 %v4063
    %6058 = vmatpush1.bf16.msra.mxu0 %v4062
    %6059 = vmatprep.subr.bf16.mxu0 %v4074
    %6060 = vmatpush1.bf16.msra.mxu0 %v4073
    %6061 = vmatprep.subr.bf16.mxu0 %v4085
    %6062 = vmatpush1.bf16.msra.mxu0 %v4084
    %6063 = vmatprep.subr.bf16.mxu0 %v4096
    %6064 = vmatpush1.bf16.msra.mxu0 %v4095
    %6065 = vmatprep.subr.bf16.mxu0 %v4107
    %6066 = vmatpush1.bf16.msra.mxu0 %v4106
    %6067 = vmatprep.subr.bf16.mxu0 %v4118
    %6068 = vmatpush1.bf16.msra.mxu0 %v4117
    %6069 = vmatprep.subr.bf16.mxu0 %v4129
    %6070 = vmatpush1.bf16.msra.mxu0 %v4128
    %6071 = vmatprep.subr.bf16.mxu0 %v4140
    %6072 = vmatpush1.bf16.msra.mxu0 %v4139
    %6073 = vmatprep.subr.bf16.mxu0 %v4151
    %6074 = vmatpush1.bf16.msra.mxu0 %v4150
    %6075 = vmatprep.subr.bf16.mxu0 %v4162
    %6076 = vmatpush1.bf16.msra.mxu0 %v4161
    %6077 = vmatprep.subr.bf16.mxu0 %v4173
    %6078 = vmatpush1.bf16.msra.mxu0 %v4172
    %6079 = vmatprep.subr.bf16.mxu0 %v4184
    %6080 = vmatpush1.bf16.msra.mxu0 %v4183
    %6081 = vmatprep.mubr.bf16.mxu0 %v1082
    %6082 = vmatmul.mubr.bf16.gmra.mrb[0].mxu0 %v1080
    %v6083 = vpop.f32.mrb[0].mxu0
    %v6084 = vadd.f32 %v6043, %v6083
    %v6085 = vpop.f32.mrb[0].mxu0
    %v6086 = vadd.f32 %v6045, %v6085
    %v6087 = vpop.f32.mrb[0].mxu0
    %v6088 = vpop.f32.mrb[0].mxu0
    %6089 = vdwg.mxu0
    %6090 = vmatprep.subr.bf16.mxu0 %v4195
    %6091 = vmatpush1.bf16.msra.mxu0 %v4194
    %6092 = vmatprep.subr.bf16.mxu0 %v4206
    %6093 = vmatpush1.bf16.msra.mxu0 %v4205
    %6094 = vmatprep.subr.bf16.mxu0 %v4217
    %6095 = vmatpush1.bf16.msra.mxu0 %v4216
    %6096 = vmatprep.subr.bf16.mxu0 %v4228
    %6097 = vmatpush1.bf16.msra.mxu0 %v4227
    %6098 = vmatprep.subr.bf16.mxu0 %v4239
    %6099 = vmatpush1.bf16.msra.mxu0 %v4238
    %6100 = vmatprep.subr.bf16.mxu0 %v4250
    %6101 = vmatpush1.bf16.msra.mxu0 %v4249
    %6102 = vmatprep.subr.bf16.mxu0 %v4261
    %6103 = vmatpush1.bf16.msra.mxu0 %v4260
    %6104 = vmatprep.subr.bf16.mxu0 %v4272
    %6105 = vmatpush1.bf16.msra.mxu0 %v4271
    %6106 = vmatprep.subr.bf16.mxu0 %v4283
    %6107 = vmatpush1.bf16.msra.mxu0 %v4282
    %6108 = vmatprep.subr.bf16.mxu0 %v4294
    %6109 = vmatpush1.bf16.msra.mxu0 %v4293
    %6110 = vmatprep.subr.bf16.mxu0 %v4305
    %6111 = vmatpush1.bf16.msra.mxu0 %v4304
    %6112 = vmatprep.subr.bf16.mxu0 %v4316
    %6113 = vmatpush1.bf16.msra.mxu0 %v4315
    %6114 = vmatprep.subr.bf16.mxu0 %v4327
    %6115 = vmatpush1.bf16.msra.mxu0 %v4326
    %6116 = vmatprep.subr.bf16.mxu0 %v4338
    %6117 = vmatpush1.bf16.msra.mxu0 %v4337
    %6118 = vmatprep.subr.bf16.mxu0 %v4349
    %6119 = vmatpush1.bf16.msra.mxu0 %v4348
    %6120 = vmatprep.subr.bf16.mxu0 %v4360
    %6121 = vmatpush1.bf16.msra.mxu0 %v4359
    %6122 = vmatprep.mubr.bf16.mxu0 %v1098
    %6123 = vmatmul.mubr.bf16.gmra.mrb[0].mxu0 %v1090
    %v6124 = vpop.f32.mrb[0].mxu0
    %v6125 = vadd.f32 %v6084, %v6124
    %v6126 = vpop.f32.mrb[0].mxu0
    %v6127 = vadd.f32 %v6086, %v6126
    %v6128 = vpop.f32.mrb[0].mxu0
    %v6129 = vpop.f32.mrb[0].mxu0
    %6130 = vdwg.mxu0
    %6131 = vmatprep.subr.bf16.mxu0 %v4371
    %6132 = vmatpush1.bf16.msra.mxu0 %v4370
    %6133 = vmatprep.subr.bf16.mxu0 %v4382
    %6134 = vmatpush1.bf16.msra.mxu0 %v4381
    %6135 = vmatprep.subr.bf16.mxu0 %v4393
    %6136 = vmatpush1.bf16.msra.mxu0 %v4392
    %6137 = vmatprep.subr.bf16.mxu0 %v4404
    %6138 = vmatpush1.bf16.msra.mxu0 %v4403
    %6139 = vmatprep.subr.bf16.mxu0 %v4415
    %6140 = vmatpush1.bf16.msra.mxu0 %v4414
    %6141 = vmatprep.subr.bf16.mxu0 %v4426
    %6142 = vmatpush1.bf16.msra.mxu0 %v4425
    %6143 = vmatprep.subr.bf16.mxu0 %v4437
    %6144 = vmatpush1.bf16.msra.mxu0 %v4436
    %6145 = vmatprep.subr.bf16.mxu0 %v4448
    %6146 = vmatpush1.bf16.msra.mxu0 %v4447
    %6147 = vmatprep.subr.bf16.mxu0 %v4459
    %6148 = vmatpush1.bf16.msra.mxu0 %v4458
    %6149 = vmatprep.subr.bf16.mxu0 %v4470
    %6150 = vmatpush1.bf16.msra.mxu0 %v4469
    %6151 = vmatprep.subr.bf16.mxu0 %v4481
    %6152 = vmatpush1.bf16.msra.mxu0 %v4480
    %6153 = vmatprep.subr.bf16.mxu0 %v4492
    %6154 = vmatpush1.bf16.msra.mxu0 %v4491
    %6155 = vmatprep.subr.bf16.mxu0 %v4503
    %6156 = vmatpush1.bf16.msra.mxu0 %v4502
    %6157 = vmatprep.subr.bf16.mxu0 %v4514
    %6158 = vmatpush1.bf16.msra.mxu0 %v4513
    %6159 = vmatprep.subr.bf16.mxu0 %v4525
    %6160 = vmatpush1.bf16.msra.mxu0 %v4524
    %6161 = vmatprep.subr.bf16.mxu0 %v4536
    %6162 = vmatpush1.bf16.msra.mxu0 %v4535
    %6163 = vmatprep.mubr.bf16.mxu0 %v1099
    %6164 = vmatmul.mubr.bf16.gmra.mrb[0].mxu0 %v1097
    %v6165 = vpop.f32.mrb[0].mxu0
    %v6166 = vadd.f32 %v6125, %v6165
    %v6167 = vpop.f32.mrb[0].mxu0
    %v6168 = vadd.f32 %v6127, %v6167
    %v6169 = vpop.f32.mrb[0].mxu0
    %v6170 = vpop.f32.mrb[0].mxu0
    %6171 = vdwg.mxu0
    %6172 = vmatprep.subr.bf16.mxu0 %v4547
    %6173 = vmatpush1.bf16.msra.mxu0 %v4546
    %6174 = vmatprep.subr.bf16.mxu0 %v4558
    %6175 = vmatpush1.bf16.msra.mxu0 %v4557
    %6176 = vmatprep.subr.bf16.mxu0 %v4569
    %6177 = vmatpush1.bf16.msra.mxu0 %v4568
    %6178 = vmatprep.subr.bf16.mxu0 %v4580
    %6179 = vmatpush1.bf16.msra.mxu0 %v4579
    %6180 = vmatprep.subr.bf16.mxu0 %v4591
    %6181 = vmatpush1.bf16.msra.mxu0 %v4590
    %6182 = vmatprep.subr.bf16.mxu0 %v4602
    %6183 = vmatpush1.bf16.msra.mxu0 %v4601
    %6184 = vmatprep.subr.bf16.mxu0 %v4613
    %6185 = vmatpush1.bf16.msra.mxu0 %v4612
    %6186 = vmatprep.subr.bf16.mxu0 %v4624
    %6187 = vmatpush1.bf16.msra.mxu0 %v4623
    %6188 = vmatprep.subr.bf16.mxu0 %v4635
    %6189 = vmatpush1.bf16.msra.mxu0 %v4634
    %6190 = vmatprep.subr.bf16.mxu0 %v4646
    %6191 = vmatpush1.bf16.msra.mxu0 %v4645
    %6192 = vmatprep.subr.bf16.mxu0 %v4657
    %6193 = vmatpush1.bf16.msra.mxu0 %v4656
    %6194 = vmatprep.subr.bf16.mxu0 %v4668
    %6195 = vmatpush1.bf16.msra.mxu0 %v4667
    %6196 = vmatprep.subr.bf16.mxu0 %v4679
    %6197 = vmatpush1.bf16.msra.mxu0 %v4678
    %6198 = vmatprep.subr.bf16.mxu0 %v4690
    %6199 = vmatpush1.bf16.msra.mxu0 %v4689
    %6200 = vmatprep.subr.bf16.mxu0 %v4701
    %6201 = vmatpush1.bf16.msra.mxu0 %v4700
    %6202 = vmatprep.subr.bf16.mxu0 %v4712
    %6203 = vmatpush1.bf16.msra.mxu0 %v4711
    %6204 = vmatprep.mubr.bf16.mxu0 %v1107
    %6205 = vmatmul.mubr.bf16.gmra.mrb[0].mxu0 %v1106
    %v6206 = vpop.f32.mrb[0].mxu0
    %v6207 = vadd.f32 %v6166, %v6206
    %v6208 = vpop.f32.mrb[0].mxu0
    %v6209 = vadd.f32 %v6168, %v6208
    %v6210 = vpop.f32.mrb[0].mxu0
    %v6211 = vpop.f32.mrb[0].mxu0
    %6212 = vdwg.mxu0
    %6213 = vmatprep.subr.bf16.mxu0 %v3845
    %6214 = vmatpush1.bf16.msra.mxu0 %v3844
    %6215 = vmatprep.subr.bf16.mxu0 %v3856
    %6216 = vmatpush1.bf16.msra.mxu0 %v3855
    %6217 = vmatprep.subr.bf16.mxu0 %v3867
    %6218 = vmatpush1.bf16.msra.mxu0 %v3866
    %6219 = vmatprep.subr.bf16.mxu0 %v3878
    %6220 = vmatpush1.bf16.msra.mxu0 %v3877
    %6221 = vmatprep.subr.bf16.mxu0 %v3889
    %6222 = vmatpush1.bf16.msra.mxu0 %v3888
    %6223 = vmatprep.subr.bf16.mxu0 %v3900
    %6224 = vmatpush1.bf16.msra.mxu0 %v3899
    %6225 = vmatprep.subr.bf16.mxu0 %v3911
    %6226 = vmatpush1.bf16.msra.mxu0 %v3910
    %6227 = vmatprep.subr.bf16.mxu0 %v3922
    %6228 = vmatpush1.bf16.msra.mxu0 %v3921
    %6229 = vmatprep.subr.bf16.mxu0 %v3933
    %6230 = vmatpush1.bf16.msra.mxu0 %v3932
    %6231 = vmatprep.subr.bf16.mxu0 %v3944
    %6232 = vmatpush1.bf16.msra.mxu0 %v3943
    %6233 = vmatprep.subr.bf16.mxu0 %v3955
    %6234 = vmatpush1.bf16.msra.mxu0 %v3954
    %6235 = vmatprep.subr.bf16.mxu0 %v3966
    %6236 = vmatpush1.bf16.msra.mxu0 %v3965
    %6237 = vmatprep.subr.bf16.mxu0 %v3977
    %6238 = vmatpush1.bf16.msra.mxu0 %v3976
    %6239 = vmatprep.subr.bf16.mxu0 %v3988
    %6240 = vmatpush1.bf16.msra.mxu0 %v3987
    %6241 = vmatprep.subr.bf16.mxu0 %v3999
    %6242 = vmatpush1.bf16.msra.mxu0 %v3998
    %6243 = vmatprep.subr.bf16.mxu0 %v4010
    %6244 = vmatpush1.bf16.msra.mxu0 %v4009
    %6245 = vmatprep.mubr.bf16.mxu0 %v1081
    %6246 = vmatmul.mubr.bf16.gmra.mrb[0].mxu0 %v1073
    %v6247 = vpop.f32.mrb[0].mxu0
    %v6248 = vadd.f32 %v1035, %v6247
    %v6249 = vpop.f32.mrb[0].mxu0
    %v6250 = vadd.f32 %v1039, %v6249
    %v6251 = vpop.f32.mrb[0].mxu0
    %v6252 = vpop.f32.mrb[0].mxu0
    %6253 = vdwg.mxu0
    %6254 = vmatprep.subr.bf16.mxu0 %v4021
    %6255 = vmatpush1.bf16.msra.mxu0 %v4020
    %6256 = vmatprep.subr.bf16.mxu0 %v4032
    %6257 = vmatpush1.bf16.msra.mxu0 %v4031
    %6258 = vmatprep.subr.bf16.mxu0 %v4043
    %6259 = vmatpush1.bf16.msra.mxu0 %v4042
    %6260 = vmatprep.subr.bf16.mxu0 %v4054
    %6261 = vmatpush1.bf16.msra.mxu0 %v4053
    %6262 = vmatprep.subr.bf16.mxu0 %v4065
    %6263 = vmatpush1.bf16.msra.mxu0 %v4064
    %6264 = vmatprep.subr.bf16.mxu0 %v4076
    %6265 = vmatpush1.bf16.msra.mxu0 %v4075
    %6266 = vmatprep.subr.bf16.mxu0 %v4087
    %6267 = vmatpush1.bf16.msra.mxu0 %v4086
    %6268 = vmatprep.subr.bf16.mxu0 %v4098
    %6269 = vmatpush1.bf16.msra.mxu0 %v4097
    %6270 = vmatprep.subr.bf16.mxu0 %v4109
    %6271 = vmatpush1.bf16.msra.mxu0 %v4108
    %6272 = vmatprep.subr.bf16.mxu0 %v4120
    %6273 = vmatpush1.bf16.msra.mxu0 %v4119
    %6274 = vmatprep.subr.bf16.mxu0 %v4131
    %6275 = vmatpush1.bf16.msra.mxu0 %v4130
    %6276 = vmatprep.subr.bf16.mxu0 %v4142
    %6277 = vmatpush1.bf16.msra.mxu0 %v4141
    %6278 = vmatprep.subr.bf16.mxu0 %v4153
    %6279 = vmatpush1.bf16.msra.mxu0 %v4152
    %6280 = vmatprep.subr.bf16.mxu0 %v4164
    %6281 = vmatpush1.bf16.msra.mxu0 %v4163
    %6282 = vmatprep.subr.bf16.mxu0 %v4175
    %6283 = vmatpush1.bf16.msra.mxu0 %v4174
    %6284 = vmatprep.subr.bf16.mxu0 %v4186
    %6285 = vmatpush1.bf16.msra.mxu0 %v4185
    %6286 = vmatprep.mubr.bf16.mxu0 %v1082
    %6287 = vmatmul.mubr.bf16.gmra.mrb[0].mxu0 %v1080
    %v6288 = vpop.f32.mrb[0].mxu0
    %v6289 = vadd.f32 %v6248, %v6288
    %v6290 = vpop.f32.mrb[0].mxu0
    %v6291 = vadd.f32 %v6250, %v6290
    %v6292 = vpop.f32.mrb[0].mxu0
    %v6293 = vpop.f32.mrb[0].mxu0
    %6294 = vdwg.mxu0
    %6295 = vmatprep.subr.bf16.mxu0 %v4197
    %6296 = vmatpush1.bf16.msra.mxu0 %v4196
    %6297 = vmatprep.subr.bf16.mxu0 %v4208
    %6298 = vmatpush1.bf16.msra.mxu0 %v4207
    %6299 = vmatprep.subr.bf16.mxu0 %v4219
    %6300 = vmatpush1.bf16.msra.mxu0 %v4218
    %6301 = vmatprep.subr.bf16.mxu0 %v4230
    %6302 = vmatpush1.bf16.msra.mxu0 %v4229
    %6303 = vmatprep.subr.bf16.mxu0 %v4241
    %6304 = vmatpush1.bf16.msra.mxu0 %v4240
    %6305 = vmatprep.subr.bf16.mxu0 %v4252
    %6306 = vmatpush1.bf16.msra.mxu0 %v4251
    %6307 = vmatprep.subr.bf16.mxu0 %v4263
    %6308 = vmatpush1.bf16.msra.mxu0 %v4262
    %6309 = vmatprep.subr.bf16.mxu0 %v4274
    %6310 = vmatpush1.bf16.msra.mxu0 %v4273
    %6311 = vmatprep.subr.bf16.mxu0 %v4285
    %6312 = vmatpush1.bf16.msra.mxu0 %v4284
    %6313 = vmatprep.subr.bf16.mxu0 %v4296
    %6314 = vmatpush1.bf16.msra.mxu0 %v4295
    %6315 = vmatprep.subr.bf16.mxu0 %v4307
    %6316 = vmatpush1.bf16.msra.mxu0 %v4306
    %6317 = vmatprep.subr.bf16.mxu0 %v4318
    %6318 = vmatpush1.bf16.msra.mxu0 %v4317
    %6319 = vmatprep.subr.bf16.mxu0 %v4329
    %6320 = vmatpush1.bf16.msra.mxu0 %v4328
    %6321 = vmatprep.subr.bf16.mxu0 %v4340
    %6322 = vmatpush1.bf16.msra.mxu0 %v4339
    %6323 = vmatprep.subr.bf16.mxu0 %v4351
    %6324 = vmatpush1.bf16.msra.mxu0 %v4350
    %6325 = vmatprep.subr.bf16.mxu0 %v4362
    %6326 = vmatpush1.bf16.msra.mxu0 %v4361
    %6327 = vmatprep.mubr.bf16.mxu0 %v1098
    %6328 = vmatmul.mubr.bf16.gmra.mrb[0].mxu0 %v1090
    %v6329 = vpop.f32.mrb[0].mxu0
    %v6330 = vadd.f32 %v6289, %v6329
    %v6331 = vpop.f32.mrb[0].mxu0
    %v6332 = vadd.f32 %v6291, %v6331
    %v6333 = vpop.f32.mrb[0].mxu0
    %v6334 = vpop.f32.mrb[0].mxu0
    %6335 = vdwg.mxu0
    %6336 = vmatprep.subr.bf16.mxu0 %v4373
    %6337 = vmatpush1.bf16.msra.mxu0 %v4372
    %6338 = vmatprep.subr.bf16.mxu0 %v4384
    %6339 = vmatpush1.bf16.msra.mxu0 %v4383
    %6340 = vmatprep.subr.bf16.mxu0 %v4395
    %6341 = vmatpush1.bf16.msra.mxu0 %v4394
    %6342 = vmatprep.subr.bf16.mxu0 %v4406
    %6343 = vmatpush1.bf16.msra.mxu0 %v4405
    %6344 = vmatprep.subr.bf16.mxu0 %v4417
    %6345 = vmatpush1.bf16.msra.mxu0 %v4416
    %6346 = vmatprep.subr.bf16.mxu0 %v4428
    %6347 = vmatpush1.bf16.msra.mxu0 %v4427
    %6348 = vmatprep.subr.bf16.mxu0 %v4439
    %6349 = vmatpush1.bf16.msra.mxu0 %v4438
    %6350 = vmatprep.subr.bf16.mxu0 %v4450
    %6351 = vmatpush1.bf16.msra.mxu0 %v4449
    %6352 = vmatprep.subr.bf16.mxu0 %v4461
    %6353 = vmatpush1.bf16.msra.mxu0 %v4460
    %6354 = vmatprep.subr.bf16.mxu0 %v4472
    %6355 = vmatpush1.bf16.msra.mxu0 %v4471
    %6356 = vmatprep.subr.bf16.mxu0 %v4483
    %6357 = vmatpush1.bf16.msra.mxu0 %v4482
    %6358 = vmatprep.subr.bf16.mxu0 %v4494
    %6359 = vmatpush1.bf16.msra.mxu0 %v4493
    %6360 = vmatprep.subr.bf16.mxu0 %v4505
    %6361 = vmatpush1.bf16.msra.mxu0 %v4504
    %6362 = vmatprep.subr.bf16.mxu0 %v4516
    %6363 = vmatpush1.bf16.msra.mxu0 %v4515
    %6364 = vmatprep.subr.bf16.mxu0 %v4527
    %6365 = vmatpush1.bf16.msra.mxu0 %v4526
    %6366 = vmatprep.subr.bf16.mxu0 %v4538
    %6367 = vmatpush1.bf16.msra.mxu0 %v4537
    %6368 = vmatprep.mubr.bf16.mxu0 %v1099
    %6369 = vmatmul.mubr.bf16.gmra.mrb[0].mxu0 %v1097
    %v6370 = vpop.f32.mrb[0].mxu0
    %v6371 = vadd.f32 %v6330, %v6370
    %v6372 = vpop.f32.mrb[0].mxu0
    %v6373 = vadd.f32 %v6332, %v6372
    %v6374 = vpop.f32.mrb[0].mxu0
    %v6375 = vpop.f32.mrb[0].mxu0
    %6376 = vdwg.mxu0
    %6377 = vmatprep.subr.bf16.mxu0 %v4549
    %6378 = vmatpush1.bf16.msra.mxu0 %v4548
    %6379 = vmatprep.subr.bf16.mxu0 %v4560
    %6380 = vmatpush1.bf16.msra.mxu0 %v4559
    %6381 = vmatprep.subr.bf16.mxu0 %v4571
    %6382 = vmatpush1.bf16.msra.mxu0 %v4570
    %6383 = vmatprep.subr.bf16.mxu0 %v4582
    %6384 = vmatpush1.bf16.msra.mxu0 %v4581
    %6385 = vmatprep.subr.bf16.mxu0 %v4593
    %6386 = vmatpush1.bf16.msra.mxu0 %v4592
    %6387 = vmatprep.subr.bf16.mxu0 %v4604
    %6388 = vmatpush1.bf16.msra.mxu0 %v4603
    %6389 = vmatprep.subr.bf16.mxu0 %v4615
    %6390 = vmatpush1.bf16.msra.mxu0 %v4614
    %6391 = vmatprep.subr.bf16.mxu0 %v4626
    %6392 = vmatpush1.bf16.msra.mxu0 %v4625
    %6393 = vmatprep.subr.bf16.mxu0 %v4637
    %6394 = vmatpush1.bf16.msra.mxu0 %v4636
    %6395 = vmatprep.subr.bf16.mxu0 %v4648
    %6396 = vmatpush1.bf16.msra.mxu0 %v4647
    %6397 = vmatprep.subr.bf16.mxu0 %v4659
    %6398 = vmatpush1.bf16.msra.mxu0 %v4658
    %6399 = vmatprep.subr.bf16.mxu0 %v4670
    %6400 = vmatpush1.bf16.msra.mxu0 %v4669
    %6401 = vmatprep.subr.bf16.mxu0 %v4681
    %6402 = vmatpush1.bf16.msra.mxu0 %v4680
    %6403 = vmatprep.subr.bf16.mxu0 %v4692
    %6404 = vmatpush1.bf16.msra.mxu0 %v4691
    %6405 = vmatprep.subr.bf16.mxu0 %v4703
    %6406 = vmatpush1.bf16.msra.mxu0 %v4702
    %6407 = vmatprep.subr.bf16.mxu0 %v4714
    %6408 = vmatpush1.bf16.msra.mxu0 %v4713
    %6409 = vmatprep.mubr.bf16.mxu0 %v1107
    %6410 = vmatmul.mubr.bf16.gmra.mrb[0].mxu0 %v1106
    %v6411 = vpop.f32.mrb[0].mxu0
    %v6412 = vadd.f32 %v6371, %v6411
    %v6413 = vpop.f32.mrb[0].mxu0
    %v6414 = vadd.f32 %v6373, %v6413
    %v6415 = vpop.f32.mrb[0].mxu0
    %v6416 = vpop.f32.mrb[0].mxu0
    %6417 = vdwg.mxu0
    %6418 = vmatprep.subr.bf16.mxu0 %v3847
    %6419 = vmatpush1.bf16.msra.mxu0 %v3846
    %6420 = vmatprep.subr.bf16.mxu0 %v3858
    %6421 = vmatpush1.bf16.msra.mxu0 %v3857
    %6422 = vmatprep.subr.bf16.mxu0 %v3869
    %6423 = vmatpush1.bf16.msra.mxu0 %v3868
    %6424 = vmatprep.subr.bf16.mxu0 %v3880
    %6425 = vmatpush1.bf16.msra.mxu0 %v3879
    %6426 = vmatprep.subr.bf16.mxu0 %v3891
    %6427 = vmatpush1.bf16.msra.mxu0 %v3890
    %6428 = vmatprep.subr.bf16.mxu0 %v3902
    %6429 = vmatpush1.bf16.msra.mxu0 %v3901
    %6430 = vmatprep.subr.bf16.mxu0 %v3913
    %6431 = vmatpush1.bf16.msra.mxu0 %v3912
    %6432 = vmatprep.subr.bf16.mxu0 %v3924
    %6433 = vmatpush1.bf16.msra.mxu0 %v3923
    %6434 = vmatprep.subr.bf16.mxu0 %v3935
    %6435 = vmatpush1.bf16.msra.mxu0 %v3934
    %6436 = vmatprep.subr.bf16.mxu0 %v3946
    %6437 = vmatpush1.bf16.msra.mxu0 %v3945
    %6438 = vmatprep.subr.bf16.mxu0 %v3957
    %6439 = vmatpush1.bf16.msra.mxu0 %v3956
    %6440 = vmatprep.subr.bf16.mxu0 %v3968
    %6441 = vmatpush1.bf16.msra.mxu0 %v3967
    %6442 = vmatprep.subr.bf16.mxu0 %v3979
    %6443 = vmatpush1.bf16.msra.mxu0 %v3978
    %6444 = vmatprep.subr.bf16.mxu0 %v3990
    %6445 = vmatpush1.bf16.msra.mxu0 %v3989
    %6446 = vmatprep.subr.bf16.mxu0 %v4001
    %6447 = vmatpush1.bf16.msra.mxu0 %v4000
    %6448 = vmatprep.subr.bf16.mxu0 %v4012
    %6449 = vmatpush1.bf16.msra.mxu0 %v4011
    %6450 = vmatprep.mubr.bf16.mxu0 %v1081
    %6451 = vmatmul.mubr.bf16.gmra.mrb[0].mxu0 %v1073
    %v6452 = vpop.f32.mrb[0].mxu0
    %v6453 = vadd.f32 %v1043, %v6452
    %v6454 = vpop.f32.mrb[0].mxu0
    %v6455 = vadd.f32 %v1047, %v6454
    %v6456 = vpop.f32.mrb[0].mxu0
    %v6457 = vpop.f32.mrb[0].mxu0
    %6458 = vdwg.mxu0
    %6459 = vmatprep.subr.bf16.mxu0 %v4023
    %6460 = vmatpush1.bf16.msra.mxu0 %v4022
    %6461 = vmatprep.subr.bf16.mxu0 %v4034
    %6462 = vmatpush1.bf16.msra.mxu0 %v4033
    %6463 = vmatprep.subr.bf16.mxu0 %v4045
    %6464 = vmatpush1.bf16.msra.mxu0 %v4044
    %6465 = vmatprep.subr.bf16.mxu0 %v4056
    %6466 = vmatpush1.bf16.msra.mxu0 %v4055
    %6467 = vmatprep.subr.bf16.mxu0 %v4067
    %6468 = vmatpush1.bf16.msra.mxu0 %v4066
    %6469 = vmatprep.subr.bf16.mxu0 %v4078
    %6470 = vmatpush1.bf16.msra.mxu0 %v4077
    %6471 = vmatprep.subr.bf16.mxu0 %v4089
    %6472 = vmatpush1.bf16.msra.mxu0 %v4088
    %6473 = vmatprep.subr.bf16.mxu0 %v4100
    %6474 = vmatpush1.bf16.msra.mxu0 %v4099
    %6475 = vmatprep.subr.bf16.mxu0 %v4111
    %6476 = vmatpush1.bf16.msra.mxu0 %v4110
    %6477 = vmatprep.subr.bf16.mxu0 %v4122
    %6478 = vmatpush1.bf16.msra.mxu0 %v4121
    %6479 = vmatprep.subr.bf16.mxu0 %v4133
    %6480 = vmatpush1.bf16.msra.mxu0 %v4132
    %6481 = vmatprep.subr.bf16.mxu0 %v4144
    %6482 = vmatpush1.bf16.msra.mxu0 %v4143
    %6483 = vmatprep.subr.bf16.mxu0 %v4155
    %6484 = vmatpush1.bf16.msra.mxu0 %v4154
    %6485 = vmatprep.subr.bf16.mxu0 %v4166
    %6486 = vmatpush1.bf16.msra.mxu0 %v4165
    %6487 = vmatprep.subr.bf16.mxu0 %v4177
    %6488 = vmatpush1.bf16.msra.mxu0 %v4176
    %6489 = vmatprep.subr.bf16.mxu0 %v4188
    %6490 = vmatpush1.bf16.msra.mxu0 %v4187
    %6491 = vmatprep.mubr.bf16.mxu0 %v1082
    %6492 = vmatmul.mubr.bf16.gmra.mrb[0].mxu0 %v1080
    %v6493 = vpop.f32.mrb[0].mxu0
    %v6494 = vadd.f32 %v6453, %v6493
    %v6495 = vpop.f32.mrb[0].mxu0
    %v6496 = vadd.f32 %v6455, %v6495
    %v6497 = vpop.f32.mrb[0].mxu0
    %v6498 = vpop.f32.mrb[0].mxu0
    %6499 = vdwg.mxu0
    %6500 = vmatprep.subr.bf16.mxu0 %v4199
    %6501 = vmatpush1.bf16.msra.mxu0 %v4198
    %6502 = vmatprep.subr.bf16.mxu0 %v4210
    %6503 = vmatpush1.bf16.msra.mxu0 %v4209
    %6504 = vmatprep.subr.bf16.mxu0 %v4221
    %6505 = vmatpush1.bf16.msra.mxu0 %v4220
    %6506 = vmatprep.subr.bf16.mxu0 %v4232
    %6507 = vmatpush1.bf16.msra.mxu0 %v4231
    %6508 = vmatprep.subr.bf16.mxu0 %v4243
    %6509 = vmatpush1.bf16.msra.mxu0 %v4242
    %6510 = vmatprep.subr.bf16.mxu0 %v4254
    %6511 = vmatpush1.bf16.msra.mxu0 %v4253
    %6512 = vmatprep.subr.bf16.mxu0 %v4265
    %6513 = vmatpush1.bf16.msra.mxu0 %v4264
    %6514 = vmatprep.subr.bf16.mxu0 %v4276
    %6515 = vmatpush1.bf16.msra.mxu0 %v4275
    %6516 = vmatprep.subr.bf16.mxu0 %v4287
    %6517 = vmatpush1.bf16.msra.mxu0 %v4286
    %6518 = vmatprep.subr.bf16.mxu0 %v4298
    %6519 = vmatpush1.bf16.msra.mxu0 %v4297
    %6520 = vmatprep.subr.bf16.mxu0 %v4309
    %6521 = vmatpush1.bf16.msra.mxu0 %v4308
    %6522 = vmatprep.subr.bf16.mxu0 %v4320
    %6523 = vmatpush1.bf16.msra.mxu0 %v4319
    %6524 = vmatprep.subr.bf16.mxu0 %v4331
    %6525 = vmatpush1.bf16.msra.mxu0 %v4330
    %6526 = vmatprep.subr.bf16.mxu0 %v4342
    %6527 = vmatpush1.bf16.msra.mxu0 %v4341
    %6528 = vmatprep.subr.bf16.mxu0 %v4353
    %6529 = vmatpush1.bf16.msra.mxu0 %v4352
    %6530 = vmatprep.subr.bf16.mxu0 %v4364
    %6531 = vmatpush1.bf16.msra.mxu0 %v4363
    %6532 = vmatprep.mubr.bf16.mxu0 %v1098
    %6533 = vmatmul.mubr.bf16.gmra.mrb[0].mxu0 %v1090
    %v6534 = vpop.f32.mrb[0].mxu0
    %v6535 = vadd.f32 %v6494, %v6534
    %v6536 = vpop.f32.mrb[0].mxu0
    %v6537 = vadd.f32 %v6496, %v6536
    %v6538 = vpop.f32.mrb[0].mxu0
    %v6539 = vpop.f32.mrb[0].mxu0
    %6540 = vdwg.mxu0
    %6541 = vmatprep.subr.bf16.mxu0 %v4375
    %6542 = vmatpush1.bf16.msra.mxu0 %v4374
    %6543 = vmatprep.subr.bf16.mxu0 %v4386
    %6544 = vmatpush1.bf16.msra.mxu0 %v4385
    %6545 = vmatprep.subr.bf16.mxu0 %v4397
    %6546 = vmatpush1.bf16.msra.mxu0 %v4396
    %6547 = vmatprep.subr.bf16.mxu0 %v4408
    %6548 = vmatpush1.bf16.msra.mxu0 %v4407
    %6549 = vmatprep.subr.bf16.mxu0 %v4419
    %6550 = vmatpush1.bf16.msra.mxu0 %v4418
    %6551 = vmatprep.subr.bf16.mxu0 %v4430
    %6552 = vmatpush1.bf16.msra.mxu0 %v4429
    %6553 = vmatprep.subr.bf16.mxu0 %v4441
    %6554 = vmatpush1.bf16.msra.mxu0 %v4440
    %6555 = vmatprep.subr.bf16.mxu0 %v4452
    %6556 = vmatpush1.bf16.msra.mxu0 %v4451
    %6557 = vmatprep.subr.bf16.mxu0 %v4463
    %6558 = vmatpush1.bf16.msra.mxu0 %v4462
    %6559 = vmatprep.subr.bf16.mxu0 %v4474
    %6560 = vmatpush1.bf16.msra.mxu0 %v4473
    %6561 = vmatprep.subr.bf16.mxu0 %v4485
    %6562 = vmatpush1.bf16.msra.mxu0 %v4484
    %6563 = vmatprep.subr.bf16.mxu0 %v4496
    %6564 = vmatpush1.bf16.msra.mxu0 %v4495
    %6565 = vmatprep.subr.bf16.mxu0 %v4507
    %6566 = vmatpush1.bf16.msra.mxu0 %v4506
    %6567 = vmatprep.subr.bf16.mxu0 %v4518
    %6568 = vmatpush1.bf16.msra.mxu0 %v4517
    %6569 = vmatprep.subr.bf16.mxu0 %v4529
    %6570 = vmatpush1.bf16.msra.mxu0 %v4528
    %6571 = vmatprep.subr.bf16.mxu0 %v4540
    %6572 = vmatpush1.bf16.msra.mxu0 %v4539
    %6573 = vmatprep.mubr.bf16.mxu0 %v1099
    %6574 = vmatmul.mubr.bf16.gmra.mrb[0].mxu0 %v1097
    %v6575 = vpop.f32.mrb[0].mxu0
    %v6576 = vadd.f32 %v6535, %v6575
    %v6577 = vpop.f32.mrb[0].mxu0
    %v6578 = vadd.f32 %v6537, %v6577
    %v6579 = vpop.f32.mrb[0].mxu0
    %v6580 = vpop.f32.mrb[0].mxu0
    %6581 = vdwg.mxu0
    %6582 = vmatprep.subr.bf16.mxu0 %v4551
    %6583 = vmatpush1.bf16.msra.mxu0 %v4550
    %6584 = vmatprep.subr.bf16.mxu0 %v4562
    %6585 = vmatpush1.bf16.msra.mxu0 %v4561
    %6586 = vmatprep.subr.bf16.mxu0 %v4573
    %6587 = vmatpush1.bf16.msra.mxu0 %v4572
    %6588 = vmatprep.subr.bf16.mxu0 %v4584
    %6589 = vmatpush1.bf16.msra.mxu0 %v4583
    %6590 = vmatprep.subr.bf16.mxu0 %v4595
    %6591 = vmatpush1.bf16.msra.mxu0 %v4594
    %6592 = vmatprep.subr.bf16.mxu0 %v4606
    %6593 = vmatpush1.bf16.msra.mxu0 %v4605
    %6594 = vmatprep.subr.bf16.mxu0 %v4617
    %6595 = vmatpush1.bf16.msra.mxu0 %v4616
    %6596 = vmatprep.subr.bf16.mxu0 %v4628
    %6597 = vmatpush1.bf16.msra.mxu0 %v4627
    %6598 = vmatprep.subr.bf16.mxu0 %v4639
    %6599 = vmatpush1.bf16.msra.mxu0 %v4638
    %6600 = vmatprep.subr.bf16.mxu0 %v4650
    %6601 = vmatpush1.bf16.msra.mxu0 %v4649
    %6602 = vmatprep.subr.bf16.mxu0 %v4661
    %6603 = vmatpush1.bf16.msra.mxu0 %v4660
    %6604 = vmatprep.subr.bf16.mxu0 %v4672
    %6605 = vmatpush1.bf16.msra.mxu0 %v4671
    %6606 = vmatprep.subr.bf16.mxu0 %v4683
    %6607 = vmatpush1.bf16.msra.mxu0 %v4682
    %6608 = vmatprep.subr.bf16.mxu0 %v4694
    %6609 = vmatpush1.bf16.msra.mxu0 %v4693
    %6610 = vmatprep.subr.bf16.mxu0 %v4705
    %6611 = vmatpush1.bf16.msra.mxu0 %v4704
    %6612 = vmatprep.subr.bf16.mxu0 %v4716
    %6613 = vmatpush1.bf16.msra.mxu0 %v4715
    %6614 = vmatprep.mubr.bf16.mxu0 %v1107
    %6615 = vmatmul.mubr.bf16.gmra.mrb[0].mxu0 %v1106
    %v6616 = vpop.f32.mrb[0].mxu0
    %v6617 = vadd.f32 %v6576, %v6616
    %v6618 = vpop.f32.mrb[0].mxu0
    %v6619 = vadd.f32 %v6578, %v6618
    %v6620 = vpop.f32.mrb[0].mxu0
    %v6621 = vpop.f32.mrb[0].mxu0
    %6622 = vdwg.mxu0
    %6623 = vmatprep.subr.bf16.mxu0 0
    %6624 = vmatpush1.bf16.msra.mxu0 %v3848
    %6625 = vmatprep.subr.bf16.mxu0 0
    %6626 = vmatpush1.bf16.msra.mxu0 %v3859
    %6627 = vmatprep.subr.bf16.mxu0 0
    %6628 = vmatpush1.bf16.msra.mxu0 %v3870
    %6629 = vmatprep.subr.bf16.mxu0 0
    %6630 = vmatpush1.bf16.msra.mxu0 %v3881
    %6631 = vmatprep.subr.bf16.mxu0 0
    %6632 = vmatpush1.bf16.msra.mxu0 %v3892
    %6633 = vmatprep.subr.bf16.mxu0 0
    %6634 = vmatpush1.bf16.msra.mxu0 %v3903
    %6635 = vmatprep.subr.bf16.mxu0 0
    %6636 = vmatpush1.bf16.msra.mxu0 %v3914
    %6637 = vmatprep.subr.bf16.mxu0 0
    %6638 = vmatpush1.bf16.msra.mxu0 %v3925
    %6639 = vmatprep.subr.bf16.mxu0 0
    %6640 = vmatpush1.bf16.msra.mxu0 %v3936
    %6641 = vmatprep.subr.bf16.mxu0 0
    %6642 = vmatpush1.bf16.msra.mxu0 %v3947
    %6643 = vmatprep.subr.bf16.mxu0 0
    %6644 = vmatpush1.bf16.msra.mxu0 %v3958
    %6645 = vmatprep.subr.bf16.mxu0 0
    %6646 = vmatpush1.bf16.msra.mxu0 %v3969
    %6647 = vmatprep.subr.bf16.mxu0 0
    %6648 = vmatpush1.bf16.msra.mxu0 %v3980
    %6649 = vmatprep.subr.bf16.mxu0 0
    %6650 = vmatpush1.bf16.msra.mxu0 %v3991
    %6651 = vmatprep.subr.bf16.mxu0 0
    %6652 = vmatpush1.bf16.msra.mxu0 %v4002
    %6653 = vmatprep.subr.bf16.mxu0 0
    %6654 = vmatpush1.bf16.msra.mxu0 %v4013
    %6655 = vmatprep.mubr.bf16.mxu0 %v1081
    %6656 = vmatmul.mubr.bf16.gmra.mrb[0].mxu0 %v1073
    %v6657 = vpop.f32.mrb[0].mxu0
    %v6658 = vadd.f32 %v1051, %v6657
    %v6659 = vpop.f32.mrb[0].mxu0
    %v6660 = vpop.f32.mrb[0].mxu0
    %v6661 = vpop.f32.mrb[0].mxu0
    %6662 = vdwg.mxu0
    %6663 = vmatprep.subr.bf16.mxu0 0
    %6664 = vmatpush1.bf16.msra.mxu0 %v4024
    %6665 = vmatprep.subr.bf16.mxu0 0
    %6666 = vmatpush1.bf16.msra.mxu0 %v4035
    %6667 = vmatprep.subr.bf16.mxu0 0
    %6668 = vmatpush1.bf16.msra.mxu0 %v4046
    %6669 = vmatprep.subr.bf16.mxu0 0
    %6670 = vmatpush1.bf16.msra.mxu0 %v4057
    %6671 = vmatprep.subr.bf16.mxu0 0
    %6672 = vmatpush1.bf16.msra.mxu0 %v4068
    %6673 = vmatprep.subr.bf16.mxu0 0
    %6674 = vmatpush1.bf16.msra.mxu0 %v4079
    %6675 = vmatprep.subr.bf16.mxu0 0
    %6676 = vmatpush1.bf16.msra.mxu0 %v4090
    %6677 = vmatprep.subr.bf16.mxu0 0
    %6678 = vmatpush1.bf16.msra.mxu0 %v4101
    %6679 = vmatprep.subr.bf16.mxu0 0
    %6680 = vmatpush1.bf16.msra.mxu0 %v4112
    %6681 = vmatprep.subr.bf16.mxu0 0
    %6682 = vmatpush1.bf16.msra.mxu0 %v4123
    %6683 = vmatprep.subr.bf16.mxu0 0
    %6684 = vmatpush1.bf16.msra.mxu0 %v4134
    %6685 = vmatprep.subr.bf16.mxu0 0
    %6686 = vmatpush1.bf16.msra.mxu0 %v4145
    %6687 = vmatprep.subr.bf16.mxu0 0
    %6688 = vmatpush1.bf16.msra.mxu0 %v4156
    %6689 = vmatprep.subr.bf16.mxu0 0
    %6690 = vmatpush1.bf16.msra.mxu0 %v4167
    %6691 = vmatprep.subr.bf16.mxu0 0
    %6692 = vmatpush1.bf16.msra.mxu0 %v4178
    %6693 = vmatprep.subr.bf16.mxu0 0
    %6694 = vmatpush1.bf16.msra.mxu0 %v4189
    %6695 = vmatprep.mubr.bf16.mxu0 %v1082
    %6696 = vmatmul.mubr.bf16.gmra.mrb[0].mxu0 %v1080
    %v6697 = vpop.f32.mrb[0].mxu0
    %v6698 = vadd.f32 %v6658, %v6697
    %v6699 = vpop.f32.mrb[0].mxu0
    %v6700 = vpop.f32.mrb[0].mxu0
    %v6701 = vpop.f32.mrb[0].mxu0
    %6702 = vdwg.mxu0
    %6703 = vmatprep.subr.bf16.mxu0 0
    %6704 = vmatpush1.bf16.msra.mxu0 %v4200
    %6705 = vmatprep.subr.bf16.mxu0 0
    %6706 = vmatpush1.bf16.msra.mxu0 %v4211
    %6707 = vmatprep.subr.bf16.mxu0 0
    %6708 = vmatpush1.bf16.msra.mxu0 %v4222
    %6709 = vmatprep.subr.bf16.mxu0 0
    %6710 = vmatpush1.bf16.msra.mxu0 %v4233
    %6711 = vmatprep.subr.bf16.mxu0 0
    %6712 = vmatpush1.bf16.msra.mxu0 %v4244
    %6713 = vmatprep.subr.bf16.mxu0 0
    %6714 = vmatpush1.bf16.msra.mxu0 %v4255
    %6715 = vmatprep.subr.bf16.mxu0 0
    %6716 = vmatpush1.bf16.msra.mxu0 %v4266
    %6717 = vmatprep.subr.bf16.mxu0 0
    %6718 = vmatpush1.bf16.msra.mxu0 %v4277
    %6719 = vmatprep.subr.bf16.mxu0 0
    %6720 = vmatpush1.bf16.msra.mxu0 %v4288
    %6721 = vmatprep.subr.bf16.mxu0 0
    %6722 = vmatpush1.bf16.msra.mxu0 %v4299
    %6723 = vmatprep.subr.bf16.mxu0 0
    %6724 = vmatpush1.bf16.msra.mxu0 %v4310
    %6725 = vmatprep.subr.bf16.mxu0 0
    %6726 = vmatpush1.bf16.msra.mxu0 %v4321
    %6727 = vmatprep.subr.bf16.mxu0 0
    %6728 = vmatpush1.bf16.msra.mxu0 %v4332
    %6729 = vmatprep.subr.bf16.mxu0 0
    %6730 = vmatpush1.bf16.msra.mxu0 %v4343
    %6731 = vmatprep.subr.bf16.mxu0 0
    %6732 = vmatpush1.bf16.msra.mxu0 %v4354
    %6733 = vmatprep.subr.bf16.mxu0 0
    %6734 = vmatpush1.bf16.msra.mxu0 %v4365
    %6735 = vmatprep.mubr.bf16.mxu0 %v1098
    %6736 = vmatmul.mubr.bf16.gmra.mrb[0].mxu0 %v1090
    %v6737 = vpop.f32.mrb[0].mxu0
    %v6738 = vadd.f32 %v6698, %v6737
    %v6739 = vpop.f32.mrb[0].mxu0
    %v6740 = vpop.f32.mrb[0].mxu0
    %v6741 = vpop.f32.mrb[0].mxu0
    %6742 = vdwg.mxu0
    %6743 = vmatprep.subr.bf16.mxu0 0
    %6744 = vmatpush1.bf16.msra.mxu0 %v4376
    %6745 = vmatprep.subr.bf16.mxu0 0
    %6746 = vmatpush1.bf16.msra.mxu0 %v4387
    %6747 = vmatprep.subr.bf16.mxu0 0
    %6748 = vmatpush1.bf16.msra.mxu0 %v4398
    %6749 = vmatprep.subr.bf16.mxu0 0
    %6750 = vmatpush1.bf16.msra.mxu0 %v4409
    %6751 = vmatprep.subr.bf16.mxu0 0
    %6752 = vmatpush1.bf16.msra.mxu0 %v4420
    %6753 = vmatprep.subr.bf16.mxu0 0
    %6754 = vmatpush1.bf16.msra.mxu0 %v4431
    %6755 = vmatprep.subr.bf16.mxu0 0
    %6756 = vmatpush1.bf16.msra.mxu0 %v4442
    %6757 = vmatprep.subr.bf16.mxu0 0
    %6758 = vmatpush1.bf16.msra.mxu0 %v4453
    %6759 = vmatprep.subr.bf16.mxu0 0
    %6760 = vmatpush1.bf16.msra.mxu0 %v4464
    %6761 = vmatprep.subr.bf16.mxu0 0
    %6762 = vmatpush1.bf16.msra.mxu0 %v4475
    %6763 = vmatprep.subr.bf16.mxu0 0
    %6764 = vmatpush1.bf16.msra.mxu0 %v4486
    %6765 = vmatprep.subr.bf16.mxu0 0
    %6766 = vmatpush1.bf16.msra.mxu0 %v4497
    %6767 = vmatprep.subr.bf16.mxu0 0
    %6768 = vmatpush1.bf16.msra.mxu0 %v4508
    %6769 = vmatprep.subr.bf16.mxu0 0
    %6770 = vmatpush1.bf16.msra.mxu0 %v4519
    %6771 = vmatprep.subr.bf16.mxu0 0
    %6772 = vmatpush1.bf16.msra.mxu0 %v4530
    %6773 = vmatprep.subr.bf16.mxu0 0
    %6774 = vmatpush1.bf16.msra.mxu0 %v4541
    %6775 = vmatprep.mubr.bf16.mxu0 %v1099
    %6776 = vmatmul.mubr.bf16.gmra.mrb[0].mxu0 %v1097
    %v6777 = vpop.f32.mrb[0].mxu0
    %v6778 = vadd.f32 %v6738, %v6777
    %v6779 = vpop.f32.mrb[0].mxu0
    %v6780 = vpop.f32.mrb[0].mxu0
    %v6781 = vpop.f32.mrb[0].mxu0
    %6782 = vdwg.mxu0
    %6783 = vmatprep.subr.bf16.mxu0 0
    %6784 = vmatpush1.bf16.msra.mxu0 %v4552
    %6785 = vmatprep.subr.bf16.mxu0 0
    %6786 = vmatpush1.bf16.msra.mxu0 %v4563
    %6787 = vmatprep.subr.bf16.mxu0 0
    %6788 = vmatpush1.bf16.msra.mxu0 %v4574
    %6789 = vmatprep.subr.bf16.mxu0 0
    %6790 = vmatpush1.bf16.msra.mxu0 %v4585
    %6791 = vmatprep.subr.bf16.mxu0 0
    %6792 = vmatpush1.bf16.msra.mxu0 %v4596
    %6793 = vmatprep.subr.bf16.mxu0 0
    %6794 = vmatpush1.bf16.msra.mxu0 %v4607
    %6795 = vmatprep.subr.bf16.mxu0 0
    %6796 = vmatpush1.bf16.msra.mxu0 %v4618
    %6797 = vmatprep.subr.bf16.mxu0 0
    %6798 = vmatpush1.bf16.msra.mxu0 %v4629
    %6799 = vmatprep.subr.bf16.mxu0 0
    %6800 = vmatpush1.bf16.msra.mxu0 %v4640
    %6801 = vmatprep.subr.bf16.mxu0 0
    %6802 = vmatpush1.bf16.msra.mxu0 %v4651
    %6803 = vmatprep.subr.bf16.mxu0 0
    %6804 = vmatpush1.bf16.msra.mxu0 %v4662
    %6805 = vmatprep.subr.bf16.mxu0 0
    %6806 = vmatpush1.bf16.msra.mxu0 %v4673
    %6807 = vmatprep.subr.bf16.mxu0 0
    %6808 = vmatpush1.bf16.msra.mxu0 %v4684
    %6809 = vmatprep.subr.bf16.mxu0 0
    %6810 = vmatpush1.bf16.msra.mxu0 %v4695
    %6811 = vmatprep.subr.bf16.mxu0 0
    %6812 = vmatpush1.bf16.msra.mxu0 %v4706
    %6813 = vmatprep.subr.bf16.mxu0 0
    %6814 = vmatpush1.bf16.msra.mxu0 %v4717
    %6815 = vmatprep.mubr.bf16.mxu0 %v1107
    %6816 = vmatmul.mubr.bf16.gmra.mrb[0].mxu0 %v1106
    %v6817 = vpop.f32.mrb[0].mxu0
    %v6818 = vadd.f32 %v6778, %v6817
    %v6819 = vpop.f32.mrb[0].mxu0
    %v6820 = vpop.f32.mrb[0].mxu0
    %v6821 = vpop.f32.mrb[0].mxu0
    %6822 = vdwg.mxu0
    %v6833 = vcombine.low %v5797, %v5799
    %v6834 = vcombine.low %v6002, %v6004
    %v6835 = vcombine.low %v6207, %v6209
    %v6836 = vcombine.low %v6412, %v6414
    %v6837 = vcombine.low %v6617, %v6619
    %6843 = vst [vmem:[%s3] sm:$0x77] %v6833
    %6844 = vst [vmem:[%s3 + $0x8] sm:$0x77] %v6834
    %6845 = vst [vmem:[%s3 + $0x10] sm:$0x77] %v6835
    %6846 = vst [vmem:[%s3 + $0x18] sm:$0x77] %v6836
    %6847 = vst [vmem:[%s3 + $0x20] sm:$0x77] %v6837
    %6848 = vst [vmem:[%s3 + $0x28] sm:$0x7] %v6818
    // Predicated region
    $region22: #{forward.1} parent=1 // pred_check
      _
    $region23: #{forward.1} parent=1 // pred_check_branch
      %6850 = sbr.rel (0) target = $region25
    $region24: #{forward.1} parent=1 // pred_region
      _
    $region25: #{forward.1} parent=1 // pred_fallthru
      _
    // Predicated region
    $region26: #{forward.1} parent=1 // pred_check
      _
    $region27: #{forward.1} parent=1 // pred_check_branch
      %6852 = sbr.rel (0) target = $region29
    $region28: #{forward.1} parent=1 // pred_region
      _
    $region29: #{forward.1} parent=1 // pred_fallthru
      _
    %6853 = vsyncpa [#allocation3], 1
    %6854 = vsyncpa [#allocation5], 1

</llo_original>
